<compile_context>
chip_gen: v6e
topology: v6e:2x2x1
jax: 0.10.0
libtpu: 0.0.40
codegen_flags: <defaults>
</compile_context>

<pallas_src>
import numpy as np

import jax
import jax.numpy as jnp
from jax import lax
from jax.experimental import pallas as pl
from jax.experimental.pallas import tpu as pltpu

LANE = 128          # channel lanes; all channel dims are padded to one vreg width


def _round_up(x: int, m: int) -> int:
    return (x + m - 1) // m * m


def _compiler_params():
    """Generation-aware scoped-VMEM budget (v7x: 64 MiB, v5e/v6e: 128 MiB)."""
    try:
        cap = int(pltpu.get_tpu_info().vmem_capacity_bytes)
        limit = min(cap * 3 // 4, 96 * 1024 * 1024)
    except Exception:                      # conservative fallback, still >> working set
        limit = 32 * 1024 * 1024
    return pltpu.CompilerParams(
        dimension_semantics=("parallel",),     # batch grid -> megacore on v7x
        vmem_limit_bytes=limit)


# ---------------------------------------------------------------------------
# Fused whole-network kernel (one grid step == one image)
# ---------------------------------------------------------------------------
def _yolo_fused_kernel(p_ref,                      # (M1, K1p)   bf16 stem im2col patches
                       w_stem_ref, b_stem_ref,     # (K1p,128) bf16 / (1,128) f32
                       sel_c2_ref, w_c2_ref, b_c2_ref,   # (9*M2,M1) / (9,128,128) / (1,128)
                       w_b1_ref, b_b1_ref,         # (128,128) bf16 / (1,128) f32
                       sel_b2_ref, w_b2_ref, b_b2_ref,   # (9*M2,M2) / (9,128,128) / (1,128)
                       w_head_ref, b_head_ref,     # (128,128) f32 / (1,128) f32
                       o_ref):                     # (M2,128) f32
    f32 = jnp.float32
    n_taps = w_c2_ref.shape[0]
    lanes = w_c2_ref.shape[-1]
    m_out = sel_c2_ref.shape[0] // n_taps

    # ---- stem: 3x3 s2 conv (im2col matmul, BN folded) + SiLU -------------
    y1 = jnp.dot(p_ref[...], w_stem_ref[...], preferred_element_type=f32)
    y1 = y1 + b_stem_ref[...]
    y1 = y1 * jax.nn.sigmoid(y1)
    y1_bf = y1.astype(jnp.bfloat16)

    # ---- c2: 3x3 s2 conv; taps gathered in-VMEM via 0/1 selection matmul --
    g = jnp.dot(sel_c2_ref[...], y1_bf, preferred_element_type=f32)   # (9*M2, 128)
    g = g.astype(jnp.bfloat16)                                        # exact (0/1 gather)
    acc = jnp.zeros((m_out, lanes), f32)
    for t in range(n_taps):
        acc = acc + jnp.dot(g[t * m_out:(t + 1) * m_out, :], w_c2_ref[t],
                            preferred_element_type=f32)
    y2 = acc + b_c2_ref[...]
    y2 = y2 * jax.nn.sigmoid(y2)            # bottleneck input (residual source), f32
    y2_bf = y2.astype(jnp.bfloat16)

    # ---- bottleneck cv1: 1x1 conv + SiLU ----------------------------------
    z = jnp.dot(y2_bf, w_b1_ref[...], preferred_element_type=f32)
    z = z + b_b1_ref[...]
    z = z * jax.nn.sigmoid(z)
    z_bf = z.astype(jnp.bfloat16)

    # ---- bottleneck cv2: 3x3 s1 conv + SiLU, then shortcut (f32) ----------
    g = jnp.dot(sel_b2_ref[...], z_bf, preferred_element_type=f32)    # (9*M2, 128)
    g = g.astype(jnp.bfloat16)
    acc = jnp.zeros((m_out, lanes), f32)
    for t in range(n_taps):
        acc = acc + jnp.dot(g[t * m_out:(t + 1) * m_out, :], w_b2_ref[t],
                            preferred_element_type=f32)
    y4 = acc + b_b2_ref[...]
    y4 = y4 * jax.nn.sigmoid(y4)
    y4 = y4 + y2                             # residual shortcut, kept in f32

    # ---- detect head: 1x1 conv + bias (f32 matmul for logit precision) ----
    o = jnp.dot(y4, w_head_ref[...], preferred_element_type=f32)
    o_ref[...] = o + b_head_ref[...]


# ---------------------------------------------------------------------------
# Trace-time glue: stem im2col, tap selectors, folded-BN weight packing
# ---------------------------------------------------------------------------
def _im2col_taps(x_nhwc, kh, kw, stride, padding):
    """Explicit im2col for the raw input only (tap-major, channel-minor K)."""
    N, H, W, C = x_nhwc.shape
    Ho = (H + 2 * padding - kh) // stride + 1
    Wo = (W + 2 * padding - kw) // stride + 1
    xp = jnp.pad(x_nhwc, ((0, 0), (padding, padding), (padding, padding), (0, 0)))
    cols = []
    for dh in range(kh):
        for dw in range(kw):
            cols.append(xp[:, dh: dh + stride * (Ho - 1) + 1: stride,
                              dw: dw + stride * (Wo - 1) + 1: stride, :])
    patches = jnp.concatenate(cols, axis=-1)           # (N, Ho, Wo, kh*kw*C)
    return patches.reshape(N, Ho * Wo, kh * kw * C), Ho, Wo


def _tap_selectors(hi, wi, ho, wo, stride, padding, k=3):
    """0/1 gather matrices: (k*k, ho*wo, hi*wi); zero rows encode spatial padding."""
    sel = np.zeros((k * k, ho * wo, hi * wi), np.float32)
    for dh in range(k):
        for dw in range(k):
            t = dh * k + dw
            for r in range(ho):
                for c in range(wo):
                    hs = r * stride + dh - padding
                    ws = c * stride + dw - padding
                    if 0 <= hs < hi and 0 <= ws < wi:
                        sel[t, r * wo + c, hs * wi + ws] = 1.0
    return sel


def _prep_im2col_weight(w, scale, bias, k_pad, c_pad):
    """(Cout,Cin,kh,kw) -> (k_pad,c_pad) bf16, BN folded, tap-major/channel-minor K."""
    cout, cin, kh, kw = w.shape
    wf = (w * scale[:, None, None, None]).astype(jnp.float32)
    wm = wf.transpose(2, 3, 1, 0).reshape(kh * kw * cin, cout)
    wm = jnp.pad(wm, ((0, k_pad - kh * kw * cin), (0, c_pad - cout)))
    bv = jnp.pad(bias.astype(jnp.float32), (0, c_pad - cout)).reshape(1, c_pad)
    return wm.astype(jnp.bfloat16), bv


def _prep_tap_weights(w, scale, bias, k_pad, c_pad):
    """(Cout,Cin,3,3) -> (9,k_pad,c_pad) bf16 per-tap weights, BN folded."""
    cout, cin, kh, kw = w.shape
    wf = (w * scale[:, None, None, None]).astype(jnp.float32)
    wt = wf.transpose(2, 3, 1, 0).reshape(kh * kw, cin, cout)
    wt = jnp.pad(wt, ((0, 0), (0, k_pad - cin), (0, c_pad - cout)))
    bv = jnp.pad(bias.astype(jnp.float32), (0, c_pad - cout)).reshape(1, c_pad)
    return wt.astype(jnp.bfloat16), bv


def _prep_1x1_weight(w, scale, bias, k_pad, c_pad, dtype):
    """(Cout,Cin,1,1) -> (k_pad,c_pad) dtype, BN folded."""
    cout, cin = w.shape[0], w.shape[1]
    wm = (w.reshape(cout, cin) * scale[:, None]).T.astype(jnp.float32)
    wm = jnp.pad(wm, ((0, k_pad - cin), (0, c_pad - cout)))
    bv = jnp.pad(bias.astype(jnp.float32), (0, c_pad - cout)).reshape(1, c_pad)
    return wm.astype(dtype), bv


# ---------------------------------------------------------------------------
# Forward pass (single fused pallas_call, gridded over batch)
# ---------------------------------------------------------------------------
def yolo_forward(x_nchw, p):
    x = x_nchw.transpose(0, 2, 3, 1).astype(jnp.float32)       # NCHW -> NHWC once
    N, H, W, _ = x.shape

    # stem im2col on the raw input only (everything downstream stays in-kernel)
    patches, H1, W1 = _im2col_taps(x, 3, 3, 2, 1)              # (N, M1, K1)
    M1, K1 = H1 * W1, patches.shape[-1]
    K1p = _round_up(K1, LANE)
    patches = jnp.pad(patches.astype(jnp.bfloat16), ((0, 0), (0, 0), (0, K1p - K1)))

    H2 = (H1 + 2 - 3) // 2 + 1
    W2 = (W1 + 2 - 3) // 2 + 1
    M2 = H2 * W2

    # constant 0/1 tap-selection matrices (per image), stacked tap-major
    sel_c2 = jnp.asarray(_tap_selectors(H1, W1, H2, W2, 2, 1).reshape(9 * M2, M1),
                         jnp.bfloat16)
    sel_b2 = jnp.asarray(_tap_selectors(H2, W2, H2, W2, 1, 1).reshape(9 * M2, M2),
                         jnp.bfloat16)

    # BN-folded, channel-padded weights
    w_stem, b_stem = _prep_im2col_weight(p["c1_w"], p["c1_scale"], p["c1_bias"], K1p, LANE)
    w_c2, b_c2 = _prep_tap_weights(p["c2_w"], p["c2_scale"], p["c2_bias"], LANE, LANE)
    w_b1, b_b1 = _prep_1x1_weight(p["b1_w"], p["b1_scale"], p["b1_bias"], LANE, LANE,
                                  jnp.bfloat16)
    w_b2, b_b2 = _prep_tap_weights(p["b2_w"], p["b2_scale"], p["b2_bias"], LANE, LANE)
    w_hd, b_hd = _prep_1x1_weight(p["head_w"], p["head_scale"], p["head_bias"], LANE, LANE,
                                  jnp.float32)
    n_head = p["head_w"].shape[0]

    out = pl.pallas_call(
        _yolo_fused_kernel,
        grid=(N,),
        in_specs=[
            pl.BlockSpec((None, M1, K1p), lambda n: (n, 0, 0)),   # per-image stem patches
            pl.BlockSpec((K1p, LANE), lambda n: (0, 0)),          # resident weights below
            pl.BlockSpec((1, LANE), lambda n: (0, 0)),
            pl.BlockSpec((9 * M2, M1), lambda n: (0, 0)),
            pl.BlockSpec((9, LANE, LANE), lambda n: (0, 0, 0)),
            pl.BlockSpec((1, LANE), lambda n: (0, 0)),
            pl.BlockSpec((LANE, LANE), lambda n: (0, 0)),
            pl.BlockSpec((1, LANE), lambda n: (0, 0)),
            pl.BlockSpec((9 * M2, M2), lambda n: (0, 0)),
            pl.BlockSpec((9, LANE, LANE), lambda n: (0, 0, 0)),
            pl.BlockSpec((1, LANE), lambda n: (0, 0)),
            pl.BlockSpec((LANE, LANE), lambda n: (0, 0)),
            pl.BlockSpec((1, LANE), lambda n: (0, 0)),
        ],
        out_specs=pl.BlockSpec((None, M2, LANE), lambda n: (n, 0, 0)),
        out_shape=jax.ShapeDtypeStruct((N, M2, LANE), jnp.float32),
        compiler_params=_compiler_params(),
    )(patches, w_stem, b_stem, sel_c2, w_c2, b_c2, w_b1, b_b1,
      sel_b2, w_b2, b_b2, w_hd, b_hd)

    out = out[:, :, :n_head].reshape(N, H2, W2, n_head)
    return out.transpose(0, 3, 1, 2)                            # NHWC -> NCHW once


# ---------------------------------------------------------------------------
# Plain-JAX reference (lax.conv) -- guards patch/weight ordering & precision
# ---------------------------------------------------------------------------
def _conv_ref(x_nhwc, w, scale, bias, stride, padding, act):
    wf = (w * scale[:, None, None, None]).astype(jnp.float32)
    y = lax.conv_general_dilated(
        x_nhwc, wf.transpose(2, 3, 1, 0), (stride, stride),
        [(padding, padding), (padding, padding)],
        dimension_numbers=("NHWC", "HWIO", "NHWC"))
    y = y + bias[None, None, None, :]
    if act:
        y = y * jax.nn.sigmoid(y)
    return y


def yolo_forward_reference(x_nchw, p):
    x = x_nchw.transpose(0, 2, 3, 1).astype(jnp.float32)
    y1 = _conv_ref(x, p["c1_w"], p["c1_scale"], p["c1_bias"], 2, 1, True)
    y2 = _conv_ref(y1, p["c2_w"], p["c2_scale"], p["c2_bias"], 2, 1, True)
    z = _conv_ref(y2, p["b1_w"], p["b1_scale"], p["b1_bias"], 1, 0, True)
    y4 = _conv_ref(z, p["b2_w"], p["b2_scale"], p["b2_bias"], 1, 1, True) + y2
    o = _conv_ref(y4, p["head_w"], p["head_scale"], p["head_bias"], 1, 0, False)
    return o.transpose(0, 3, 1, 2)


# ---------------------------------------------------------------------------
# Deterministic synthetic "YOLO" parameters
# ---------------------------------------------------------------------------
def _fold_bn(gamma, beta, mean, var, eps=1e-5):
    scale = gamma / jnp.sqrt(var + eps)
    bias = beta - mean * scale
    return scale, bias


def init_params(key, c_in=4, nc=3):
    ks = jax.random.split(key, 16)
    p = {}

    def conv_w(k, cout, cin, kh, kw):
        return jax.random.normal(k, (cout, cin, kh, kw), jnp.float32) * 0.1

    def bn(k, c):
        k1, k2, k3, k4 = jax.random.split(k, 4)
        gamma = 1.0 + 0.1 * jax.random.normal(k1, (c,), jnp.float32)
        beta = 0.1 * jax.random.normal(k2, (c,), jnp.float32)
        mean = 0.1 * jax.random.normal(k3, (c,), jnp.float32)
        var = 1.0 + jnp.abs(0.1 * jax.random.normal(k4, (c,), jnp.float32))
        return _fold_bn(gamma, beta, mean, var)

    p["c1_w"] = conv_w(ks[0], 8, c_in, 3, 3)              # stem 3x3 s2
    p["c1_scale"], p["c1_bias"] = bn(ks[1], 8)
    p["c2_w"] = conv_w(ks[2], 16, 8, 3, 3)                # down 3x3 s2
    p["c2_scale"], p["c2_bias"] = bn(ks[3], 16)
    p["b1_w"] = conv_w(ks[4], 16, 16, 1, 1)               # bottleneck cv1
    p["b1_scale"], p["b1_bias"] = bn(ks[5], 16)
    p["b2_w"] = conv_w(ks[6], 16, 16, 3, 3)               # bottleneck cv2 (+res)
    p["b2_scale"], p["b2_bias"] = bn(ks[7], 16)
    n_out = 4 + 1 + nc                                     # detect head 1x1
    p["head_w"] = conv_w(ks[8], n_out, 16, 1, 1)
    p["head_scale"] = jnp.ones((n_out,), jnp.float32)
    p["head_bias"] = 0.1 * jax.random.normal(ks[9], (n_out,), jnp.float32)
    return p


if __name__ == "__main__":
    key = jax.random.PRNGKey(0)
    k_x, k_p = jax.random.split(key)
    x = jax.random.normal(k_x, (2, 4, 16, 16), jnp.float32)   # NCHW input
    params = init_params(k_p)

    fwd = jax.jit(yolo_forward)
    out = jax.block_until_ready(fwd(x, params))
    assert out.shape == (2, 8, 4, 4), out.shape
    assert jnp.all(jnp.isfinite(out))

    # Ordering / correctness guard vs. a plain lax.conv reference
    ref = np.asarray(yolo_forward_reference(x, params))
    got = np.asarray(out)
    err = float(np.max(np.abs(got - ref)))
    tol = 0.05 * float(np.max(np.abs(ref))) + 0.05            # bf16-MXU tolerance
    assert err <= tol, (err, tol)

    print("KERNEL_OK")
</pallas_src>

<mosaic_0001>
module attributes {stable_mosaic.version = 11 : i64} {
  func.func @_yolo_fused_kernel(%arg0: i32, %arg1: memref<1x64x128xbf16, #tpu.memory_space<vmem>>, %arg2: memref<128x128xbf16, #tpu.memory_space<vmem>>, %arg3: memref<1x128xf32, #tpu.memory_space<vmem>>, %arg4: memref<144x64xbf16, #tpu.memory_space<vmem>>, %arg5: memref<9x128x128xbf16, #tpu.memory_space<vmem>>, %arg6: memref<1x128xf32, #tpu.memory_space<vmem>>, %arg7: memref<128x128xbf16, #tpu.memory_space<vmem>>, %arg8: memref<1x128xf32, #tpu.memory_space<vmem>>, %arg9: memref<144x16xbf16, #tpu.memory_space<vmem>>, %arg10: memref<9x128x128xbf16, #tpu.memory_space<vmem>>, %arg11: memref<1x128xf32, #tpu.memory_space<vmem>>, %arg12: memref<128x128xf32, #tpu.memory_space<vmem>>, %arg13: memref<1x128xf32, #tpu.memory_space<vmem>>, %arg14: memref<1x16x128xf32, #tpu.memory_space<vmem>>) attributes {dimension_semantics = [#tpu.dimension_semantics<parallel>], iteration_bounds = array<i64: 2>, scalar_prefetch = 0 : i64, scratch_operands = 0 : i64, tpu.core_type = #tpu.core_type<tc>, window_params = [{transform_indices = @transform_0, window_bounds = array<i64: 1, 64, 128>}, {pipeline_mode = #tpu.pipeline_mode<synchronous>, transform_indices = @transform_1, window_bounds = array<i64: 128, 128>}, {pipeline_mode = #tpu.pipeline_mode<synchronous>, transform_indices = @transform_2, window_bounds = array<i64: 1, 128>}, {pipeline_mode = #tpu.pipeline_mode<synchronous>, transform_indices = @transform_3, window_bounds = array<i64: 144, 64>}, {pipeline_mode = #tpu.pipeline_mode<synchronous>, transform_indices = @transform_4, window_bounds = array<i64: 9, 128, 128>}, {pipeline_mode = #tpu.pipeline_mode<synchronous>, transform_indices = @transform_5, window_bounds = array<i64: 1, 128>}, {pipeline_mode = #tpu.pipeline_mode<synchronous>, transform_indices = @transform_6, window_bounds = array<i64: 128, 128>}, {pipeline_mode = #tpu.pipeline_mode<synchronous>, transform_indices = @transform_7, window_bounds = array<i64: 1, 128>}, {pipeline_mode = #tpu.pipeline_mode<synchronous>, transform_indices = @transform_8, window_bounds = array<i64: 144, 16>}, {pipeline_mode = #tpu.pipeline_mode<synchronous>, transform_indices = @transform_9, window_bounds = array<i64: 9, 128, 128>}, {pipeline_mode = #tpu.pipeline_mode<synchronous>, transform_indices = @transform_10, window_bounds = array<i64: 1, 128>}, {pipeline_mode = #tpu.pipeline_mode<synchronous>, transform_indices = @transform_11, window_bounds = array<i64: 128, 128>}, {pipeline_mode = #tpu.pipeline_mode<synchronous>, transform_indices = @transform_12, window_bounds = array<i64: 1, 128>}, {transform_indices = @transform_13, window_bounds = array<i64: 1, 16, 128>}]} {
    %c0 = arith.constant 0 : index
    %c0_0 = arith.constant 0 : index
    %c0_1 = arith.constant 0 : index
    %0 = vector.load %arg1[%c0, %c0_0, %c0_1] : memref<1x64x128xbf16, #tpu.memory_space<vmem>>, vector<1x64x128xbf16>
    %1 = vector.shape_cast %0 : vector<1x64x128xbf16> to vector<64x128xbf16>
    %c0_2 = arith.constant 0 : index
    %c0_3 = arith.constant 0 : index
    %2 = vector.load %arg2[%c0_2, %c0_3] : memref<128x128xbf16, #tpu.memory_space<vmem>>, vector<128x128xbf16>
    %cst = arith.constant dense<0.000000e+00> : vector<64x128xf32>
    %3 = tpu.matmul %1, %2, %cst {dimension_numbers = #tpu.dot_dimension_numbers<[1], [0], [0], [1], [0, 0, 1, 1], [], []>} : vector<64x128xbf16>, vector<128x128xbf16>, vector<64x128xf32> -> vector<64x128xf32>
    %c0_4 = arith.constant 0 : index
    %c0_5 = arith.constant 0 : index
    %4 = vector.load %arg3[%c0_4, %c0_5] : memref<1x128xf32, #tpu.memory_space<vmem>>, vector<1x128xf32>
    %5 = vector.broadcast %4 : vector<1x128xf32> to vector<64x128xf32>
    %6 = arith.addf %3, %5 : vector<64x128xf32>
    %7 = arith.negf %6 : vector<64x128xf32>
    %8 = math.exp %7 : vector<64x128xf32>
    %cst_6 = arith.constant 1.000000e+00 : f32
    %9 = vector.broadcast %cst_6 : f32 to vector<64x128xf32>
    %10 = arith.addf %9, %8 : vector<64x128xf32>
    %11 = arith.divf %9, %10 : vector<64x128xf32>
    %12 = arith.mulf %6, %11 : vector<64x128xf32>
    %13 = arith.truncf %12 : vector<64x128xf32> to vector<64x128xbf16>
    %c0_7 = arith.constant 0 : index
    %c0_8 = arith.constant 0 : index
    %14 = vector.load %arg4[%c0_7, %c0_8] : memref<144x64xbf16, #tpu.memory_space<vmem>>, vector<144x64xbf16>
    %cst_9 = arith.constant dense<0.000000e+00> : vector<144x128xf32>
    %15 = tpu.matmul %14, %13, %cst_9 {dimension_numbers = #tpu.dot_dimension_numbers<[1], [0], [0], [1], [0, 0, 1, 1], [], []>} : vector<144x64xbf16>, vector<64x128xbf16>, vector<144x128xf32> -> vector<144x128xf32>
    %16 = arith.truncf %15 : vector<144x128xf32> to vector<144x128xbf16>
    %cst_10 = arith.constant 0.000000e+00 : f32
    %17 = vector.broadcast %cst_10 : f32 to vector<16x128xf32>
    %18 = vector.extract_strided_slice %16 {offsets = [0, 0], sizes = [16, 128], strides = [1, 1]} : vector<144x128xbf16> to vector<16x128xbf16>
    %c0_11 = arith.constant 0 : index
    %c0_12 = arith.constant 0 : index
    %c0_13 = arith.constant 0 : index
    %19 = vector.load %arg5[%c0_11, %c0_12, %c0_13] : memref<9x128x128xbf16, #tpu.memory_space<vmem>>, vector<1x128x128xbf16>
    %20 = vector.shape_cast %19 : vector<1x128x128xbf16> to vector<128x128xbf16>
    %cst_14 = arith.constant dense<0.000000e+00> : vector<16x128xf32>
    %21 = tpu.matmul %18, %20, %cst_14 {dimension_numbers = #tpu.dot_dimension_numbers<[1], [0], [0], [1], [0, 0, 1, 1], [], []>} : vector<16x128xbf16>, vector<128x128xbf16>, vector<16x128xf32> -> vector<16x128xf32>
    %22 = arith.addf %17, %21 : vector<16x128xf32>
    %23 = vector.extract_strided_slice %16 {offsets = [16, 0], sizes = [16, 128], strides = [1, 1]} : vector<144x128xbf16> to vector<16x128xbf16>
    %c1 = arith.constant 1 : index
    %c0_15 = arith.constant 0 : index
    %c0_16 = arith.constant 0 : index
    %24 = vector.load %arg5[%c1, %c0_15, %c0_16] : memref<9x128x128xbf16, #tpu.memory_space<vmem>>, vector<1x128x128xbf16>
    %25 = vector.shape_cast %24 : vector<1x128x128xbf16> to vector<128x128xbf16>
    %cst_17 = arith.constant dense<0.000000e+00> : vector<16x128xf32>
    %26 = tpu.matmul %23, %25, %cst_17 {dimension_numbers = #tpu.dot_dimension_numbers<[1], [0], [0], [1], [0, 0, 1, 1], [], []>} : vector<16x128xbf16>, vector<128x128xbf16>, vector<16x128xf32> -> vector<16x128xf32>
    %27 = arith.addf %22, %26 : vector<16x128xf32>
    %28 = vector.extract_strided_slice %16 {offsets = [32, 0], sizes = [16, 128], strides = [1, 1]} : vector<144x128xbf16> to vector<16x128xbf16>
    %c2 = arith.constant 2 : index
    %c0_18 = arith.constant 0 : index
    %c0_19 = arith.constant 0 : index
    %29 = vector.load %arg5[%c2, %c0_18, %c0_19] : memref<9x128x128xbf16, #tpu.memory_space<vmem>>, vector<1x128x128xbf16>
    %30 = vector.shape_cast %29 : vector<1x128x128xbf16> to vector<128x128xbf16>
    %cst_20 = arith.constant dense<0.000000e+00> : vector<16x128xf32>
    %31 = tpu.matmul %28, %30, %cst_20 {dimension_numbers = #tpu.dot_dimension_numbers<[1], [0], [0], [1], [0, 0, 1, 1], [], []>} : vector<16x128xbf16>, vector<128x128xbf16>, vector<16x128xf32> -> vector<16x128xf32>
    %32 = arith.addf %27, %31 : vector<16x128xf32>
    %33 = vector.extract_strided_slice %16 {offsets = [48, 0], sizes = [16, 128], strides = [1, 1]} : vector<144x128xbf16> to vector<16x128xbf16>
    %c3 = arith.constant 3 : index
    %c0_21 = arith.constant 0 : index
    %c0_22 = arith.constant 0 : index
    %34 = vector.load %arg5[%c3, %c0_21, %c0_22] : memref<9x128x128xbf16, #tpu.memory_space<vmem>>, vector<1x128x128xbf16>
    %35 = vector.shape_cast %34 : vector<1x128x128xbf16> to vector<128x128xbf16>
    %cst_23 = arith.constant dense<0.000000e+00> : vector<16x128xf32>
    %36 = tpu.matmul %33, %35, %cst_23 {dimension_numbers = #tpu.dot_dimension_numbers<[1], [0], [0], [1], [0, 0, 1, 1], [], []>} : vector<16x128xbf16>, vector<128x128xbf16>, vector<16x128xf32> -> vector<16x128xf32>
    %37 = arith.addf %32, %36 : vector<16x128xf32>
    %38 = vector.extract_strided_slice %16 {offsets = [64, 0], sizes = [16, 128], strides = [1, 1]} : vector<144x128xbf16> to vector<16x128xbf16>
    %c4 = arith.constant 4 : index
    %c0_24 = arith.constant 0 : index
    %c0_25 = arith.constant 0 : index
    %39 = vector.load %arg5[%c4, %c0_24, %c0_25] : memref<9x128x128xbf16, #tpu.memory_space<vmem>>, vector<1x128x128xbf16>
    %40 = vector.shape_cast %39 : vector<1x128x128xbf16> to vector<128x128xbf16>
    %cst_26 = arith.constant dense<0.000000e+00> : vector<16x128xf32>
    %41 = tpu.matmul %38, %40, %cst_26 {dimension_numbers = #tpu.dot_dimension_numbers<[1], [0], [0], [1], [0, 0, 1, 1], [], []>} : vector<16x128xbf16>, vector<128x128xbf16>, vector<16x128xf32> -> vector<16x128xf32>
    %42 = arith.addf %37, %41 : vector<16x128xf32>
    %43 = vector.extract_strided_slice %16 {offsets = [80, 0], sizes = [16, 128], strides = [1, 1]} : vector<144x128xbf16> to vector<16x128xbf16>
    %c5 = arith.constant 5 : index
    %c0_27 = arith.constant 0 : index
    %c0_28 = arith.constant 0 : index
    %44 = vector.load %arg5[%c5, %c0_27, %c0_28] : memref<9x128x128xbf16, #tpu.memory_space<vmem>>, vector<1x128x128xbf16>
    %45 = vector.shape_cast %44 : vector<1x128x128xbf16> to vector<128x128xbf16>
    %cst_29 = arith.constant dense<0.000000e+00> : vector<16x128xf32>
    %46 = tpu.matmul %43, %45, %cst_29 {dimension_numbers = #tpu.dot_dimension_numbers<[1], [0], [0], [1], [0, 0, 1, 1], [], []>} : vector<16x128xbf16>, vector<128x128xbf16>, vector<16x128xf32> -> vector<16x128xf32>
    %47 = arith.addf %42, %46 : vector<16x128xf32>
    %48 = vector.extract_strided_slice %16 {offsets = [96, 0], sizes = [16, 128], strides = [1, 1]} : vector<144x128xbf16> to vector<16x128xbf16>
    %c6 = arith.constant 6 : index
    %c0_30 = arith.constant 0 : index
    %c0_31 = arith.constant 0 : index
    %49 = vector.load %arg5[%c6, %c0_30, %c0_31] : memref<9x128x128xbf16, #tpu.memory_space<vmem>>, vector<1x128x128xbf16>
    %50 = vector.shape_cast %49 : vector<1x128x128xbf16> to vector<128x128xbf16>
    %cst_32 = arith.constant dense<0.000000e+00> : vector<16x128xf32>
    %51 = tpu.matmul %48, %50, %cst_32 {dimension_numbers = #tpu.dot_dimension_numbers<[1], [0], [0], [1], [0, 0, 1, 1], [], []>} : vector<16x128xbf16>, vector<128x128xbf16>, vector<16x128xf32> -> vector<16x128xf32>
    %52 = arith.addf %47, %51 : vector<16x128xf32>
    %53 = vector.extract_strided_slice %16 {offsets = [112, 0], sizes = [16, 128], strides = [1, 1]} : vector<144x128xbf16> to vector<16x128xbf16>
    %c7 = arith.constant 7 : index
    %c0_33 = arith.constant 0 : index
    %c0_34 = arith.constant 0 : index
    %54 = vector.load %arg5[%c7, %c0_33, %c0_34] : memref<9x128x128xbf16, #tpu.memory_space<vmem>>, vector<1x128x128xbf16>
    %55 = vector.shape_cast %54 : vector<1x128x128xbf16> to vector<128x128xbf16>
    %cst_35 = arith.constant dense<0.000000e+00> : vector<16x128xf32>
    %56 = tpu.matmul %53, %55, %cst_35 {dimension_numbers = #tpu.dot_dimension_numbers<[1], [0], [0], [1], [0, 0, 1, 1], [], []>} : vector<16x128xbf16>, vector<128x128xbf16>, vector<16x128xf32> -> vector<16x128xf32>
    %57 = arith.addf %52, %56 : vector<16x128xf32>
    %58 = vector.extract_strided_slice %16 {offsets = [128, 0], sizes = [16, 128], strides = [1, 1]} : vector<144x128xbf16> to vector<16x128xbf16>
    %c8 = arith.constant 8 : index
    %c0_36 = arith.constant 0 : index
    %c0_37 = arith.constant 0 : index
    %59 = vector.load %arg5[%c8, %c0_36, %c0_37] : memref<9x128x128xbf16, #tpu.memory_space<vmem>>, vector<1x128x128xbf16>
    %60 = vector.shape_cast %59 : vector<1x128x128xbf16> to vector<128x128xbf16>
    %cst_38 = arith.constant dense<0.000000e+00> : vector<16x128xf32>
    %61 = tpu.matmul %58, %60, %cst_38 {dimension_numbers = #tpu.dot_dimension_numbers<[1], [0], [0], [1], [0, 0, 1, 1], [], []>} : vector<16x128xbf16>, vector<128x128xbf16>, vector<16x128xf32> -> vector<16x128xf32>
    %62 = arith.addf %57, %61 : vector<16x128xf32>
    %c0_39 = arith.constant 0 : index
    %c0_40 = arith.constant 0 : index
    %63 = vector.load %arg6[%c0_39, %c0_40] : memref<1x128xf32, #tpu.memory_space<vmem>>, vector<1x128xf32>
    %64 = vector.broadcast %63 : vector<1x128xf32> to vector<16x128xf32>
    %65 = arith.addf %62, %64 : vector<16x128xf32>
    %66 = arith.negf %65 : vector<16x128xf32>
    %67 = math.exp %66 : vector<16x128xf32>
    %cst_41 = arith.constant 1.000000e+00 : f32
    %68 = vector.broadcast %cst_41 : f32 to vector<16x128xf32>
    %69 = arith.addf %68, %67 : vector<16x128xf32>
    %70 = arith.divf %68, %69 : vector<16x128xf32>
    %71 = arith.mulf %65, %70 : vector<16x128xf32>
    %72 = arith.truncf %71 : vector<16x128xf32> to vector<16x128xbf16>
    %c0_42 = arith.constant 0 : index
    %c0_43 = arith.constant 0 : index
    %73 = vector.load %arg7[%c0_42, %c0_43] : memref<128x128xbf16, #tpu.memory_space<vmem>>, vector<128x128xbf16>
    %cst_44 = arith.constant dense<0.000000e+00> : vector<16x128xf32>
    %74 = tpu.matmul %72, %73, %cst_44 {dimension_numbers = #tpu.dot_dimension_numbers<[1], [0], [0], [1], [0, 0, 1, 1], [], []>} : vector<16x128xbf16>, vector<128x128xbf16>, vector<16x128xf32> -> vector<16x128xf32>
    %c0_45 = arith.constant 0 : index
    %c0_46 = arith.constant 0 : index
    %75 = vector.load %arg8[%c0_45, %c0_46] : memref<1x128xf32, #tpu.memory_space<vmem>>, vector<1x128xf32>
    %76 = vector.broadcast %75 : vector<1x128xf32> to vector<16x128xf32>
    %77 = arith.addf %74, %76 : vector<16x128xf32>
    %78 = arith.negf %77 : vector<16x128xf32>
    %79 = math.exp %78 : vector<16x128xf32>
    %cst_47 = arith.constant 1.000000e+00 : f32
    %80 = vector.broadcast %cst_47 : f32 to vector<16x128xf32>
    %81 = arith.addf %80, %79 : vector<16x128xf32>
    %82 = arith.divf %80, %81 : vector<16x128xf32>
    %83 = arith.mulf %77, %82 : vector<16x128xf32>
    %84 = arith.truncf %83 : vector<16x128xf32> to vector<16x128xbf16>
    %c0_48 = arith.constant 0 : index
    %c0_49 = arith.constant 0 : index
    %85 = vector.load %arg9[%c0_48, %c0_49] : memref<144x16xbf16, #tpu.memory_space<vmem>>, vector<144x16xbf16>
    %cst_50 = arith.constant dense<0.000000e+00> : vector<144x128xf32>
    %86 = tpu.matmul %85, %84, %cst_50 {dimension_numbers = #tpu.dot_dimension_numbers<[1], [0], [0], [1], [0, 0, 1, 1], [], []>} : vector<144x16xbf16>, vector<16x128xbf16>, vector<144x128xf32> -> vector<144x128xf32>
    %87 = arith.truncf %86 : vector<144x128xf32> to vector<144x128xbf16>
    %cst_51 = arith.constant 0.000000e+00 : f32
    %88 = vector.broadcast %cst_51 : f32 to vector<16x128xf32>
    %89 = vector.extract_strided_slice %87 {offsets = [0, 0], sizes = [16, 128], strides = [1, 1]} : vector<144x128xbf16> to vector<16x128xbf16>
    %c0_52 = arith.constant 0 : index
    %c0_53 = arith.constant 0 : index
    %c0_54 = arith.constant 0 : index
    %90 = vector.load %arg10[%c0_52, %c0_53, %c0_54] : memref<9x128x128xbf16, #tpu.memory_space<vmem>>, vector<1x128x128xbf16>
    %91 = vector.shape_cast %90 : vector<1x128x128xbf16> to vector<128x128xbf16>
    %cst_55 = arith.constant dense<0.000000e+00> : vector<16x128xf32>
    %92 = tpu.matmul %89, %91, %cst_55 {dimension_numbers = #tpu.dot_dimension_numbers<[1], [0], [0], [1], [0, 0, 1, 1], [], []>} : vector<16x128xbf16>, vector<128x128xbf16>, vector<16x128xf32> -> vector<16x128xf32>
    %93 = arith.addf %88, %92 : vector<16x128xf32>
    %94 = vector.extract_strided_slice %87 {offsets = [16, 0], sizes = [16, 128], strides = [1, 1]} : vector<144x128xbf16> to vector<16x128xbf16>
    %c1_56 = arith.constant 1 : index
    %c0_57 = arith.constant 0 : index
    %c0_58 = arith.constant 0 : index
    %95 = vector.load %arg10[%c1_56, %c0_57, %c0_58] : memref<9x128x128xbf16, #tpu.memory_space<vmem>>, vector<1x128x128xbf16>
    %96 = vector.shape_cast %95 : vector<1x128x128xbf16> to vector<128x128xbf16>
    %cst_59 = arith.constant dense<0.000000e+00> : vector<16x128xf32>
    %97 = tpu.matmul %94, %96, %cst_59 {dimension_numbers = #tpu.dot_dimension_numbers<[1], [0], [0], [1], [0, 0, 1, 1], [], []>} : vector<16x128xbf16>, vector<128x128xbf16>, vector<16x128xf32> -> vector<16x128xf32>
    %98 = arith.addf %93, %97 : vector<16x128xf32>
    %99 = vector.extract_strided_slice %87 {offsets = [32, 0], sizes = [16, 128], strides = [1, 1]} : vector<144x128xbf16> to vector<16x128xbf16>
    %c2_60 = arith.constant 2 : index
    %c0_61 = arith.constant 0 : index
    %c0_62 = arith.constant 0 : index
    %100 = vector.load %arg10[%c2_60, %c0_61, %c0_62] : memref<9x128x128xbf16, #tpu.memory_space<vmem>>, vector<1x128x128xbf16>
    %101 = vector.shape_cast %100 : vector<1x128x128xbf16> to vector<128x128xbf16>
    %cst_63 = arith.constant dense<0.000000e+00> : vector<16x128xf32>
    %102 = tpu.matmul %99, %101, %cst_63 {dimension_numbers = #tpu.dot_dimension_numbers<[1], [0], [0], [1], [0, 0, 1, 1], [], []>} : vector<16x128xbf16>, vector<128x128xbf16>, vector<16x128xf32> -> vector<16x128xf32>
    %103 = arith.addf %98, %102 : vector<16x128xf32>
    %104 = vector.extract_strided_slice %87 {offsets = [48, 0], sizes = [16, 128], strides = [1, 1]} : vector<144x128xbf16> to vector<16x128xbf16>
    %c3_64 = arith.constant 3 : index
    %c0_65 = arith.constant 0 : index
    %c0_66 = arith.constant 0 : index
    %105 = vector.load %arg10[%c3_64, %c0_65, %c0_66] : memref<9x128x128xbf16, #tpu.memory_space<vmem>>, vector<1x128x128xbf16>
    %106 = vector.shape_cast %105 : vector<1x128x128xbf16> to vector<128x128xbf16>
    %cst_67 = arith.constant dense<0.000000e+00> : vector<16x128xf32>
    %107 = tpu.matmul %104, %106, %cst_67 {dimension_numbers = #tpu.dot_dimension_numbers<[1], [0], [0], [1], [0, 0, 1, 1], [], []>} : vector<16x128xbf16>, vector<128x128xbf16>, vector<16x128xf32> -> vector<16x128xf32>
    %108 = arith.addf %103, %107 : vector<16x128xf32>
    %109 = vector.extract_strided_slice %87 {offsets = [64, 0], sizes = [16, 128], strides = [1, 1]} : vector<144x128xbf16> to vector<16x128xbf16>
    %c4_68 = arith.constant 4 : index
    %c0_69 = arith.constant 0 : index
    %c0_70 = arith.constant 0 : index
    %110 = vector.load %arg10[%c4_68, %c0_69, %c0_70] : memref<9x128x128xbf16, #tpu.memory_space<vmem>>, vector<1x128x128xbf16>
    %111 = vector.shape_cast %110 : vector<1x128x128xbf16> to vector<128x128xbf16>
    %cst_71 = arith.constant dense<0.000000e+00> : vector<16x128xf32>
    %112 = tpu.matmul %109, %111, %cst_71 {dimension_numbers = #tpu.dot_dimension_numbers<[1], [0], [0], [1], [0, 0, 1, 1], [], []>} : vector<16x128xbf16>, vector<128x128xbf16>, vector<16x128xf32> -> vector<16x128xf32>
    %113 = arith.addf %108, %112 : vector<16x128xf32>
    %114 = vector.extract_strided_slice %87 {offsets = [80, 0], sizes = [16, 128], strides = [1, 1]} : vector<144x128xbf16> to vector<16x128xbf16>
    %c5_72 = arith.constant 5 : index
    %c0_73 = arith.constant 0 : index
    %c0_74 = arith.constant 0 : index
    %115 = vector.load %arg10[%c5_72, %c0_73, %c0_74] : memref<9x128x128xbf16, #tpu.memory_space<vmem>>, vector<1x128x128xbf16>
    %116 = vector.shape_cast %115 : vector<1x128x128xbf16> to vector<128x128xbf16>
    %cst_75 = arith.constant dense<0.000000e+00> : vector<16x128xf32>
    %117 = tpu.matmul %114, %116, %cst_75 {dimension_numbers = #tpu.dot_dimension_numbers<[1], [0], [0], [1], [0, 0, 1, 1], [], []>} : vector<16x128xbf16>, vector<128x128xbf16>, vector<16x128xf32> -> vector<16x128xf32>
    %118 = arith.addf %113, %117 : vector<16x128xf32>
    %119 = vector.extract_strided_slice %87 {offsets = [96, 0], sizes = [16, 128], strides = [1, 1]} : vector<144x128xbf16> to vector<16x128xbf16>
    %c6_76 = arith.constant 6 : index
    %c0_77 = arith.constant 0 : index
    %c0_78 = arith.constant 0 : index
    %120 = vector.load %arg10[%c6_76, %c0_77, %c0_78] : memref<9x128x128xbf16, #tpu.memory_space<vmem>>, vector<1x128x128xbf16>
    %121 = vector.shape_cast %120 : vector<1x128x128xbf16> to vector<128x128xbf16>
    %cst_79 = arith.constant dense<0.000000e+00> : vector<16x128xf32>
    %122 = tpu.matmul %119, %121, %cst_79 {dimension_numbers = #tpu.dot_dimension_numbers<[1], [0], [0], [1], [0, 0, 1, 1], [], []>} : vector<16x128xbf16>, vector<128x128xbf16>, vector<16x128xf32> -> vector<16x128xf32>
    %123 = arith.addf %118, %122 : vector<16x128xf32>
    %124 = vector.extract_strided_slice %87 {offsets = [112, 0], sizes = [16, 128], strides = [1, 1]} : vector<144x128xbf16> to vector<16x128xbf16>
    %c7_80 = arith.constant 7 : index
    %c0_81 = arith.constant 0 : index
    %c0_82 = arith.constant 0 : index
    %125 = vector.load %arg10[%c7_80, %c0_81, %c0_82] : memref<9x128x128xbf16, #tpu.memory_space<vmem>>, vector<1x128x128xbf16>
    %126 = vector.shape_cast %125 : vector<1x128x128xbf16> to vector<128x128xbf16>
    %cst_83 = arith.constant dense<0.000000e+00> : vector<16x128xf32>
    %127 = tpu.matmul %124, %126, %cst_83 {dimension_numbers = #tpu.dot_dimension_numbers<[1], [0], [0], [1], [0, 0, 1, 1], [], []>} : vector<16x128xbf16>, vector<128x128xbf16>, vector<16x128xf32> -> vector<16x128xf32>
    %128 = arith.addf %123, %127 : vector<16x128xf32>
    %129 = vector.extract_strided_slice %87 {offsets = [128, 0], sizes = [16, 128], strides = [1, 1]} : vector<144x128xbf16> to vector<16x128xbf16>
    %c8_84 = arith.constant 8 : index
    %c0_85 = arith.constant 0 : index
    %c0_86 = arith.constant 0 : index
    %130 = vector.load %arg10[%c8_84, %c0_85, %c0_86] : memref<9x128x128xbf16, #tpu.memory_space<vmem>>, vector<1x128x128xbf16>
    %131 = vector.shape_cast %130 : vector<1x128x128xbf16> to vector<128x128xbf16>
    %cst_87 = arith.constant dense<0.000000e+00> : vector<16x128xf32>
    %132 = tpu.matmul %129, %131, %cst_87 {dimension_numbers = #tpu.dot_dimension_numbers<[1], [0], [0], [1], [0, 0, 1, 1], [], []>} : vector<16x128xbf16>, vector<128x128xbf16>, vector<16x128xf32> -> vector<16x128xf32>
    %133 = arith.addf %128, %132 : vector<16x128xf32>
    %c0_88 = arith.constant 0 : index
    %c0_89 = arith.constant 0 : index
    %134 = vector.load %arg11[%c0_88, %c0_89] : memref<1x128xf32, #tpu.memory_space<vmem>>, vector<1x128xf32>
    %135 = vector.broadcast %134 : vector<1x128xf32> to vector<16x128xf32>
    %136 = arith.addf %133, %135 : vector<16x128xf32>
    %137 = arith.negf %136 : vector<16x128xf32>
    %138 = math.exp %137 : vector<16x128xf32>
    %cst_90 = arith.constant 1.000000e+00 : f32
    %139 = vector.broadcast %cst_90 : f32 to vector<16x128xf32>
    %140 = arith.addf %139, %138 : vector<16x128xf32>
    %141 = arith.divf %139, %140 : vector<16x128xf32>
    %142 = arith.mulf %136, %141 : vector<16x128xf32>
    %143 = arith.addf %142, %71 : vector<16x128xf32>
    %c0_91 = arith.constant 0 : index
    %c0_92 = arith.constant 0 : index
    %144 = vector.load %arg12[%c0_91, %c0_92] : memref<128x128xf32, #tpu.memory_space<vmem>>, vector<128x128xf32>
    %cst_93 = arith.constant dense<0.000000e+00> : vector<16x128xf32>
    %145 = tpu.matmul %143, %144, %cst_93 {dimension_numbers = #tpu.dot_dimension_numbers<[1], [0], [0], [1], [0, 0, 1, 1], [], []>} : vector<16x128xf32>, vector<128x128xf32>, vector<16x128xf32> -> vector<16x128xf32>
    %c0_94 = arith.constant 0 : index
    %c0_95 = arith.constant 0 : index
    %146 = vector.load %arg13[%c0_94, %c0_95] : memref<1x128xf32, #tpu.memory_space<vmem>>, vector<1x128xf32>
    %147 = vector.broadcast %146 : vector<1x128xf32> to vector<16x128xf32>
    %148 = arith.addf %145, %147 : vector<16x128xf32>
    %c0_96 = arith.constant 0 : index
    %c0_97 = arith.constant 0 : index
    %c0_98 = arith.constant 0 : index
    %149 = vector.load %arg14[%c0_96, %c0_97, %c0_98] : memref<1x16x128xf32, #tpu.memory_space<vmem>>, vector<1x16x128xf32>
    %150 = vector.shape_cast %149 : vector<1x16x128xf32> to vector<16x128xf32>
    %151 = vector.shape_cast %148 : vector<16x128xf32> to vector<1x16x128xf32>
    tpu.vector_store %arg14[%c0_96, %c0_97, %c0_98], %151 {strides = array<i32>} : memref<1x16x128xf32, #tpu.memory_space<vmem>>, vector<1x16x128xf32>,
    return
  }
  func.func @transform_0(%arg0: i32) -> (i32, i32, i32) {
    %c0_i32 = arith.constant 0 : i32
    %c0_i32_0 = arith.constant 0 : i32
    %c0_i32_1 = arith.constant 0 : i32
    return %arg0, %c0_i32, %c0_i32_0 : i32, i32, i32
  }
  func.func @transform_1(%arg0: i32) -> (i32, i32) {
    %c0_i32 = arith.constant 0 : i32
    %c0_i32_0 = arith.constant 0 : i32
    %c0_i32_1 = arith.constant 0 : i32
    return %c0_i32, %c0_i32_0 : i32, i32
  }
  func.func @transform_2(%arg0: i32) -> (i32, i32) {
    %c0_i32 = arith.constant 0 : i32
    %c0_i32_0 = arith.constant 0 : i32
    %c0_i32_1 = arith.constant 0 : i32
    return %c0_i32, %c0_i32_0 : i32, i32
  }
  func.func @transform_3(%arg0: i32) -> (i32, i32) {
    %c0_i32 = arith.constant 0 : i32
    %c0_i32_0 = arith.constant 0 : i32
    %c0_i32_1 = arith.constant 0 : i32
    return %c0_i32, %c0_i32_0 : i32, i32
  }
  func.func @transform_4(%arg0: i32) -> (i32, i32, i32) {
    %c0_i32 = arith.constant 0 : i32
    %c0_i32_0 = arith.constant 0 : i32
    %c0_i32_1 = arith.constant 0 : i32
    %c0_i32_2 = arith.constant 0 : i32
    return %c0_i32, %c0_i32_0, %c0_i32_1 : i32, i32, i32
  }
  func.func @transform_5(%arg0: i32) -> (i32, i32) {
    %c0_i32 = arith.constant 0 : i32
    %c0_i32_0 = arith.constant 0 : i32
    %c0_i32_1 = arith.constant 0 : i32
    return %c0_i32, %c0_i32_0 : i32, i32
  }
  func.func @transform_6(%arg0: i32) -> (i32, i32) {
    %c0_i32 = arith.constant 0 : i32
    %c0_i32_0 = arith.constant 0 : i32
    %c0_i32_1 = arith.constant 0 : i32
    return %c0_i32, %c0_i32_0 : i32, i32
  }
  func.func @transform_7(%arg0: i32) -> (i32, i32) {
    %c0_i32 = arith.constant 0 : i32
    %c0_i32_0 = arith.constant 0 : i32
    %c0_i32_1 = arith.constant 0 : i32
    return %c0_i32, %c0_i32_0 : i32, i32
  }
  func.func @transform_8(%arg0: i32) -> (i32, i32) {
    %c0_i32 = arith.constant 0 : i32
    %c0_i32_0 = arith.constant 0 : i32
    %c0_i32_1 = arith.constant 0 : i32
    return %c0_i32, %c0_i32_0 : i32, i32
  }
  func.func @transform_9(%arg0: i32) -> (i32, i32, i32) {
    %c0_i32 = arith.constant 0 : i32
    %c0_i32_0 = arith.constant 0 : i32
    %c0_i32_1 = arith.constant 0 : i32
    %c0_i32_2 = arith.constant 0 : i32
    return %c0_i32, %c0_i32_0, %c0_i32_1 : i32, i32, i32
  }
  func.func @transform_10(%arg0: i32) -> (i32, i32) {
    %c0_i32 = arith.constant 0 : i32
    %c0_i32_0 = arith.constant 0 : i32
    %c0_i32_1 = arith.constant 0 : i32
    return %c0_i32, %c0_i32_0 : i32, i32
  }
  func.func @transform_11(%arg0: i32) -> (i32, i32) {
    %c0_i32 = arith.constant 0 : i32
    %c0_i32_0 = arith.constant 0 : i32
    %c0_i32_1 = arith.constant 0 : i32
    return %c0_i32, %c0_i32_0 : i32, i32
  }
  func.func @transform_12(%arg0: i32) -> (i32, i32) {
    %c0_i32 = arith.constant 0 : i32
    %c0_i32_0 = arith.constant 0 : i32
    %c0_i32_1 = arith.constant 0 : i32
    return %c0_i32, %c0_i32_0 : i32, i32
  }
  func.func @transform_13(%arg0: i32) -> (i32, i32, i32) {
    %c0_i32 = arith.constant 0 : i32
    %c0_i32_0 = arith.constant 0 : i32
    %c0_i32_1 = arith.constant 0 : i32
    return %arg0, %c0_i32, %c0_i32_0 : i32, i32, i32
  }
}

</mosaic_0001>

<llo_original>
// kernel: yolo_forward.1
$region0: #{yolo_forward.1}
  #allocation0 [shape = 'u32[]', space=smem, size = 0x4, offset = 0x4, fixed_abs, tag = 'smem constant byte address 0x4 - core index']
  #allocation1 [shape = 'u32[144,128]{1,0:T(1,128)}', space=vmem, size = 0x12000, scoped, tag = 'internal scratch']
  %s0 = inlined_call_operand.vmem [shape: bf16[2,64,128], index: 0, kind: input, shape index: {}]
  %s1 = inlined_call_operand.vmem [shape: bf16[128,128], index: 1, kind: input, shape index: {}]
  %s2 = inlined_call_operand.vmem [shape: f32[1,128], index: 2, kind: input, shape index: {}]
  %s3 = inlined_call_operand.vmem [shape: bf16[144,64], index: 3, kind: input, shape index: {}]
  %s4 = inlined_call_operand.vmem [shape: bf16[9,128,128], index: 4, kind: input, shape index: {}]
  %s5 = inlined_call_operand.vmem [shape: f32[1,128], index: 5, kind: input, shape index: {}]
  %s6 = inlined_call_operand.vmem [shape: bf16[128,128], index: 6, kind: input, shape index: {}]
  %s7 = inlined_call_operand.vmem [shape: f32[1,128], index: 7, kind: input, shape index: {}]
  %s8 = inlined_call_operand.vmem [shape: bf16[144,16], index: 8, kind: input, shape index: {}]
  %s9 = inlined_call_operand.vmem [shape: bf16[9,128,128], index: 9, kind: input, shape index: {}]
  %s10 = inlined_call_operand.vmem [shape: f32[1,128], index: 10, kind: input, shape index: {}]
  %s11 = inlined_call_operand.vmem [shape: f32[128,128], index: 11, kind: input, shape index: {}]
  %s12 = inlined_call_operand.vmem [shape: f32[1,128], index: 12, kind: input, shape index: {}]
  %s13 = inlined_call_operand.hbm [shape: f32[2,16,128], index: 13, kind: output, shape index: {}]
  %s14 = sld [smem:[#allocation0]]
  $region85: #{yolo_forward.1} parent=0
    _
  %s16 = ssub.s32 1, %s14
  %s17 = scalar_select 0, %s16, %s14
  $region1: #{yolo_forward.1} parent=0
    #allocation2 [shape = 'u8[16384]{0}', space=vmem, size = 0x4000, scoped, tag = 'output window, operand 0']
    #allocation3 [shape = 's32[2]{0}', space=sflag, size = 0x8, scoped, tag = 'scoped memory for yolo_forward.1']
    %18 = vsyncpa [#allocation3], 0
    %s19 = scalar_lea.sflag [#allocation3], 1
    %20 = vsyncpa %s19, 0
    loop: start=0, step=1, limit=4
    $region2: #{yolo_forward.1} parent=1 // loop_pre_header
      _
    $region3: #{yolo_forward.1} parent=1 // loop_header
      %s22 = sphi 0, %s26
      %p23 = scmp.ge.s32.totalorder %s22, 4
      %s32 = sphi 0, %s34
      %s35 = sphi 0, %s32
      %s36 = sphi 0, %s35
      %s52 = sphi 0, %s36
      %s56 = sphi 0, %s56
      %s58 = sphi 0, %s56
      %s59 = sphi 0, %s58
      %s73 = sphi 0, %s59
      %s77 = sphi 0, %s77
      %s79 = sphi 0, %s77
      %s80 = sphi 0, %s79
      %s94 = sphi 0, %s80
      %s98 = sphi 0, %s98
      %s100 = sphi 0, %s98
      %s101 = sphi 0, %s100
      %s115 = sphi 0, %s101
      %s119 = sphi 0, %s119
      %s121 = sphi 0, %s119
      %s122 = sphi 0, %s121
      %s136 = sphi 0, %s122
      %s140 = sphi 0, %s140
      %s142 = sphi 0, %s140
      %s143 = sphi 0, %s142
      %s157 = sphi 0, %s143
      %s161 = sphi 0, %s161
      %s163 = sphi 0, %s161
      %s164 = sphi 0, %s163
      %s178 = sphi 0, %s164
      %s182 = sphi 0, %s182
      %s184 = sphi 0, %s182
      %s185 = sphi 0, %s184
      %s199 = sphi 0, %s185
      %s203 = sphi 0, %s203
      %s205 = sphi 0, %s203
      %s206 = sphi 0, %s205
      %s220 = sphi 0, %s206
      %s224 = sphi 0, %s224
      %s226 = sphi 0, %s224
      %s227 = sphi 0, %s226
      %s241 = sphi 0, %s227
      %s245 = sphi 0, %s245
      %s247 = sphi 0, %s245
      %s248 = sphi 0, %s247
      %s262 = sphi 0, %s248
      %s266 = sphi 0, %s266
      %s268 = sphi 0, %s266
      %s269 = sphi 0, %s268
      %s283 = sphi 0, %s269
      %s287 = sphi 0, %s287
      %s289 = sphi 0, %s287
      %s290 = sphi 0, %s289
      %s304 = sphi 0, %s290
      %s310 = sphi 0, %s312
      %s313 = sphi 0, %s310
      %s314 = sphi 0, %s313
      %s330 = sphi 0, %s314
    $region4: #{yolo_forward.1} parent=1 // loop_header_branch
      %25 = sbr.rel (%p23) target = $region8
    $region5: #{yolo_forward.1} parent=1 // loop_body
      %s27 = ssub.s32 %s22, 1
      %s28 = ssub.s32 %s22, 2
      %s29 = sadd.s32 %s22, 1
      %s30 = ssub.s32 %s22, %s29
      %p31 = scmp.eq.s32.totalorder %s30, 0
      %s33 = sadd.s32 %s32, 1
      %s34 = scalar_select %p31, %s32, %s33
      %p37 = pneg %p31
      %p38 = scmp.eq.s32.totalorder %s22, 1
      %p39 = por %p37, %p38
      %p40 = scmp.ne.s32.totalorder %s32, %s35
      %p41 = scmp.eq.s32.totalorder %s22, 0
      %p42 = por %p40, %p41
      %p43 = scmp.ne.s32.totalorder %s32, %s35
      %p44 = scmp.eq.s32.totalorder %s27, 1
      %p45 = por %p43, %p44
      %p46 = scmp.ne.s32.totalorder %s35, %s36
      %p47 = scmp.eq.s32.totalorder %s27, 0
      %p48 = por %p46, %p47
      %p49 = scmp.ne.s32.totalorder %s35, %s36
      %p50 = scmp.eq.s32.totalorder %s28, 1
      %p51 = por %p49, %p50
      %p53 = scmp.ne.s32.totalorder %s36, %s52
      %p54 = scmp.eq.s32.totalorder %s28, 0
      %p55 = por %p53, %p54
      %s57 = sadd.s32 %s56, 1
      %p60 = scmp.eq.s32.totalorder %s22, 1
      %p61 = scmp.ne.s32.totalorder %s56, %s58
      %p62 = scmp.eq.s32.totalorder %s22, 0
      %p63 = por %p61, %p62
      %p64 = scmp.ne.s32.totalorder %s56, %s58
      %p65 = scmp.eq.s32.totalorder %s27, 1
      %p66 = por %p64, %p65
      %p67 = scmp.ne.s32.totalorder %s58, %s59
      %p68 = scmp.eq.s32.totalorder %s27, 0
      %p69 = por %p67, %p68
      %p70 = scmp.ne.s32.totalorder %s58, %s59
      %p71 = scmp.eq.s32.totalorder %s28, 1
      %p72 = por %p70, %p71
      %p74 = scmp.ne.s32.totalorder %s59, %s73
      %p75 = scmp.eq.s32.totalorder %s28, 0
      %p76 = por %p74, %p75
      %s78 = sadd.s32 %s77, 1
      %p81 = scmp.eq.s32.totalorder %s22, 1
      %p82 = scmp.ne.s32.totalorder %s77, %s79
      %p83 = scmp.eq.s32.totalorder %s22, 0
      %p84 = por %p82, %p83
      %p85 = scmp.ne.s32.totalorder %s77, %s79
      %p86 = scmp.eq.s32.totalorder %s27, 1
      %p87 = por %p85, %p86
      %p88 = scmp.ne.s32.totalorder %s79, %s80
      %p89 = scmp.eq.s32.totalorder %s27, 0
      %p90 = por %p88, %p89
      %p91 = scmp.ne.s32.totalorder %s79, %s80
      %p92 = scmp.eq.s32.totalorder %s28, 1
      %p93 = por %p91, %p92
      %p95 = scmp.ne.s32.totalorder %s80, %s94
      %p96 = scmp.eq.s32.totalorder %s28, 0
      %p97 = por %p95, %p96
      %s99 = sadd.s32 %s98, 1
      %p102 = scmp.eq.s32.totalorder %s22, 1
      %p103 = scmp.ne.s32.totalorder %s98, %s100
      %p104 = scmp.eq.s32.totalorder %s22, 0
      %p105 = por %p103, %p104
      %p106 = scmp.ne.s32.totalorder %s98, %s100
      %p107 = scmp.eq.s32.totalorder %s27, 1
      %p108 = por %p106, %p107
      %p109 = scmp.ne.s32.totalorder %s100, %s101
      %p110 = scmp.eq.s32.totalorder %s27, 0
      %p111 = por %p109, %p110
      %p112 = scmp.ne.s32.totalorder %s100, %s101
      %p113 = scmp.eq.s32.totalorder %s28, 1
      %p114 = por %p112, %p113
      %p116 = scmp.ne.s32.totalorder %s101, %s115
      %p117 = scmp.eq.s32.totalorder %s28, 0
      %p118 = por %p116, %p117
      %s120 = sadd.s32 %s119, 1
      %p123 = scmp.eq.s32.totalorder %s22, 1
      %p124 = scmp.ne.s32.totalorder %s119, %s121
      %p125 = scmp.eq.s32.totalorder %s22, 0
      %p126 = por %p124, %p125
      %p127 = scmp.ne.s32.totalorder %s119, %s121
      %p128 = scmp.eq.s32.totalorder %s27, 1
      %p129 = por %p127, %p128
      %p130 = scmp.ne.s32.totalorder %s121, %s122
      %p131 = scmp.eq.s32.totalorder %s27, 0
      %p132 = por %p130, %p131
      %p133 = scmp.ne.s32.totalorder %s121, %s122
      %p134 = scmp.eq.s32.totalorder %s28, 1
      %p135 = por %p133, %p134
      %p137 = scmp.ne.s32.totalorder %s122, %s136
      %p138 = scmp.eq.s32.totalorder %s28, 0
      %p139 = por %p137, %p138
      %s141 = sadd.s32 %s140, 1
      %p144 = scmp.eq.s32.totalorder %s22, 1
      %p145 = scmp.ne.s32.totalorder %s140, %s142
      %p146 = scmp.eq.s32.totalorder %s22, 0
      %p147 = por %p145, %p146
      %p148 = scmp.ne.s32.totalorder %s140, %s142
      %p149 = scmp.eq.s32.totalorder %s27, 1
      %p150 = por %p148, %p149
      %p151 = scmp.ne.s32.totalorder %s142, %s143
      %p152 = scmp.eq.s32.totalorder %s27, 0
      %p153 = por %p151, %p152
      %p154 = scmp.ne.s32.totalorder %s142, %s143
      %p155 = scmp.eq.s32.totalorder %s28, 1
      %p156 = por %p154, %p155
      %p158 = scmp.ne.s32.totalorder %s143, %s157
      %p159 = scmp.eq.s32.totalorder %s28, 0
      %p160 = por %p158, %p159
      %s162 = sadd.s32 %s161, 1
      %p165 = scmp.eq.s32.totalorder %s22, 1
      %p166 = scmp.ne.s32.totalorder %s161, %s163
      %p167 = scmp.eq.s32.totalorder %s22, 0
      %p168 = por %p166, %p167
      %p169 = scmp.ne.s32.totalorder %s161, %s163
      %p170 = scmp.eq.s32.totalorder %s27, 1
      %p171 = por %p169, %p170
      %p172 = scmp.ne.s32.totalorder %s163, %s164
      %p173 = scmp.eq.s32.totalorder %s27, 0
      %p174 = por %p172, %p173
      %p175 = scmp.ne.s32.totalorder %s163, %s164
      %p176 = scmp.eq.s32.totalorder %s28, 1
      %p177 = por %p175, %p176
      %p179 = scmp.ne.s32.totalorder %s164, %s178
      %p180 = scmp.eq.s32.totalorder %s28, 0
      %p181 = por %p179, %p180
      %s183 = sadd.s32 %s182, 1
      %p186 = scmp.eq.s32.totalorder %s22, 1
      %p187 = scmp.ne.s32.totalorder %s182, %s184
      %p188 = scmp.eq.s32.totalorder %s22, 0
      %p189 = por %p187, %p188
      %p190 = scmp.ne.s32.totalorder %s182, %s184
      %p191 = scmp.eq.s32.totalorder %s27, 1
      %p192 = por %p190, %p191
      %p193 = scmp.ne.s32.totalorder %s184, %s185
      %p194 = scmp.eq.s32.totalorder %s27, 0
      %p195 = por %p193, %p194
      %p196 = scmp.ne.s32.totalorder %s184, %s185
      %p197 = scmp.eq.s32.totalorder %s28, 1
      %p198 = por %p196, %p197
      %p200 = scmp.ne.s32.totalorder %s185, %s199
      %p201 = scmp.eq.s32.totalorder %s28, 0
      %p202 = por %p200, %p201
      %s204 = sadd.s32 %s203, 1
      %p207 = scmp.eq.s32.totalorder %s22, 1
      %p208 = scmp.ne.s32.totalorder %s203, %s205
      %p209 = scmp.eq.s32.totalorder %s22, 0
      %p210 = por %p208, %p209
      %p211 = scmp.ne.s32.totalorder %s203, %s205
      %p212 = scmp.eq.s32.totalorder %s27, 1
      %p213 = por %p211, %p212
      %p214 = scmp.ne.s32.totalorder %s205, %s206
      %p215 = scmp.eq.s32.totalorder %s27, 0
      %p216 = por %p214, %p215
      %p217 = scmp.ne.s32.totalorder %s205, %s206
      %p218 = scmp.eq.s32.totalorder %s28, 1
      %p219 = por %p217, %p218
      %p221 = scmp.ne.s32.totalorder %s206, %s220
      %p222 = scmp.eq.s32.totalorder %s28, 0
      %p223 = por %p221, %p222
      %s225 = sadd.s32 %s224, 1
      %p228 = scmp.eq.s32.totalorder %s22, 1
      %p229 = scmp.ne.s32.totalorder %s224, %s226
      %p230 = scmp.eq.s32.totalorder %s22, 0
      %p231 = por %p229, %p230
      %p232 = scmp.ne.s32.totalorder %s224, %s226
      %p233 = scmp.eq.s32.totalorder %s27, 1
      %p234 = por %p232, %p233
      %p235 = scmp.ne.s32.totalorder %s226, %s227
      %p236 = scmp.eq.s32.totalorder %s27, 0
      %p237 = por %p235, %p236
      %p238 = scmp.ne.s32.totalorder %s226, %s227
      %p239 = scmp.eq.s32.totalorder %s28, 1
      %p240 = por %p238, %p239
      %p242 = scmp.ne.s32.totalorder %s227, %s241
      %p243 = scmp.eq.s32.totalorder %s28, 0
      %p244 = por %p242, %p243
      %s246 = sadd.s32 %s245, 1
      %p249 = scmp.eq.s32.totalorder %s22, 1
      %p250 = scmp.ne.s32.totalorder %s245, %s247
      %p251 = scmp.eq.s32.totalorder %s22, 0
      %p252 = por %p250, %p251
      %p253 = scmp.ne.s32.totalorder %s245, %s247
      %p254 = scmp.eq.s32.totalorder %s27, 1
      %p255 = por %p253, %p254
      %p256 = scmp.ne.s32.totalorder %s247, %s248
      %p257 = scmp.eq.s32.totalorder %s27, 0
      %p258 = por %p256, %p257
      %p259 = scmp.ne.s32.totalorder %s247, %s248
      %p260 = scmp.eq.s32.totalorder %s28, 1
      %p261 = por %p259, %p260
      %p263 = scmp.ne.s32.totalorder %s248, %s262
      %p264 = scmp.eq.s32.totalorder %s28, 0
      %p265 = por %p263, %p264
      %s267 = sadd.s32 %s266, 1
      %p270 = scmp.eq.s32.totalorder %s22, 1
      %p271 = scmp.ne.s32.totalorder %s266, %s268
      %p272 = scmp.eq.s32.totalorder %s22, 0
      %p273 = por %p271, %p272
      %p274 = scmp.ne.s32.totalorder %s266, %s268
      %p275 = scmp.eq.s32.totalorder %s27, 1
      %p276 = por %p274, %p275
      %p277 = scmp.ne.s32.totalorder %s268, %s269
      %p278 = scmp.eq.s32.totalorder %s27, 0
      %p279 = por %p277, %p278
      %p280 = scmp.ne.s32.totalorder %s268, %s269
      %p281 = scmp.eq.s32.totalorder %s28, 1
      %p282 = por %p280, %p281
      %p284 = scmp.ne.s32.totalorder %s269, %s283
      %p285 = scmp.eq.s32.totalorder %s28, 0
      %p286 = por %p284, %p285
      %s288 = sadd.s32 %s287, 1
      %p291 = scmp.eq.s32.totalorder %s22, 1
      %p292 = scmp.ne.s32.totalorder %s287, %s289
      %p293 = scmp.eq.s32.totalorder %s22, 0
      %p294 = por %p292, %p293
      %p295 = scmp.ne.s32.totalorder %s287, %s289
      %p296 = scmp.eq.s32.totalorder %s27, 1
      %p297 = por %p295, %p296
      %p298 = scmp.ne.s32.totalorder %s289, %s290
      %p299 = scmp.eq.s32.totalorder %s27, 0
      %p300 = por %p298, %p299
      %p301 = scmp.ne.s32.totalorder %s289, %s290
      %p302 = scmp.eq.s32.totalorder %s28, 1
      %p303 = por %p301, %p302
      %p305 = scmp.ne.s32.totalorder %s290, %s304
      %p306 = scmp.eq.s32.totalorder %s28, 0
      %p307 = por %p305, %p306
      %s308 = ssub.s32 %s22, %s29
      %p309 = scmp.eq.s32.totalorder %s308, 0
      %s311 = sadd.s32 %s310, 1
      %s312 = scalar_select %p309, %s310, %s311
      %p315 = pneg %p309
      %p316 = scmp.eq.s32.totalorder %s22, 1
      %p317 = por %p315, %p316
      %p318 = scmp.ne.s32.totalorder %s310, %s313
      %p319 = scmp.eq.s32.totalorder %s22, 0
      %p320 = por %p318, %p319
      %p321 = scmp.ne.s32.totalorder %s310, %s313
      %p322 = scmp.eq.s32.totalorder %s27, 1
      %p323 = por %p321, %p322
      %p324 = scmp.ne.s32.totalorder %s313, %s314
      %p325 = scmp.eq.s32.totalorder %s27, 0
      %p326 = por %p324, %p325
      %p327 = scmp.ne.s32.totalorder %s313, %s314
      %p328 = scmp.eq.s32.totalorder %s28, 1
      %p329 = por %p327, %p328
      %p331 = scmp.ne.s32.totalorder %s314, %s330
      %p332 = scmp.eq.s32.totalorder %s28, 0
      %p333 = por %p331, %p332
      %p334 = scmp.le.s32.totalorder 1, %s22
      %p335 = scmp.lt.s32.totalorder %s22, 3
      %p336 = pnand %p334, %p335
      %p337 = pneg %p336
      // Predicated region
      $region9: #{yolo_forward.1} parent=5 // pred_check
        _
      $region10: #{yolo_forward.1} parent=5 // pred_check_branch
        %339 = sbr.rel (%p336) target = $region12
      $region11: #{yolo_forward.1} parent=5 // pred_region
        %s340 = ssub.s32 %s22, 1
        // Predicated region
        $region13: #{yolo_forward.1} parent=11 // pred_check
          %p341 = pneg %p69
        $region14: #{yolo_forward.1} parent=11 // pred_check_branch
          %343 = sbr.rel (%p341) target = $region16
        $region15: #{yolo_forward.1} parent=11 // pred_region
          _
        $region16: #{yolo_forward.1} parent=11 // pred_fallthru
          _
        // Predicated region
        $region17: #{yolo_forward.1} parent=11 // pred_check
          %p344 = pneg %p90
        $region18: #{yolo_forward.1} parent=11 // pred_check_branch
          %346 = sbr.rel (%p344) target = $region20
        $region19: #{yolo_forward.1} parent=11 // pred_region
          _
        $region20: #{yolo_forward.1} parent=11 // pred_fallthru
          _
        // Predicated region
        $region21: #{yolo_forward.1} parent=11 // pred_check
          %p347 = pneg %p111
        $region22: #{yolo_forward.1} parent=11 // pred_check_branch
          %349 = sbr.rel (%p347) target = $region24
        $region23: #{yolo_forward.1} parent=11 // pred_region
          _
        $region24: #{yolo_forward.1} parent=11 // pred_fallthru
          _
        // Predicated region
        $region25: #{yolo_forward.1} parent=11 // pred_check
          %p350 = pneg %p132
        $region26: #{yolo_forward.1} parent=11 // pred_check_branch
          %352 = sbr.rel (%p350) target = $region28
        $region27: #{yolo_forward.1} parent=11 // pred_region
          _
        $region28: #{yolo_forward.1} parent=11 // pred_fallthru
          _
        // Predicated region
        $region29: #{yolo_forward.1} parent=11 // pred_check
          %p353 = pneg %p153
        $region30: #{yolo_forward.1} parent=11 // pred_check_branch
          %355 = sbr.rel (%p353) target = $region32
        $region31: #{yolo_forward.1} parent=11 // pred_region
          _
        $region32: #{yolo_forward.1} parent=11 // pred_fallthru
          _
        // Predicated region
        $region33: #{yolo_forward.1} parent=11 // pred_check
          %p356 = pneg %p174
        $region34: #{yolo_forward.1} parent=11 // pred_check_branch
          %358 = sbr.rel (%p356) target = $region36
        $region35: #{yolo_forward.1} parent=11 // pred_region
          _
        $region36: #{yolo_forward.1} parent=11 // pred_fallthru
          _
        // Predicated region
        $region37: #{yolo_forward.1} parent=11 // pred_check
          %p359 = pneg %p195
        $region38: #{yolo_forward.1} parent=11 // pred_check_branch
          %361 = sbr.rel (%p359) target = $region40
        $region39: #{yolo_forward.1} parent=11 // pred_region
          _
        $region40: #{yolo_forward.1} parent=11 // pred_fallthru
          _
        // Predicated region
        $region41: #{yolo_forward.1} parent=11 // pred_check
          %p362 = pneg %p216
        $region42: #{yolo_forward.1} parent=11 // pred_check_branch
          %364 = sbr.rel (%p362) target = $region44
        $region43: #{yolo_forward.1} parent=11 // pred_region
          _
        $region44: #{yolo_forward.1} parent=11 // pred_fallthru
          _
        // Predicated region
        $region45: #{yolo_forward.1} parent=11 // pred_check
          %p365 = pneg %p237
        $region46: #{yolo_forward.1} parent=11 // pred_check_branch
          %367 = sbr.rel (%p365) target = $region48
        $region47: #{yolo_forward.1} parent=11 // pred_region
          _
        $region48: #{yolo_forward.1} parent=11 // pred_fallthru
          _
        // Predicated region
        $region49: #{yolo_forward.1} parent=11 // pred_check
          %p368 = pneg %p258
        $region50: #{yolo_forward.1} parent=11 // pred_check_branch
          %370 = sbr.rel (%p368) target = $region52
        $region51: #{yolo_forward.1} parent=11 // pred_region
          _
        $region52: #{yolo_forward.1} parent=11 // pred_fallthru
          _
        // Predicated region
        $region53: #{yolo_forward.1} parent=11 // pred_check
          %p371 = pneg %p279
        $region54: #{yolo_forward.1} parent=11 // pred_check_branch
          %373 = sbr.rel (%p371) target = $region56
        $region55: #{yolo_forward.1} parent=11 // pred_region
          _
        $region56: #{yolo_forward.1} parent=11 // pred_fallthru
          _
        // Predicated region
        $region57: #{yolo_forward.1} parent=11 // pred_check
          %p374 = pneg %p300
        $region58: #{yolo_forward.1} parent=11 // pred_check_branch
          %376 = sbr.rel (%p374) target = $region60
        $region59: #{yolo_forward.1} parent=11 // pred_region
          _
        $region60: #{yolo_forward.1} parent=11 // pred_fallthru
          _
      $region12: #{yolo_forward.1} parent=5 // pred_fallthru
        _
      %p377 = scmp.lt.s32.totalorder %s22, 2
      // Predicated region
      $region61: #{yolo_forward.1} parent=5 // pred_check
        %p378 = pneg %p377
      $region62: #{yolo_forward.1} parent=5 // pred_check_branch
        %380 = sbr.rel (%p378) target = $region64
      $region63: #{yolo_forward.1} parent=5 // pred_region
        // Predicated region
        $region65: #{yolo_forward.1} parent=63 // pred_check
          %p381 = pneg %p42
        $region66: #{yolo_forward.1} parent=63 // pred_check_branch
          %383 = sbr.rel (%p381) target = $region68
        $region67: #{yolo_forward.1} parent=63 // pred_region
          %p384 = scmp.lt.s32.totalorder %s22, 1
          %s385 = scalar_select %p384, %s22, 1
          %s386 = smul.addr %s385, 8
          %s387 = smul.addr %s386, 4
          %s388 = scalar_lea.vmem %s0, %s387
        $region68: #{yolo_forward.1} parent=63 // pred_fallthru
          _
      $region64: #{yolo_forward.1} parent=5 // pred_fallthru
        _
      %p389 = scmp.le.s32.totalorder 1, %s22
      %p390 = scmp.lt.s32.totalorder %s22, 3
      %p391 = pnand %p389, %p390
      %p392 = pneg %p391
      // Predicated region
      $region69: #{yolo_forward.1} parent=5 // pred_check
        _
      $region70: #{yolo_forward.1} parent=5 // pred_check_branch
        %394 = sbr.rel (%p391) target = $region72
      $region71: #{yolo_forward.1} parent=5 // pred_region
        %s395 = ssub.s32 %s22, 1
        %p396 = scmp.lt.s32.totalorder %s27, 1
        %s397 = scalar_select %p396, %s27, 1
        %s398 = smul.addr %s397, 8
        %s399 = smul.addr %s398, 4
        %s400 = scalar_lea.vmem %s0, %s399
        %p401 = pneg %p48
        %p402 = pneg %p45
        %p403 = pneg %p69
        %p404 = pneg %p66
        %p405 = pneg %p90
        %p406 = pneg %p87
        %p407 = pneg %p111
        %p408 = pneg %p108
        %p409 = pneg %p132
        %p410 = pneg %p129
        %p411 = pneg %p153
        %p412 = pneg %p150
        %p413 = pneg %p174
        %p414 = pneg %p171
        %p415 = pneg %p195
        %p416 = pneg %p192
        %p417 = pneg %p216
        %p418 = pneg %p213
        %p419 = pneg %p237
        %p420 = pneg %p234
        %p421 = pneg %p258
        %p422 = pneg %p255
        %p423 = pneg %p279
        %p424 = pneg %p276
        %p425 = pneg %p300
        %p426 = pneg %p297
        %p427 = pneg %p326
        %p428 = pneg %p323
        %s429 = sand.u32 %s313, 1
        %s430 = scalar_lea.sflag [#allocation3], %s429
        %s431 = sand.u32 %s313, 1
        %s432 = smul.addr %s431, 16
        %s433 = scalar_lea.vmem [#allocation2], %s432
        %p434 = scmp.lt.s32.totalorder %s27, 1
        %s435 = scalar_select %p434, %s27, 1
        %s436 = smul.addr %s435, 8
        %s437 = smul.addr %s436, 4
        %s438 = scalar_lea.vmem %s0, %s437
        %v440 = vld [vmem:[%s438] sm:$0xf]
        %v441 = vld [vmem:[%s438 + $0x4] sm:$0xf]
        %v442 = vld [vmem:[%s438 + $0x8] sm:$0xf]
        %v443 = vld [vmem:[%s438 + $0xc] sm:$0xf]
        %v444 = vld [vmem:[%s438 + $0x10] sm:$0xf]
        %v445 = vld [vmem:[%s438 + $0x14] sm:$0xf]
        %v446 = vld [vmem:[%s438 + $0x18] sm:$0xf]
        %v447 = vld [vmem:[%s438 + $0x1c] sm:$0xf]
        %v448 = vld [vmem:[%s1] sm:$0xf]
        %v449 = vld [vmem:[%s1 + $0x4] sm:$0xf]
        %v450 = vld [vmem:[%s1 + $0x8] sm:$0xf]
        %v451 = vld [vmem:[%s1 + $0xc] sm:$0xf]
        %v452 = vld [vmem:[%s1 + $0x10] sm:$0xf]
        %v453 = vld [vmem:[%s1 + $0x14] sm:$0xf]
        %v454 = vld [vmem:[%s1 + $0x18] sm:$0xf]
        %v455 = vld [vmem:[%s1 + $0x1c] sm:$0xf]
        %v456 = vld [vmem:[%s1 + $0x20] sm:$0xf]
        %v457 = vld [vmem:[%s1 + $0x24] sm:$0xf]
        %v458 = vld [vmem:[%s1 + $0x28] sm:$0xf]
        %v459 = vld [vmem:[%s1 + $0x2c] sm:$0xf]
        %v460 = vld [vmem:[%s1 + $0x30] sm:$0xf]
        %v461 = vld [vmem:[%s1 + $0x34] sm:$0xf]
        %v462 = vld [vmem:[%s1 + $0x38] sm:$0xf]
        %v463 = vld [vmem:[%s1 + $0x3c] sm:$0xf]
        %v464 = vld [vmem:[%s2] sm:$0x1]
        %v466 = vlaneseq
        %v467 = vshrl.u32 %v466, 7
        %v468 = vsub.s32 0, %v467
        %v469 = vrot.slane %v464, %v468
        %v479 = vunpack.c.l.b16 %v440
        %v480 = vunpack.c.l.b16 %v441
        %v481 = vunpack.c.l.b16 %v442
        %v482 = vunpack.c.l.b16 %v443
        %v483 = vunpack.c.l.b16 %v444
        %v484 = vunpack.c.l.b16 %v445
        %v485 = vunpack.c.l.b16 %v446
        %v486 = vunpack.c.l.b16 %v447
        %v487 = vpack.c.b16 %v480, %v479
        %v488 = vpack.c.b16 %v482, %v481
        %v489 = vpack.c.b16 %v484, %v483
        %v490 = vpack.c.b16 %v486, %v485
        %v511 = vunpack.c.l.b16 %v448
        %v512 = vunpack.c.l.b16 %v449
        %v513 = vunpack.c.l.b16 %v450
        %v514 = vunpack.c.l.b16 %v451
        %v515 = vunpack.c.l.b16 %v452
        %v516 = vunpack.c.l.b16 %v453
        %v517 = vunpack.c.l.b16 %v454
        %v518 = vunpack.c.l.b16 %v455
        %v519 = vunpack.c.l.b16 %v456
        %v520 = vunpack.c.l.b16 %v457
        %v521 = vunpack.c.l.b16 %v458
        %v522 = vunpack.c.l.b16 %v459
        %v523 = vunpack.c.l.b16 %v460
        %v524 = vunpack.c.l.b16 %v461
        %v525 = vunpack.c.l.b16 %v462
        %v526 = vunpack.c.l.b16 %v463
        %v527 = vpack.c.b16 %v512, %v511
        %v528 = vpack.c.b16 %v514, %v513
        %v529 = vpack.c.b16 %v516, %v515
        %v530 = vpack.c.b16 %v518, %v517
        %v531 = vpack.c.b16 %v520, %v519
        %v532 = vpack.c.b16 %v522, %v521
        %v533 = vpack.c.b16 %v524, %v523
        %v534 = vpack.c.b16 %v526, %v525
        %543 = vmatprep.subr.bf16.mxu0 0
        %544 = vmatpush1.bf16.msra.mxu0 %v534
        %545 = vmatprep.subr.bf16.mxu0 0
        %546 = vmatpush1.bf16.msra.mxu0 %v533
        %547 = vmatprep.subr.bf16.mxu0 0
        %548 = vmatpush1.bf16.msra.mxu0 %v532
        %549 = vmatprep.subr.bf16.mxu0 0
        %550 = vmatpush1.bf16.msra.mxu0 %v531
        %551 = vmatprep.subr.bf16.mxu0 0
        %552 = vmatpush1.bf16.msra.mxu0 %v530
        %553 = vmatprep.subr.bf16.mxu0 0
        %554 = vmatpush1.bf16.msra.mxu0 %v529
        %555 = vmatprep.subr.bf16.mxu0 0
        %556 = vmatpush1.bf16.msra.mxu0 %v528
        %557 = vmatprep.subr.bf16.mxu0 0
        %558 = vmatpush1.bf16.msra.mxu0 %v527
        %559 = vmatprep.subr.bf16.mxu0 0
        %560 = vmatpush2.bf16.msra.mxu0 0
        %561 = vmatprep.subr.bf16.mxu0 0
        %562 = vmatpush2.bf16.msra.mxu0 0
        %563 = vmatprep.subr.bf16.mxu0 0
        %564 = vmatpush2.bf16.msra.mxu0 0
        %565 = vmatprep.subr.bf16.mxu0 0
        %566 = vmatpush2.bf16.msra.mxu0 0
        %567 = vmatprep.subr.bf16.mxu0 0
        %568 = vmatpush2.bf16.msra.mxu0 0
        %569 = vmatprep.subr.bf16.mxu0 0
        %570 = vmatpush2.bf16.msra.mxu0 0
        %571 = vmatprep.subr.bf16.mxu0 0
        %572 = vmatpush2.bf16.msra.mxu0 0
        %573 = vmatprep.subr.bf16.mxu0 0
        %574 = vmatpush2.bf16.msra.mxu0 0
        %575 = vmatprep.mubr.bf16.mxu0 0
        %576 = vmatmul.mubr.bf16.gmra.mxu0 %v487
        %v577 = vpop.f32.mrf.mxu0
        %v578 = vadd.f32 %v469, %v577
        %v579 = vpop.f32.mrf.mxu0
        %v580 = vpop.f32.mrf.mxu0
        %v581 = vadd.f32 %v469, %v580
        %v582 = vpop.f32.mrf.mxu0
        %583 = vmatprep.mubr.bf16.mxu0 0
        %584 = vmatmul.mubr.bf16.gmra.mxu0 %v488
        %v585 = vpop.f32.mrf.mxu0
        %v586 = vadd.f32 %v469, %v585
        %v587 = vpop.f32.mrf.mxu0
        %v588 = vpop.f32.mrf.mxu0
        %v589 = vadd.f32 %v469, %v588
        %v590 = vpop.f32.mrf.mxu0
        %591 = vmatprep.mubr.bf16.mxu0 0
        %592 = vmatmul.mubr.bf16.gmra.mxu0 %v489
        %v593 = vpop.f32.mrf.mxu0
        %v594 = vadd.f32 %v469, %v593
        %v595 = vpop.f32.mrf.mxu0
        %v596 = vpop.f32.mrf.mxu0
        %v597 = vadd.f32 %v469, %v596
        %v598 = vpop.f32.mrf.mxu0
        %599 = vmatprep.mubr.bf16.mxu0 0
        %600 = vmatmul.mubr.bf16.gmra.mxu0 %v490
        %v601 = vpop.f32.mrf.mxu0
        %v602 = vadd.f32 %v469, %v601
        %v603 = vpop.f32.mrf.mxu0
        %v604 = vpop.f32.mrf.mxu0
        %v605 = vadd.f32 %v469, %v604
        %v606 = vpop.f32.mrf.mxu0
        %607 = vdwg.mxu0
        %v608 = vxor.u32 %v578, 2147483648
        %v609 = vxor.u32 %v581, 2147483648
        %v610 = vxor.u32 %v586, 2147483648
        %v611 = vxor.u32 %v589, 2147483648
        %v612 = vxor.u32 %v594, 2147483648
        %v613 = vxor.u32 %v597, 2147483648
        %v614 = vxor.u32 %v602, 2147483648
        %v615 = vxor.u32 %v605, 2147483648
        %v616 = vmul.f32 %v608, 1.442695
        %v617 = vpow.pop %v616
        %v618 = vmul.f32 %v609, 1.442695
        %v619 = vpow.pop %v618
        %v620 = vmul.f32 %v610, 1.442695
        %v621 = vpow.pop %v620
        %v622 = vmul.f32 %v611, 1.442695
        %v623 = vpow.pop %v622
        %v624 = vmul.f32 %v612, 1.442695
        %v625 = vpow.pop %v624
        %v626 = vmul.f32 %v613, 1.442695
        %v627 = vpow.pop %v626
        %v628 = vmul.f32 %v614, 1.442695
        %v629 = vpow.pop %v628
        %v630 = vmul.f32 %v615, 1.442695
        %v631 = vpow.pop %v630
        %v632 = vadd.f32 %v617, 1.0
        %v633 = vadd.f32 %v619, 1.0
        %v634 = vadd.f32 %v621, 1.0
        %v635 = vadd.f32 %v623, 1.0
        %v636 = vadd.f32 %v625, 1.0
        %v637 = vadd.f32 %v627, 1.0
        %v638 = vadd.f32 %v629, 1.0
        %v639 = vadd.f32 %v631, 1.0
        %v640 = vrcp.pop %v632
        %v641 = vmul.f32 1.0, %v640
        %v642 = vrcp.pop %v633
        %v643 = vmul.f32 1.0, %v642
        %v644 = vrcp.pop %v634
        %v645 = vmul.f32 1.0, %v644
        %v646 = vrcp.pop %v635
        %v647 = vmul.f32 1.0, %v646
        %v648 = vrcp.pop %v636
        %v649 = vmul.f32 1.0, %v648
        %v650 = vrcp.pop %v637
        %v651 = vmul.f32 1.0, %v650
        %v652 = vrcp.pop %v638
        %v653 = vmul.f32 1.0, %v652
        %v654 = vrcp.pop %v639
        %v655 = vmul.f32 1.0, %v654
        %v656 = vmul.f32 %v578, %v641
        %v657 = vmul.f32 %v581, %v643
        %v658 = vmul.f32 %v586, %v645
        %v659 = vmul.f32 %v589, %v647
        %v660 = vmul.f32 %v594, %v649
        %v661 = vmul.f32 %v597, %v651
        %v662 = vmul.f32 %v602, %v653
        %v663 = vmul.f32 %v605, %v655
        %v664 = vpack.c.bf16 %v657, %v656
        %v665 = vpack.c.bf16 %v659, %v658
        %v666 = vpack.c.bf16 %v661, %v660
        %v667 = vpack.c.bf16 %v663, %v662
        %v668 = vld [vmem:[%s3] sm:$0xf]
        %v669 = vld [vmem:[%s3 + $0x4] sm:$0xf]
        %v670 = vld [vmem:[%s3 + $0x8] sm:$0xf]
        %v671 = vld [vmem:[%s3 + $0xc] sm:$0xf]
        %v672 = vld [vmem:[%s3 + $0x10] sm:$0xf]
        %v673 = vld [vmem:[%s3 + $0x14] sm:$0xf]
        %v674 = vld [vmem:[%s3 + $0x18] sm:$0xf]
        %v675 = vld [vmem:[%s3 + $0x1c] sm:$0xf]
        %v676 = vld [vmem:[%s3 + $0x20] sm:$0xf]
        %v677 = vld [vmem:[%s3 + $0x24] sm:$0xf]
        %v678 = vld [vmem:[%s3 + $0x28] sm:$0xf]
        %v679 = vld [vmem:[%s3 + $0x2c] sm:$0xf]
        %v680 = vld [vmem:[%s3 + $0x30] sm:$0xf]
        %v681 = vld [vmem:[%s3 + $0x34] sm:$0xf]
        %v682 = vld [vmem:[%s3 + $0x38] sm:$0xf]
        %v683 = vld [vmem:[%s3 + $0x3c] sm:$0xf]
        %v684 = vld [vmem:[%s3 + $0x40] sm:$0xf]
        %v685 = vld [vmem:[%s3 + $0x44] sm:$0xf]
        %v704 = vunpack.c.l.b16 %v668
        %v705 = vunpack.c.l.b16 %v669
        %v706 = vunpack.c.l.b16 %v670
        %v707 = vunpack.c.l.b16 %v671
        %v708 = vunpack.c.l.b16 %v672
        %v709 = vunpack.c.l.b16 %v673
        %v710 = vunpack.c.l.b16 %v674
        %v711 = vunpack.c.l.b16 %v675
        %v712 = vunpack.c.l.b16 %v676
        %v713 = vunpack.c.l.b16 %v677
        %v714 = vunpack.c.l.b16 %v678
        %v715 = vunpack.c.l.b16 %v679
        %v716 = vunpack.c.l.b16 %v680
        %v717 = vunpack.c.l.b16 %v681
        %v718 = vunpack.c.l.b16 %v682
        %v719 = vunpack.c.l.b16 %v683
        %v720 = vunpack.c.l.b16 %v684
        %v721 = vunpack.c.l.b16 %v685
        %v722 = vpack.c.b16 %v705, %v704
        %v723 = vpack.c.b16 %v707, %v706
        %v724 = vpack.c.b16 %v709, %v708
        %v725 = vpack.c.b16 %v711, %v710
        %v726 = vpack.c.b16 %v713, %v712
        %v727 = vpack.c.b16 %v715, %v714
        %v728 = vpack.c.b16 %v717, %v716
        %v729 = vpack.c.b16 %v719, %v718
        %v730 = vpack.c.b16 %v721, %v720
        %vm731 = vcmask 523264
        %v733 = vsel %vm731, %v722, 0
        %v736 = vsel %vm731, %v723, 0
        %v739 = vsel %vm731, %v724, 0
        %v742 = vsel %vm731, %v725, 0
        %v745 = vsel %vm731, %v726, 0
        %v748 = vsel %vm731, %v727, 0
        %v751 = vsel %vm731, %v728, 0
        %v754 = vsel %vm731, %v729, 0
        %v757 = vsel %vm731, %v730, 0
        %759 = vmatprep.subr.bf16.mxu0 0
        %760 = vmatpush1.bf16.msra.mxu0 0
        %761 = vmatprep.subr.bf16.mxu0 0
        %762 = vmatpush1.bf16.msra.mxu0 0
        %763 = vmatprep.subr.bf16.mxu0 0
        %764 = vmatpush1.bf16.msra.mxu0 0
        %765 = vmatprep.subr.bf16.mxu0 0
        %766 = vmatpush1.bf16.msra.mxu0 0
        %767 = vmatprep.subr.bf16.mxu0 0
        %768 = vmatpush1.bf16.msra.mxu0 %v667
        %769 = vmatprep.subr.bf16.mxu0 0
        %770 = vmatpush1.bf16.msra.mxu0 %v666
        %771 = vmatprep.subr.bf16.mxu0 0
        %772 = vmatpush1.bf16.msra.mxu0 %v665
        %773 = vmatprep.subr.bf16.mxu0 0
        %774 = vmatpush1.bf16.msra.mxu0 %v664
        %775 = vmatprep.subr.bf16.mxu0 0
        %776 = vmatpush2.bf16.msra.mxu0 0
        %777 = vmatprep.subr.bf16.mxu0 0
        %778 = vmatpush2.bf16.msra.mxu0 0
        %779 = vmatprep.subr.bf16.mxu0 0
        %780 = vmatpush2.bf16.msra.mxu0 0
        %781 = vmatprep.subr.bf16.mxu0 0
        %782 = vmatpush2.bf16.msra.mxu0 0
        %783 = vmatprep.subr.bf16.mxu0 0
        %784 = vmatpush2.bf16.msra.mxu0 0
        %785 = vmatprep.subr.bf16.mxu0 0
        %786 = vmatpush2.bf16.msra.mxu0 0
        %787 = vmatprep.subr.bf16.mxu0 0
        %788 = vmatpush2.bf16.msra.mxu0 0
        %789 = vmatprep.subr.bf16.mxu0 0
        %790 = vmatpush2.bf16.msra.mxu0 0
        %791 = vmatprep.mubr.bf16.mxu0 0
        %792 = vmatmul.mubr.bf16.gmra.mxu0 %v733
        %v793 = vpop.f32.mrf.mxu0
        %v794 = vadd.f32 0.0, %v793
        %v795 = vpop.f32.mrf.mxu0
        %v796 = vpop.f32.mrf.mxu0
        %v797 = vadd.f32 0.0, %v796
        %v798 = vpop.f32.mrf.mxu0
        %799 = vmatprep.mubr.bf16.mxu0 0
        %800 = vmatmul.mubr.bf16.gmra.mxu0 %v736
        %v801 = vpop.f32.mrf.mxu0
        %v802 = vadd.f32 0.0, %v801
        %v803 = vpop.f32.mrf.mxu0
        %v804 = vpop.f32.mrf.mxu0
        %v805 = vadd.f32 0.0, %v804
        %v806 = vpop.f32.mrf.mxu0
        %807 = vmatprep.mubr.bf16.mxu0 0
        %808 = vmatmul.mubr.bf16.gmra.mxu0 %v739
        %v809 = vpop.f32.mrf.mxu0
        %v810 = vadd.f32 0.0, %v809
        %v811 = vpop.f32.mrf.mxu0
        %v812 = vpop.f32.mrf.mxu0
        %v813 = vadd.f32 0.0, %v812
        %v814 = vpop.f32.mrf.mxu0
        %815 = vmatprep.mubr.bf16.mxu0 0
        %816 = vmatmul.mubr.bf16.gmra.mxu0 %v742
        %v817 = vpop.f32.mrf.mxu0
        %v818 = vadd.f32 0.0, %v817
        %v819 = vpop.f32.mrf.mxu0
        %v820 = vpop.f32.mrf.mxu0
        %v821 = vadd.f32 0.0, %v820
        %v822 = vpop.f32.mrf.mxu0
        %823 = vmatprep.mubr.bf16.mxu0 0
        %824 = vmatmul.mubr.bf16.gmra.mxu0 %v745
        %v825 = vpop.f32.mrf.mxu0
        %v826 = vadd.f32 0.0, %v825
        %v827 = vpop.f32.mrf.mxu0
        %v828 = vpop.f32.mrf.mxu0
        %v829 = vadd.f32 0.0, %v828
        %v830 = vpop.f32.mrf.mxu0
        %831 = vmatprep.mubr.bf16.mxu0 0
        %832 = vmatmul.mubr.bf16.gmra.mxu0 %v748
        %v833 = vpop.f32.mrf.mxu0
        %v834 = vadd.f32 0.0, %v833
        %v835 = vpop.f32.mrf.mxu0
        %v836 = vpop.f32.mrf.mxu0
        %v837 = vadd.f32 0.0, %v836
        %v838 = vpop.f32.mrf.mxu0
        %839 = vmatprep.mubr.bf16.mxu0 0
        %840 = vmatmul.mubr.bf16.gmra.mxu0 %v751
        %v841 = vpop.f32.mrf.mxu0
        %v842 = vadd.f32 0.0, %v841
        %v843 = vpop.f32.mrf.mxu0
        %v844 = vpop.f32.mrf.mxu0
        %v845 = vadd.f32 0.0, %v844
        %v846 = vpop.f32.mrf.mxu0
        %847 = vmatprep.mubr.bf16.mxu0 0
        %848 = vmatmul.mubr.bf16.gmra.mxu0 %v754
        %v849 = vpop.f32.mrf.mxu0
        %v850 = vadd.f32 0.0, %v849
        %v851 = vpop.f32.mrf.mxu0
        %v852 = vpop.f32.mrf.mxu0
        %v853 = vadd.f32 0.0, %v852
        %v854 = vpop.f32.mrf.mxu0
        %855 = vmatprep.mubr.bf16.mxu0 0
        %856 = vmatmul.mubr.bf16.gmra.mxu0 %v757
        %v857 = vpop.f32.mrf.mxu0
        %v858 = vadd.f32 0.0, %v857
        %v859 = vpop.f32.mrf.mxu0
        %v860 = vpop.f32.mrf.mxu0
        %v861 = vadd.f32 0.0, %v860
        %v862 = vpop.f32.mrf.mxu0
        %863 = vdwg.mxu0
        %v864 = vpack.c.bf16 %v797, %v794
        %v865 = vpack.c.bf16 %v805, %v802
        %v866 = vpack.c.bf16 %v813, %v810
        %v867 = vpack.c.bf16 %v821, %v818
        %v868 = vpack.c.bf16 %v829, %v826
        %v869 = vpack.c.bf16 %v837, %v834
        %v870 = vpack.c.bf16 %v845, %v842
        %v871 = vpack.c.bf16 %v853, %v850
        %v872 = vpack.c.bf16 %v861, %v858
        %v873 = vld [vmem:[%s4] sm:$0xf]
        %v874 = vld [vmem:[%s4 + $0x4] sm:$0xf]
        %v875 = vld [vmem:[%s4 + $0x8] sm:$0xf]
        %v876 = vld [vmem:[%s4 + $0xc] sm:$0xf]
        %v877 = vld [vmem:[%s4 + $0x10] sm:$0xf]
        %v878 = vld [vmem:[%s4 + $0x14] sm:$0xf]
        %v879 = vld [vmem:[%s4 + $0x18] sm:$0xf]
        %v880 = vld [vmem:[%s4 + $0x1c] sm:$0xf]
        %v881 = vld [vmem:[%s4 + $0x20] sm:$0xf]
        %v882 = vld [vmem:[%s4 + $0x24] sm:$0xf]
        %v883 = vld [vmem:[%s4 + $0x28] sm:$0xf]
        %v884 = vld [vmem:[%s4 + $0x2c] sm:$0xf]
        %v885 = vld [vmem:[%s4 + $0x30] sm:$0xf]
        %v886 = vld [vmem:[%s4 + $0x34] sm:$0xf]
        %v887 = vld [vmem:[%s4 + $0x38] sm:$0xf]
        %v888 = vld [vmem:[%s4 + $0x3c] sm:$0xf]
        %s889 = scalar_lea.vmem %s4, 64
        %v890 = vld [vmem:[%s889] sm:$0xf]
        %v891 = vld [vmem:[%s889 + $0x4] sm:$0xf]
        %v892 = vld [vmem:[%s889 + $0x8] sm:$0xf]
        %v893 = vld [vmem:[%s889 + $0xc] sm:$0xf]
        %v894 = vld [vmem:[%s889 + $0x10] sm:$0xf]
        %v895 = vld [vmem:[%s889 + $0x14] sm:$0xf]
        %v896 = vld [vmem:[%s889 + $0x18] sm:$0xf]
        %v897 = vld [vmem:[%s889 + $0x1c] sm:$0xf]
        %v898 = vld [vmem:[%s889 + $0x20] sm:$0xf]
        %v899 = vld [vmem:[%s889 + $0x24] sm:$0xf]
        %v900 = vld [vmem:[%s889 + $0x28] sm:$0xf]
        %v901 = vld [vmem:[%s889 + $0x2c] sm:$0xf]
        %v902 = vld [vmem:[%s889 + $0x30] sm:$0xf]
        %v903 = vld [vmem:[%s889 + $0x34] sm:$0xf]
        %v904 = vld [vmem:[%s889 + $0x38] sm:$0xf]
        %v905 = vld [vmem:[%s889 + $0x3c] sm:$0xf]
        %v922 = vunpack.c.l.b16 %v890
        %v923 = vunpack.c.l.b16 %v891
        %v924 = vunpack.c.l.b16 %v892
        %v925 = vunpack.c.l.b16 %v893
        %v926 = vunpack.c.l.b16 %v894
        %v927 = vunpack.c.l.b16 %v895
        %v928 = vunpack.c.l.b16 %v896
        %v929 = vunpack.c.l.b16 %v897
        %v930 = vunpack.c.l.b16 %v898
        %v931 = vunpack.c.l.b16 %v899
        %v932 = vunpack.c.l.b16 %v900
        %v933 = vunpack.c.l.b16 %v901
        %v934 = vunpack.c.l.b16 %v902
        %v935 = vunpack.c.l.b16 %v903
        %v936 = vunpack.c.l.b16 %v904
        %v937 = vunpack.c.l.b16 %v905
        %v938 = vpack.c.b16 %v923, %v922
        %v939 = vpack.c.b16 %v925, %v924
        %v940 = vpack.c.b16 %v927, %v926
        %v941 = vpack.c.b16 %v929, %v928
        %v942 = vpack.c.b16 %v931, %v930
        %v943 = vpack.c.b16 %v933, %v932
        %v944 = vpack.c.b16 %v935, %v934
        %v945 = vpack.c.b16 %v937, %v936
        %954 = vmatprep.subr.bf16.mxu0 0
        %955 = vmatpush1.bf16.msra.mxu0 %v945
        %956 = vmatprep.subr.bf16.mxu0 0
        %957 = vmatpush1.bf16.msra.mxu0 %v944
        %958 = vmatprep.subr.bf16.mxu0 0
        %959 = vmatpush1.bf16.msra.mxu0 %v943
        %960 = vmatprep.subr.bf16.mxu0 0
        %961 = vmatpush1.bf16.msra.mxu0 %v942
        %962 = vmatprep.subr.bf16.mxu0 0
        %963 = vmatpush1.bf16.msra.mxu0 %v941
        %964 = vmatprep.subr.bf16.mxu0 0
        %965 = vmatpush1.bf16.msra.mxu0 %v940
        %966 = vmatprep.subr.bf16.mxu0 0
        %967 = vmatpush1.bf16.msra.mxu0 %v939
        %968 = vmatprep.subr.bf16.mxu0 0
        %969 = vmatpush1.bf16.msra.mxu0 %v938
        %970 = vmatprep.subr.bf16.mxu0 0
        %971 = vmatpush2.bf16.msra.mxu0 0
        %972 = vmatprep.subr.bf16.mxu0 0
        %973 = vmatpush2.bf16.msra.mxu0 0
        %974 = vmatprep.subr.bf16.mxu0 0
        %975 = vmatpush2.bf16.msra.mxu0 0
        %976 = vmatprep.subr.bf16.mxu0 0
        %977 = vmatpush2.bf16.msra.mxu0 0
        %978 = vmatprep.subr.bf16.mxu0 0
        %979 = vmatpush2.bf16.msra.mxu0 0
        %980 = vmatprep.subr.bf16.mxu0 0
        %981 = vmatpush2.bf16.msra.mxu0 0
        %982 = vmatprep.subr.bf16.mxu0 0
        %983 = vmatpush2.bf16.msra.mxu0 0
        %984 = vmatprep.subr.bf16.mxu0 0
        %985 = vmatpush2.bf16.msra.mxu0 0
        %986 = vmatprep.mubr.bf16.mxu0 0
        %987 = vmatmul.mubr.bf16.gmra.mxu0 %v865
        %v988 = vpop.f32.mrf.mxu0
        %v989 = vadd.f32 0.0, %v988
        %v990 = vpop.f32.mrf.mxu0
        %v991 = vpop.f32.mrf.mxu0
        %v992 = vadd.f32 0.0, %v991
        %v993 = vpop.f32.mrf.mxu0
        %994 = vdwg.mxu0
        %v1011 = vunpack.c.l.b16 %v873
        %v1012 = vunpack.c.l.b16 %v874
        %v1013 = vunpack.c.l.b16 %v875
        %v1014 = vunpack.c.l.b16 %v876
        %v1015 = vunpack.c.l.b16 %v877
        %v1016 = vunpack.c.l.b16 %v878
        %v1017 = vunpack.c.l.b16 %v879
        %v1018 = vunpack.c.l.b16 %v880
        %v1019 = vunpack.c.l.b16 %v881
        %v1020 = vunpack.c.l.b16 %v882
        %v1021 = vunpack.c.l.b16 %v883
        %v1022 = vunpack.c.l.b16 %v884
        %v1023 = vunpack.c.l.b16 %v885
        %v1024 = vunpack.c.l.b16 %v886
        %v1025 = vunpack.c.l.b16 %v887
        %v1026 = vunpack.c.l.b16 %v888
        %v1027 = vpack.c.b16 %v1012, %v1011
        %v1028 = vpack.c.b16 %v1014, %v1013
        %v1029 = vpack.c.b16 %v1016, %v1015
        %v1030 = vpack.c.b16 %v1018, %v1017
        %v1031 = vpack.c.b16 %v1020, %v1019
        %v1032 = vpack.c.b16 %v1022, %v1021
        %v1033 = vpack.c.b16 %v1024, %v1023
        %v1034 = vpack.c.b16 %v1026, %v1025
        %1043 = vmatprep.subr.bf16.mxu0 0
        %1044 = vmatpush1.bf16.msra.mxu0 %v1034
        %1045 = vmatprep.subr.bf16.mxu0 0
        %1046 = vmatpush1.bf16.msra.mxu0 %v1033
        %1047 = vmatprep.subr.bf16.mxu0 0
        %1048 = vmatpush1.bf16.msra.mxu0 %v1032
        %1049 = vmatprep.subr.bf16.mxu0 0
        %1050 = vmatpush1.bf16.msra.mxu0 %v1031
        %1051 = vmatprep.subr.bf16.mxu0 0
        %1052 = vmatpush1.bf16.msra.mxu0 %v1030
        %1053 = vmatprep.subr.bf16.mxu0 0
        %1054 = vmatpush1.bf16.msra.mxu0 %v1029
        %1055 = vmatprep.subr.bf16.mxu0 0
        %1056 = vmatpush1.bf16.msra.mxu0 %v1028
        %1057 = vmatprep.subr.bf16.mxu0 0
        %1058 = vmatpush1.bf16.msra.mxu0 %v1027
        %1059 = vmatprep.subr.bf16.mxu0 0
        %1060 = vmatpush2.bf16.msra.mxu0 0
        %1061 = vmatprep.subr.bf16.mxu0 0
        %1062 = vmatpush2.bf16.msra.mxu0 0
        %1063 = vmatprep.subr.bf16.mxu0 0
        %1064 = vmatpush2.bf16.msra.mxu0 0
        %1065 = vmatprep.subr.bf16.mxu0 0
        %1066 = vmatpush2.bf16.msra.mxu0 0
        %1067 = vmatprep.subr.bf16.mxu0 0
        %1068 = vmatpush2.bf16.msra.mxu0 0
        %1069 = vmatprep.subr.bf16.mxu0 0
        %1070 = vmatpush2.bf16.msra.mxu0 0
        %1071 = vmatprep.subr.bf16.mxu0 0
        %1072 = vmatpush2.bf16.msra.mxu0 0
        %1073 = vmatprep.subr.bf16.mxu0 0
        %1074 = vmatpush2.bf16.msra.mxu0 0
        %1075 = vmatprep.mubr.bf16.mxu0 0
        %1076 = vmatmul.mubr.bf16.gmra.mxu0 %v864
        %v1077 = vpop.f32.mrf.mxu0
        %v1078 = vadd.f32 %v989, %v1077
        %v1079 = vpop.f32.mrf.mxu0
        %v1080 = vpop.f32.mrf.mxu0
        %v1081 = vadd.f32 %v992, %v1080
        %v1082 = vpop.f32.mrf.mxu0
        %1083 = vdwg.mxu0
        %s1084 = scalar_lea.vmem %s4, 128
        %v1085 = vld [vmem:[%s1084] sm:$0xf]
        %v1086 = vld [vmem:[%s1084 + $0x4] sm:$0xf]
        %v1087 = vld [vmem:[%s1084 + $0x8] sm:$0xf]
        %v1088 = vld [vmem:[%s1084 + $0xc] sm:$0xf]
        %v1089 = vld [vmem:[%s1084 + $0x10] sm:$0xf]
        %v1090 = vld [vmem:[%s1084 + $0x14] sm:$0xf]
        %v1091 = vld [vmem:[%s1084 + $0x18] sm:$0xf]
        %v1092 = vld [vmem:[%s1084 + $0x1c] sm:$0xf]
        %v1093 = vld [vmem:[%s1084 + $0x20] sm:$0xf]
        %v1094 = vld [vmem:[%s1084 + $0x24] sm:$0xf]
        %v1095 = vld [vmem:[%s1084 + $0x28] sm:$0xf]
        %v1096 = vld [vmem:[%s1084 + $0x2c] sm:$0xf]
        %v1097 = vld [vmem:[%s1084 + $0x30] sm:$0xf]
        %v1098 = vld [vmem:[%s1084 + $0x34] sm:$0xf]
        %v1099 = vld [vmem:[%s1084 + $0x38] sm:$0xf]
        %v1100 = vld [vmem:[%s1084 + $0x3c] sm:$0xf]
        %v1117 = vunpack.c.l.b16 %v1085
        %v1118 = vunpack.c.l.b16 %v1086
        %v1119 = vunpack.c.l.b16 %v1087
        %v1120 = vunpack.c.l.b16 %v1088
        %v1121 = vunpack.c.l.b16 %v1089
        %v1122 = vunpack.c.l.b16 %v1090
        %v1123 = vunpack.c.l.b16 %v1091
        %v1124 = vunpack.c.l.b16 %v1092
        %v1125 = vunpack.c.l.b16 %v1093
        %v1126 = vunpack.c.l.b16 %v1094
        %v1127 = vunpack.c.l.b16 %v1095
        %v1128 = vunpack.c.l.b16 %v1096
        %v1129 = vunpack.c.l.b16 %v1097
        %v1130 = vunpack.c.l.b16 %v1098
        %v1131 = vunpack.c.l.b16 %v1099
        %v1132 = vunpack.c.l.b16 %v1100
        %v1133 = vpack.c.b16 %v1118, %v1117
        %v1134 = vpack.c.b16 %v1120, %v1119
        %v1135 = vpack.c.b16 %v1122, %v1121
        %v1136 = vpack.c.b16 %v1124, %v1123
        %v1137 = vpack.c.b16 %v1126, %v1125
        %v1138 = vpack.c.b16 %v1128, %v1127
        %v1139 = vpack.c.b16 %v1130, %v1129
        %v1140 = vpack.c.b16 %v1132, %v1131
        %1149 = vmatprep.subr.bf16.mxu0 0
        %1150 = vmatpush1.bf16.msra.mxu0 %v1140
        %1151 = vmatprep.subr.bf16.mxu0 0
        %1152 = vmatpush1.bf16.msra.mxu0 %v1139
        %1153 = vmatprep.subr.bf16.mxu0 0
        %1154 = vmatpush1.bf16.msra.mxu0 %v1138
        %1155 = vmatprep.subr.bf16.mxu0 0
        %1156 = vmatpush1.bf16.msra.mxu0 %v1137
        %1157 = vmatprep.subr.bf16.mxu0 0
        %1158 = vmatpush1.bf16.msra.mxu0 %v1136
        %1159 = vmatprep.subr.bf16.mxu0 0
        %1160 = vmatpush1.bf16.msra.mxu0 %v1135
        %1161 = vmatprep.subr.bf16.mxu0 0
        %1162 = vmatpush1.bf16.msra.mxu0 %v1134
        %1163 = vmatprep.subr.bf16.mxu0 0
        %1164 = vmatpush1.bf16.msra.mxu0 %v1133
        %1165 = vmatprep.subr.bf16.mxu0 0
        %1166 = vmatpush2.bf16.msra.mxu0 0
        %1167 = vmatprep.subr.bf16.mxu0 0
        %1168 = vmatpush2.bf16.msra.mxu0 0
        %1169 = vmatprep.subr.bf16.mxu0 0
        %1170 = vmatpush2.bf16.msra.mxu0 0
        %1171 = vmatprep.subr.bf16.mxu0 0
        %1172 = vmatpush2.bf16.msra.mxu0 0
        %1173 = vmatprep.subr.bf16.mxu0 0
        %1174 = vmatpush2.bf16.msra.mxu0 0
        %1175 = vmatprep.subr.bf16.mxu0 0
        %1176 = vmatpush2.bf16.msra.mxu0 0
        %1177 = vmatprep.subr.bf16.mxu0 0
        %1178 = vmatpush2.bf16.msra.mxu0 0
        %1179 = vmatprep.subr.bf16.mxu0 0
        %1180 = vmatpush2.bf16.msra.mxu0 0
        %1181 = vmatprep.mubr.bf16.mxu0 0
        %1182 = vmatmul.mubr.bf16.gmra.mxu0 %v866
        %v1183 = vpop.f32.mrf.mxu0
        %v1184 = vadd.f32 0.0, %v1183
        %v1185 = vpop.f32.mrf.mxu0
        %v1186 = vpop.f32.mrf.mxu0
        %v1187 = vadd.f32 0.0, %v1186
        %v1188 = vpop.f32.mrf.mxu0
        %1189 = vdwg.mxu0
        %v1190 = vadd.f32 %v1078, %v1184
        %v1191 = vadd.f32 %v1081, %v1187
        %s1192 = scalar_lea.vmem %s4, 192
        %v1193 = vld [vmem:[%s1192] sm:$0xf]
        %v1194 = vld [vmem:[%s1192 + $0x4] sm:$0xf]
        %v1195 = vld [vmem:[%s1192 + $0x8] sm:$0xf]
        %v1196 = vld [vmem:[%s1192 + $0xc] sm:$0xf]
        %v1197 = vld [vmem:[%s1192 + $0x10] sm:$0xf]
        %v1198 = vld [vmem:[%s1192 + $0x14] sm:$0xf]
        %v1199 = vld [vmem:[%s1192 + $0x18] sm:$0xf]
        %v1200 = vld [vmem:[%s1192 + $0x1c] sm:$0xf]
        %v1201 = vld [vmem:[%s1192 + $0x20] sm:$0xf]
        %v1202 = vld [vmem:[%s1192 + $0x24] sm:$0xf]
        %v1203 = vld [vmem:[%s1192 + $0x28] sm:$0xf]
        %v1204 = vld [vmem:[%s1192 + $0x2c] sm:$0xf]
        %v1205 = vld [vmem:[%s1192 + $0x30] sm:$0xf]
        %v1206 = vld [vmem:[%s1192 + $0x34] sm:$0xf]
        %v1207 = vld [vmem:[%s1192 + $0x38] sm:$0xf]
        %v1208 = vld [vmem:[%s1192 + $0x3c] sm:$0xf]
        %v1225 = vunpack.c.l.b16 %v1193
        %v1226 = vunpack.c.l.b16 %v1194
        %v1227 = vunpack.c.l.b16 %v1195
        %v1228 = vunpack.c.l.b16 %v1196
        %v1229 = vunpack.c.l.b16 %v1197
        %v1230 = vunpack.c.l.b16 %v1198
        %v1231 = vunpack.c.l.b16 %v1199
        %v1232 = vunpack.c.l.b16 %v1200
        %v1233 = vunpack.c.l.b16 %v1201
        %v1234 = vunpack.c.l.b16 %v1202
        %v1235 = vunpack.c.l.b16 %v1203
        %v1236 = vunpack.c.l.b16 %v1204
        %v1237 = vunpack.c.l.b16 %v1205
        %v1238 = vunpack.c.l.b16 %v1206
        %v1239 = vunpack.c.l.b16 %v1207
        %v1240 = vunpack.c.l.b16 %v1208
        %v1241 = vpack.c.b16 %v1226, %v1225
        %v1242 = vpack.c.b16 %v1228, %v1227
        %v1243 = vpack.c.b16 %v1230, %v1229
        %v1244 = vpack.c.b16 %v1232, %v1231
        %v1245 = vpack.c.b16 %v1234, %v1233
        %v1246 = vpack.c.b16 %v1236, %v1235
        %v1247 = vpack.c.b16 %v1238, %v1237
        %v1248 = vpack.c.b16 %v1240, %v1239
        %1257 = vmatprep.subr.bf16.mxu0 0
        %1258 = vmatpush1.bf16.msra.mxu0 %v1248
        %1259 = vmatprep.subr.bf16.mxu0 0
        %1260 = vmatpush1.bf16.msra.mxu0 %v1247
        %1261 = vmatprep.subr.bf16.mxu0 0
        %1262 = vmatpush1.bf16.msra.mxu0 %v1246
        %1263 = vmatprep.subr.bf16.mxu0 0
        %1264 = vmatpush1.bf16.msra.mxu0 %v1245
        %1265 = vmatprep.subr.bf16.mxu0 0
        %1266 = vmatpush1.bf16.msra.mxu0 %v1244
        %1267 = vmatprep.subr.bf16.mxu0 0
        %1268 = vmatpush1.bf16.msra.mxu0 %v1243
        %1269 = vmatprep.subr.bf16.mxu0 0
        %1270 = vmatpush1.bf16.msra.mxu0 %v1242
        %1271 = vmatprep.subr.bf16.mxu0 0
        %1272 = vmatpush1.bf16.msra.mxu0 %v1241
        %1273 = vmatprep.subr.bf16.mxu0 0
        %1274 = vmatpush2.bf16.msra.mxu0 0
        %1275 = vmatprep.subr.bf16.mxu0 0
        %1276 = vmatpush2.bf16.msra.mxu0 0
        %1277 = vmatprep.subr.bf16.mxu0 0
        %1278 = vmatpush2.bf16.msra.mxu0 0
        %1279 = vmatprep.subr.bf16.mxu0 0
        %1280 = vmatpush2.bf16.msra.mxu0 0
        %1281 = vmatprep.subr.bf16.mxu0 0
        %1282 = vmatpush2.bf16.msra.mxu0 0
        %1283 = vmatprep.subr.bf16.mxu0 0
        %1284 = vmatpush2.bf16.msra.mxu0 0
        %1285 = vmatprep.subr.bf16.mxu0 0
        %1286 = vmatpush2.bf16.msra.mxu0 0
        %1287 = vmatprep.subr.bf16.mxu0 0
        %1288 = vmatpush2.bf16.msra.mxu0 0
        %1289 = vmatprep.mubr.bf16.mxu0 0
        %1290 = vmatmul.mubr.bf16.gmra.mxu0 %v867
        %v1291 = vpop.f32.mrf.mxu0
        %v1292 = vadd.f32 0.0, %v1291
        %v1293 = vpop.f32.mrf.mxu0
        %v1294 = vpop.f32.mrf.mxu0
        %v1295 = vadd.f32 0.0, %v1294
        %v1296 = vpop.f32.mrf.mxu0
        %1297 = vdwg.mxu0
        %v1298 = vadd.f32 %v1190, %v1292
        %v1299 = vadd.f32 %v1191, %v1295
        %s1300 = scalar_lea.vmem %s4, 256
        %v1301 = vld [vmem:[%s1300] sm:$0xf]
        %v1302 = vld [vmem:[%s1300 + $0x4] sm:$0xf]
        %v1303 = vld [vmem:[%s1300 + $0x8] sm:$0xf]
        %v1304 = vld [vmem:[%s1300 + $0xc] sm:$0xf]
        %v1305 = vld [vmem:[%s1300 + $0x10] sm:$0xf]
        %v1306 = vld [vmem:[%s1300 + $0x14] sm:$0xf]
        %v1307 = vld [vmem:[%s1300 + $0x18] sm:$0xf]
        %v1308 = vld [vmem:[%s1300 + $0x1c] sm:$0xf]
        %v1309 = vld [vmem:[%s1300 + $0x20] sm:$0xf]
        %v1310 = vld [vmem:[%s1300 + $0x24] sm:$0xf]
        %v1311 = vld [vmem:[%s1300 + $0x28] sm:$0xf]
        %v1312 = vld [vmem:[%s1300 + $0x2c] sm:$0xf]
        %v1313 = vld [vmem:[%s1300 + $0x30] sm:$0xf]
        %v1314 = vld [vmem:[%s1300 + $0x34] sm:$0xf]
        %v1315 = vld [vmem:[%s1300 + $0x38] sm:$0xf]
        %v1316 = vld [vmem:[%s1300 + $0x3c] sm:$0xf]
        %v1333 = vunpack.c.l.b16 %v1301
        %v1334 = vunpack.c.l.b16 %v1302
        %v1335 = vunpack.c.l.b16 %v1303
        %v1336 = vunpack.c.l.b16 %v1304
        %v1337 = vunpack.c.l.b16 %v1305
        %v1338 = vunpack.c.l.b16 %v1306
        %v1339 = vunpack.c.l.b16 %v1307
        %v1340 = vunpack.c.l.b16 %v1308
        %v1341 = vunpack.c.l.b16 %v1309
        %v1342 = vunpack.c.l.b16 %v1310
        %v1343 = vunpack.c.l.b16 %v1311
        %v1344 = vunpack.c.l.b16 %v1312
        %v1345 = vunpack.c.l.b16 %v1313
        %v1346 = vunpack.c.l.b16 %v1314
        %v1347 = vunpack.c.l.b16 %v1315
        %v1348 = vunpack.c.l.b16 %v1316
        %v1349 = vpack.c.b16 %v1334, %v1333
        %v1350 = vpack.c.b16 %v1336, %v1335
        %v1351 = vpack.c.b16 %v1338, %v1337
        %v1352 = vpack.c.b16 %v1340, %v1339
        %v1353 = vpack.c.b16 %v1342, %v1341
        %v1354 = vpack.c.b16 %v1344, %v1343
        %v1355 = vpack.c.b16 %v1346, %v1345
        %v1356 = vpack.c.b16 %v1348, %v1347
        %1365 = vmatprep.subr.bf16.mxu0 0
        %1366 = vmatpush1.bf16.msra.mxu0 %v1356
        %1367 = vmatprep.subr.bf16.mxu0 0
        %1368 = vmatpush1.bf16.msra.mxu0 %v1355
        %1369 = vmatprep.subr.bf16.mxu0 0
        %1370 = vmatpush1.bf16.msra.mxu0 %v1354
        %1371 = vmatprep.subr.bf16.mxu0 0
        %1372 = vmatpush1.bf16.msra.mxu0 %v1353
        %1373 = vmatprep.subr.bf16.mxu0 0
        %1374 = vmatpush1.bf16.msra.mxu0 %v1352
        %1375 = vmatprep.subr.bf16.mxu0 0
        %1376 = vmatpush1.bf16.msra.mxu0 %v1351
        %1377 = vmatprep.subr.bf16.mxu0 0
        %1378 = vmatpush1.bf16.msra.mxu0 %v1350
        %1379 = vmatprep.subr.bf16.mxu0 0
        %1380 = vmatpush1.bf16.msra.mxu0 %v1349
        %1381 = vmatprep.subr.bf16.mxu0 0
        %1382 = vmatpush2.bf16.msra.mxu0 0
        %1383 = vmatprep.subr.bf16.mxu0 0
        %1384 = vmatpush2.bf16.msra.mxu0 0
        %1385 = vmatprep.subr.bf16.mxu0 0
        %1386 = vmatpush2.bf16.msra.mxu0 0
        %1387 = vmatprep.subr.bf16.mxu0 0
        %1388 = vmatpush2.bf16.msra.mxu0 0
        %1389 = vmatprep.subr.bf16.mxu0 0
        %1390 = vmatpush2.bf16.msra.mxu0 0
        %1391 = vmatprep.subr.bf16.mxu0 0
        %1392 = vmatpush2.bf16.msra.mxu0 0
        %1393 = vmatprep.subr.bf16.mxu0 0
        %1394 = vmatpush2.bf16.msra.mxu0 0
        %1395 = vmatprep.subr.bf16.mxu0 0
        %1396 = vmatpush2.bf16.msra.mxu0 0
        %1397 = vmatprep.mubr.bf16.mxu0 0
        %1398 = vmatmul.mubr.bf16.gmra.mxu0 %v868
        %v1399 = vpop.f32.mrf.mxu0
        %v1400 = vadd.f32 0.0, %v1399
        %v1401 = vpop.f32.mrf.mxu0
        %v1402 = vpop.f32.mrf.mxu0
        %v1403 = vadd.f32 0.0, %v1402
        %v1404 = vpop.f32.mrf.mxu0
        %1405 = vdwg.mxu0
        %v1406 = vadd.f32 %v1298, %v1400
        %v1407 = vadd.f32 %v1299, %v1403
        %s1408 = scalar_lea.vmem %s4, 320
        %v1409 = vld [vmem:[%s1408] sm:$0xf]
        %v1410 = vld [vmem:[%s1408 + $0x4] sm:$0xf]
        %v1411 = vld [vmem:[%s1408 + $0x8] sm:$0xf]
        %v1412 = vld [vmem:[%s1408 + $0xc] sm:$0xf]
        %v1413 = vld [vmem:[%s1408 + $0x10] sm:$0xf]
        %v1414 = vld [vmem:[%s1408 + $0x14] sm:$0xf]
        %v1415 = vld [vmem:[%s1408 + $0x18] sm:$0xf]
        %v1416 = vld [vmem:[%s1408 + $0x1c] sm:$0xf]
        %v1417 = vld [vmem:[%s1408 + $0x20] sm:$0xf]
        %v1418 = vld [vmem:[%s1408 + $0x24] sm:$0xf]
        %v1419 = vld [vmem:[%s1408 + $0x28] sm:$0xf]
        %v1420 = vld [vmem:[%s1408 + $0x2c] sm:$0xf]
        %v1421 = vld [vmem:[%s1408 + $0x30] sm:$0xf]
        %v1422 = vld [vmem:[%s1408 + $0x34] sm:$0xf]
        %v1423 = vld [vmem:[%s1408 + $0x38] sm:$0xf]
        %v1424 = vld [vmem:[%s1408 + $0x3c] sm:$0xf]
        %v1441 = vunpack.c.l.b16 %v1409
        %v1442 = vunpack.c.l.b16 %v1410
        %v1443 = vunpack.c.l.b16 %v1411
        %v1444 = vunpack.c.l.b16 %v1412
        %v1445 = vunpack.c.l.b16 %v1413
        %v1446 = vunpack.c.l.b16 %v1414
        %v1447 = vunpack.c.l.b16 %v1415
        %v1448 = vunpack.c.l.b16 %v1416
        %v1449 = vunpack.c.l.b16 %v1417
        %v1450 = vunpack.c.l.b16 %v1418
        %v1451 = vunpack.c.l.b16 %v1419
        %v1452 = vunpack.c.l.b16 %v1420
        %v1453 = vunpack.c.l.b16 %v1421
        %v1454 = vunpack.c.l.b16 %v1422
        %v1455 = vunpack.c.l.b16 %v1423
        %v1456 = vunpack.c.l.b16 %v1424
        %v1457 = vpack.c.b16 %v1442, %v1441
        %v1458 = vpack.c.b16 %v1444, %v1443
        %v1459 = vpack.c.b16 %v1446, %v1445
        %v1460 = vpack.c.b16 %v1448, %v1447
        %v1461 = vpack.c.b16 %v1450, %v1449
        %v1462 = vpack.c.b16 %v1452, %v1451
        %v1463 = vpack.c.b16 %v1454, %v1453
        %v1464 = vpack.c.b16 %v1456, %v1455
        %1473 = vmatprep.subr.bf16.mxu0 0
        %1474 = vmatpush1.bf16.msra.mxu0 %v1464
        %1475 = vmatprep.subr.bf16.mxu0 0
        %1476 = vmatpush1.bf16.msra.mxu0 %v1463
        %1477 = vmatprep.subr.bf16.mxu0 0
        %1478 = vmatpush1.bf16.msra.mxu0 %v1462
        %1479 = vmatprep.subr.bf16.mxu0 0
        %1480 = vmatpush1.bf16.msra.mxu0 %v1461
        %1481 = vmatprep.subr.bf16.mxu0 0
        %1482 = vmatpush1.bf16.msra.mxu0 %v1460
        %1483 = vmatprep.subr.bf16.mxu0 0
        %1484 = vmatpush1.bf16.msra.mxu0 %v1459
        %1485 = vmatprep.subr.bf16.mxu0 0
        %1486 = vmatpush1.bf16.msra.mxu0 %v1458
        %1487 = vmatprep.subr.bf16.mxu0 0
        %1488 = vmatpush1.bf16.msra.mxu0 %v1457
        %1489 = vmatprep.subr.bf16.mxu0 0
        %1490 = vmatpush2.bf16.msra.mxu0 0
        %1491 = vmatprep.subr.bf16.mxu0 0
        %1492 = vmatpush2.bf16.msra.mxu0 0
        %1493 = vmatprep.subr.bf16.mxu0 0
        %1494 = vmatpush2.bf16.msra.mxu0 0
        %1495 = vmatprep.subr.bf16.mxu0 0
        %1496 = vmatpush2.bf16.msra.mxu0 0
        %1497 = vmatprep.subr.bf16.mxu0 0
        %1498 = vmatpush2.bf16.msra.mxu0 0
        %1499 = vmatprep.subr.bf16.mxu0 0
        %1500 = vmatpush2.bf16.msra.mxu0 0
        %1501 = vmatprep.subr.bf16.mxu0 0
        %1502 = vmatpush2.bf16.msra.mxu0 0
        %1503 = vmatprep.subr.bf16.mxu0 0
        %1504 = vmatpush2.bf16.msra.mxu0 0
        %1505 = vmatprep.mubr.bf16.mxu0 0
        %1506 = vmatmul.mubr.bf16.gmra.mxu0 %v869
        %v1507 = vpop.f32.mrf.mxu0
        %v1508 = vadd.f32 0.0, %v1507
        %v1509 = vpop.f32.mrf.mxu0
        %v1510 = vpop.f32.mrf.mxu0
        %v1511 = vadd.f32 0.0, %v1510
        %v1512 = vpop.f32.mrf.mxu0
        %1513 = vdwg.mxu0
        %v1514 = vadd.f32 %v1406, %v1508
        %v1515 = vadd.f32 %v1407, %v1511
        %s1516 = scalar_lea.vmem %s4, 384
        %v1517 = vld [vmem:[%s1516] sm:$0xf]
        %v1518 = vld [vmem:[%s1516 + $0x4] sm:$0xf]
        %v1519 = vld [vmem:[%s1516 + $0x8] sm:$0xf]
        %v1520 = vld [vmem:[%s1516 + $0xc] sm:$0xf]
        %v1521 = vld [vmem:[%s1516 + $0x10] sm:$0xf]
        %v1522 = vld [vmem:[%s1516 + $0x14] sm:$0xf]
        %v1523 = vld [vmem:[%s1516 + $0x18] sm:$0xf]
        %v1524 = vld [vmem:[%s1516 + $0x1c] sm:$0xf]
        %v1525 = vld [vmem:[%s1516 + $0x20] sm:$0xf]
        %v1526 = vld [vmem:[%s1516 + $0x24] sm:$0xf]
        %v1527 = vld [vmem:[%s1516 + $0x28] sm:$0xf]
        %v1528 = vld [vmem:[%s1516 + $0x2c] sm:$0xf]
        %v1529 = vld [vmem:[%s1516 + $0x30] sm:$0xf]
        %v1530 = vld [vmem:[%s1516 + $0x34] sm:$0xf]
        %v1531 = vld [vmem:[%s1516 + $0x38] sm:$0xf]
        %v1532 = vld [vmem:[%s1516 + $0x3c] sm:$0xf]
        %v1549 = vunpack.c.l.b16 %v1517
        %v1550 = vunpack.c.l.b16 %v1518
        %v1551 = vunpack.c.l.b16 %v1519
        %v1552 = vunpack.c.l.b16 %v1520
        %v1553 = vunpack.c.l.b16 %v1521
        %v1554 = vunpack.c.l.b16 %v1522
        %v1555 = vunpack.c.l.b16 %v1523
        %v1556 = vunpack.c.l.b16 %v1524
        %v1557 = vunpack.c.l.b16 %v1525
        %v1558 = vunpack.c.l.b16 %v1526
        %v1559 = vunpack.c.l.b16 %v1527
        %v1560 = vunpack.c.l.b16 %v1528
        %v1561 = vunpack.c.l.b16 %v1529
        %v1562 = vunpack.c.l.b16 %v1530
        %v1563 = vunpack.c.l.b16 %v1531
        %v1564 = vunpack.c.l.b16 %v1532
        %v1565 = vpack.c.b16 %v1550, %v1549
        %v1566 = vpack.c.b16 %v1552, %v1551
        %v1567 = vpack.c.b16 %v1554, %v1553
        %v1568 = vpack.c.b16 %v1556, %v1555
        %v1569 = vpack.c.b16 %v1558, %v1557
        %v1570 = vpack.c.b16 %v1560, %v1559
        %v1571 = vpack.c.b16 %v1562, %v1561
        %v1572 = vpack.c.b16 %v1564, %v1563
        %1581 = vmatprep.subr.bf16.mxu0 0
        %1582 = vmatpush1.bf16.msra.mxu0 %v1572
        %1583 = vmatprep.subr.bf16.mxu0 0
        %1584 = vmatpush1.bf16.msra.mxu0 %v1571
        %1585 = vmatprep.subr.bf16.mxu0 0
        %1586 = vmatpush1.bf16.msra.mxu0 %v1570
        %1587 = vmatprep.subr.bf16.mxu0 0
        %1588 = vmatpush1.bf16.msra.mxu0 %v1569
        %1589 = vmatprep.subr.bf16.mxu0 0
        %1590 = vmatpush1.bf16.msra.mxu0 %v1568
        %1591 = vmatprep.subr.bf16.mxu0 0
        %1592 = vmatpush1.bf16.msra.mxu0 %v1567
        %1593 = vmatprep.subr.bf16.mxu0 0
        %1594 = vmatpush1.bf16.msra.mxu0 %v1566
        %1595 = vmatprep.subr.bf16.mxu0 0
        %1596 = vmatpush1.bf16.msra.mxu0 %v1565
        %1597 = vmatprep.subr.bf16.mxu0 0
        %1598 = vmatpush2.bf16.msra.mxu0 0
        %1599 = vmatprep.subr.bf16.mxu0 0
        %1600 = vmatpush2.bf16.msra.mxu0 0
        %1601 = vmatprep.subr.bf16.mxu0 0
        %1602 = vmatpush2.bf16.msra.mxu0 0
        %1603 = vmatprep.subr.bf16.mxu0 0
        %1604 = vmatpush2.bf16.msra.mxu0 0
        %1605 = vmatprep.subr.bf16.mxu0 0
        %1606 = vmatpush2.bf16.msra.mxu0 0
        %1607 = vmatprep.subr.bf16.mxu0 0
        %1608 = vmatpush2.bf16.msra.mxu0 0
        %1609 = vmatprep.subr.bf16.mxu0 0
        %1610 = vmatpush2.bf16.msra.mxu0 0
        %1611 = vmatprep.subr.bf16.mxu0 0
        %1612 = vmatpush2.bf16.msra.mxu0 0
        %1613 = vmatprep.mubr.bf16.mxu0 0
        %1614 = vmatmul.mubr.bf16.gmra.mxu0 %v870
        %v1615 = vpop.f32.mrf.mxu0
        %v1616 = vadd.f32 0.0, %v1615
        %v1617 = vpop.f32.mrf.mxu0
        %v1618 = vpop.f32.mrf.mxu0
        %v1619 = vadd.f32 0.0, %v1618
        %v1620 = vpop.f32.mrf.mxu0
        %1621 = vdwg.mxu0
        %v1622 = vadd.f32 %v1514, %v1616
        %v1623 = vadd.f32 %v1515, %v1619
        %s1624 = scalar_lea.vmem %s4, 448
        %v1625 = vld [vmem:[%s1624] sm:$0xf]
        %v1626 = vld [vmem:[%s1624 + $0x4] sm:$0xf]
        %v1627 = vld [vmem:[%s1624 + $0x8] sm:$0xf]
        %v1628 = vld [vmem:[%s1624 + $0xc] sm:$0xf]
        %v1629 = vld [vmem:[%s1624 + $0x10] sm:$0xf]
        %v1630 = vld [vmem:[%s1624 + $0x14] sm:$0xf]
        %v1631 = vld [vmem:[%s1624 + $0x18] sm:$0xf]
        %v1632 = vld [vmem:[%s1624 + $0x1c] sm:$0xf]
        %v1633 = vld [vmem:[%s1624 + $0x20] sm:$0xf]
        %v1634 = vld [vmem:[%s1624 + $0x24] sm:$0xf]
        %v1635 = vld [vmem:[%s1624 + $0x28] sm:$0xf]
        %v1636 = vld [vmem:[%s1624 + $0x2c] sm:$0xf]
        %v1637 = vld [vmem:[%s1624 + $0x30] sm:$0xf]
        %v1638 = vld [vmem:[%s1624 + $0x34] sm:$0xf]
        %v1639 = vld [vmem:[%s1624 + $0x38] sm:$0xf]
        %v1640 = vld [vmem:[%s1624 + $0x3c] sm:$0xf]
        %v1657 = vunpack.c.l.b16 %v1625
        %v1658 = vunpack.c.l.b16 %v1626
        %v1659 = vunpack.c.l.b16 %v1627
        %v1660 = vunpack.c.l.b16 %v1628
        %v1661 = vunpack.c.l.b16 %v1629
        %v1662 = vunpack.c.l.b16 %v1630
        %v1663 = vunpack.c.l.b16 %v1631
        %v1664 = vunpack.c.l.b16 %v1632
        %v1665 = vunpack.c.l.b16 %v1633
        %v1666 = vunpack.c.l.b16 %v1634
        %v1667 = vunpack.c.l.b16 %v1635
        %v1668 = vunpack.c.l.b16 %v1636
        %v1669 = vunpack.c.l.b16 %v1637
        %v1670 = vunpack.c.l.b16 %v1638
        %v1671 = vunpack.c.l.b16 %v1639
        %v1672 = vunpack.c.l.b16 %v1640
        %v1673 = vpack.c.b16 %v1658, %v1657
        %v1674 = vpack.c.b16 %v1660, %v1659
        %v1675 = vpack.c.b16 %v1662, %v1661
        %v1676 = vpack.c.b16 %v1664, %v1663
        %v1677 = vpack.c.b16 %v1666, %v1665
        %v1678 = vpack.c.b16 %v1668, %v1667
        %v1679 = vpack.c.b16 %v1670, %v1669
        %v1680 = vpack.c.b16 %v1672, %v1671
        %1689 = vmatprep.subr.bf16.mxu0 0
        %1690 = vmatpush1.bf16.msra.mxu0 %v1680
        %1691 = vmatprep.subr.bf16.mxu0 0
        %1692 = vmatpush1.bf16.msra.mxu0 %v1679
        %1693 = vmatprep.subr.bf16.mxu0 0
        %1694 = vmatpush1.bf16.msra.mxu0 %v1678
        %1695 = vmatprep.subr.bf16.mxu0 0
        %1696 = vmatpush1.bf16.msra.mxu0 %v1677
        %1697 = vmatprep.subr.bf16.mxu0 0
        %1698 = vmatpush1.bf16.msra.mxu0 %v1676
        %1699 = vmatprep.subr.bf16.mxu0 0
        %1700 = vmatpush1.bf16.msra.mxu0 %v1675
        %1701 = vmatprep.subr.bf16.mxu0 0
        %1702 = vmatpush1.bf16.msra.mxu0 %v1674
        %1703 = vmatprep.subr.bf16.mxu0 0
        %1704 = vmatpush1.bf16.msra.mxu0 %v1673
        %1705 = vmatprep.subr.bf16.mxu0 0
        %1706 = vmatpush2.bf16.msra.mxu0 0
        %1707 = vmatprep.subr.bf16.mxu0 0
        %1708 = vmatpush2.bf16.msra.mxu0 0
        %1709 = vmatprep.subr.bf16.mxu0 0
        %1710 = vmatpush2.bf16.msra.mxu0 0
        %1711 = vmatprep.subr.bf16.mxu0 0
        %1712 = vmatpush2.bf16.msra.mxu0 0
        %1713 = vmatprep.subr.bf16.mxu0 0
        %1714 = vmatpush2.bf16.msra.mxu0 0
        %1715 = vmatprep.subr.bf16.mxu0 0
        %1716 = vmatpush2.bf16.msra.mxu0 0
        %1717 = vmatprep.subr.bf16.mxu0 0
        %1718 = vmatpush2.bf16.msra.mxu0 0
        %1719 = vmatprep.subr.bf16.mxu0 0
        %1720 = vmatpush2.bf16.msra.mxu0 0
        %1721 = vmatprep.mubr.bf16.mxu0 0
        %1722 = vmatmul.mubr.bf16.gmra.mxu0 %v871
        %v1723 = vpop.f32.mrf.mxu0
        %v1724 = vadd.f32 0.0, %v1723
        %v1725 = vpop.f32.mrf.mxu0
        %v1726 = vpop.f32.mrf.mxu0
        %v1727 = vadd.f32 0.0, %v1726
        %v1728 = vpop.f32.mrf.mxu0
        %1729 = vdwg.mxu0
        %v1730 = vadd.f32 %v1622, %v1724
        %v1731 = vadd.f32 %v1623, %v1727
        %s1732 = scalar_lea.vmem %s4, 512
        %v1733 = vld [vmem:[%s1732] sm:$0xf]
        %v1734 = vld [vmem:[%s1732 + $0x4] sm:$0xf]
        %v1735 = vld [vmem:[%s1732 + $0x8] sm:$0xf]
        %v1736 = vld [vmem:[%s1732 + $0xc] sm:$0xf]
        %v1737 = vld [vmem:[%s1732 + $0x10] sm:$0xf]
        %v1738 = vld [vmem:[%s1732 + $0x14] sm:$0xf]
        %v1739 = vld [vmem:[%s1732 + $0x18] sm:$0xf]
        %v1740 = vld [vmem:[%s1732 + $0x1c] sm:$0xf]
        %v1741 = vld [vmem:[%s1732 + $0x20] sm:$0xf]
        %v1742 = vld [vmem:[%s1732 + $0x24] sm:$0xf]
        %v1743 = vld [vmem:[%s1732 + $0x28] sm:$0xf]
        %v1744 = vld [vmem:[%s1732 + $0x2c] sm:$0xf]
        %v1745 = vld [vmem:[%s1732 + $0x30] sm:$0xf]
        %v1746 = vld [vmem:[%s1732 + $0x34] sm:$0xf]
        %v1747 = vld [vmem:[%s1732 + $0x38] sm:$0xf]
        %v1748 = vld [vmem:[%s1732 + $0x3c] sm:$0xf]
        %v1765 = vunpack.c.l.b16 %v1733
        %v1766 = vunpack.c.l.b16 %v1734
        %v1767 = vunpack.c.l.b16 %v1735
        %v1768 = vunpack.c.l.b16 %v1736
        %v1769 = vunpack.c.l.b16 %v1737
        %v1770 = vunpack.c.l.b16 %v1738
        %v1771 = vunpack.c.l.b16 %v1739
        %v1772 = vunpack.c.l.b16 %v1740
        %v1773 = vunpack.c.l.b16 %v1741
        %v1774 = vunpack.c.l.b16 %v1742
        %v1775 = vunpack.c.l.b16 %v1743
        %v1776 = vunpack.c.l.b16 %v1744
        %v1777 = vunpack.c.l.b16 %v1745
        %v1778 = vunpack.c.l.b16 %v1746
        %v1779 = vunpack.c.l.b16 %v1747
        %v1780 = vunpack.c.l.b16 %v1748
        %v1781 = vpack.c.b16 %v1766, %v1765
        %v1782 = vpack.c.b16 %v1768, %v1767
        %v1783 = vpack.c.b16 %v1770, %v1769
        %v1784 = vpack.c.b16 %v1772, %v1771
        %v1785 = vpack.c.b16 %v1774, %v1773
        %v1786 = vpack.c.b16 %v1776, %v1775
        %v1787 = vpack.c.b16 %v1778, %v1777
        %v1788 = vpack.c.b16 %v1780, %v1779
        %1797 = vmatprep.subr.bf16.mxu0 0
        %1798 = vmatpush1.bf16.msra.mxu0 %v1788
        %1799 = vmatprep.subr.bf16.mxu0 0
        %1800 = vmatpush1.bf16.msra.mxu0 %v1787
        %1801 = vmatprep.subr.bf16.mxu0 0
        %1802 = vmatpush1.bf16.msra.mxu0 %v1786
        %1803 = vmatprep.subr.bf16.mxu0 0
        %1804 = vmatpush1.bf16.msra.mxu0 %v1785
        %1805 = vmatprep.subr.bf16.mxu0 0
        %1806 = vmatpush1.bf16.msra.mxu0 %v1784
        %1807 = vmatprep.subr.bf16.mxu0 0
        %1808 = vmatpush1.bf16.msra.mxu0 %v1783
        %1809 = vmatprep.subr.bf16.mxu0 0
        %1810 = vmatpush1.bf16.msra.mxu0 %v1782
        %1811 = vmatprep.subr.bf16.mxu0 0
        %1812 = vmatpush1.bf16.msra.mxu0 %v1781
        %1813 = vmatprep.subr.bf16.mxu0 0
        %1814 = vmatpush2.bf16.msra.mxu0 0
        %1815 = vmatprep.subr.bf16.mxu0 0
        %1816 = vmatpush2.bf16.msra.mxu0 0
        %1817 = vmatprep.subr.bf16.mxu0 0
        %1818 = vmatpush2.bf16.msra.mxu0 0
        %1819 = vmatprep.subr.bf16.mxu0 0
        %1820 = vmatpush2.bf16.msra.mxu0 0
        %1821 = vmatprep.subr.bf16.mxu0 0
        %1822 = vmatpush2.bf16.msra.mxu0 0
        %1823 = vmatprep.subr.bf16.mxu0 0
        %1824 = vmatpush2.bf16.msra.mxu0 0
        %1825 = vmatprep.subr.bf16.mxu0 0
        %1826 = vmatpush2.bf16.msra.mxu0 0
        %1827 = vmatprep.subr.bf16.mxu0 0
        %1828 = vmatpush2.bf16.msra.mxu0 0
        %1829 = vmatprep.mubr.bf16.mxu0 0
        %1830 = vmatmul.mubr.bf16.gmra.mxu0 %v872
        %v1831 = vpop.f32.mrf.mxu0
        %v1832 = vadd.f32 0.0, %v1831
        %v1833 = vpop.f32.mrf.mxu0
        %v1834 = vpop.f32.mrf.mxu0
        %v1835 = vadd.f32 0.0, %v1834
        %v1836 = vpop.f32.mrf.mxu0
        %1837 = vdwg.mxu0
        %v1838 = vadd.f32 %v1730, %v1832
        %v1839 = vadd.f32 %v1731, %v1835
        %v1840 = vld [vmem:[%s5] sm:$0x1]
        %v1842 = vlaneseq
        %v1843 = vshrl.u32 %v1842, 7
        %v1844 = vsub.s32 0, %v1843
        %v1845 = vrot.slane %v1840, %v1844
        %v1847 = vadd.f32 %v1838, %v1845
        %v1848 = vadd.f32 %v1839, %v1845
        %v1849 = vxor.u32 %v1847, 2147483648
        %v1850 = vxor.u32 %v1848, 2147483648
        %v1851 = vmul.f32 %v1849, 1.442695
        %v1852 = vpow.pop %v1851
        %v1853 = vmul.f32 %v1850, 1.442695
        %v1854 = vpow.pop %v1853
        %v1855 = vadd.f32 %v1852, 1.0
        %v1856 = vadd.f32 %v1854, 1.0
        %v1857 = vrcp.pop %v1855
        %v1858 = vmul.f32 1.0, %v1857
        %v1859 = vrcp.pop %v1856
        %v1860 = vmul.f32 1.0, %v1859
        %v1861 = vmul.f32 %v1847, %v1858
        %v1862 = vmul.f32 %v1848, %v1860
        %v1863 = vpack.c.bf16 %v1862, %v1861
        %v1864 = vld [vmem:[%s6] sm:$0xf]
        %v1865 = vld [vmem:[%s6 + $0x4] sm:$0xf]
        %v1866 = vld [vmem:[%s6 + $0x8] sm:$0xf]
        %v1867 = vld [vmem:[%s6 + $0xc] sm:$0xf]
        %v1868 = vld [vmem:[%s6 + $0x10] sm:$0xf]
        %v1869 = vld [vmem:[%s6 + $0x14] sm:$0xf]
        %v1870 = vld [vmem:[%s6 + $0x18] sm:$0xf]
        %v1871 = vld [vmem:[%s6 + $0x1c] sm:$0xf]
        %v1872 = vld [vmem:[%s6 + $0x20] sm:$0xf]
        %v1873 = vld [vmem:[%s6 + $0x24] sm:$0xf]
        %v1874 = vld [vmem:[%s6 + $0x28] sm:$0xf]
        %v1875 = vld [vmem:[%s6 + $0x2c] sm:$0xf]
        %v1876 = vld [vmem:[%s6 + $0x30] sm:$0xf]
        %v1877 = vld [vmem:[%s6 + $0x34] sm:$0xf]
        %v1878 = vld [vmem:[%s6 + $0x38] sm:$0xf]
        %v1879 = vld [vmem:[%s6 + $0x3c] sm:$0xf]
        %v1880 = vld [vmem:[%s7] sm:$0x1]
        %v1882 = vlaneseq
        %v1883 = vshrl.u32 %v1882, 7
        %v1884 = vsub.s32 0, %v1883
        %v1885 = vrot.slane %v1880, %v1884
        %v1903 = vunpack.c.l.b16 %v1864
        %v1904 = vunpack.c.l.b16 %v1865
        %v1905 = vunpack.c.l.b16 %v1866
        %v1906 = vunpack.c.l.b16 %v1867
        %v1907 = vunpack.c.l.b16 %v1868
        %v1908 = vunpack.c.l.b16 %v1869
        %v1909 = vunpack.c.l.b16 %v1870
        %v1910 = vunpack.c.l.b16 %v1871
        %v1911 = vunpack.c.l.b16 %v1872
        %v1912 = vunpack.c.l.b16 %v1873
        %v1913 = vunpack.c.l.b16 %v1874
        %v1914 = vunpack.c.l.b16 %v1875
        %v1915 = vunpack.c.l.b16 %v1876
        %v1916 = vunpack.c.l.b16 %v1877
        %v1917 = vunpack.c.l.b16 %v1878
        %v1918 = vunpack.c.l.b16 %v1879
        %v1919 = vpack.c.b16 %v1904, %v1903
        %v1920 = vpack.c.b16 %v1906, %v1905
        %v1921 = vpack.c.b16 %v1908, %v1907
        %v1922 = vpack.c.b16 %v1910, %v1909
        %v1923 = vpack.c.b16 %v1912, %v1911
        %v1924 = vpack.c.b16 %v1914, %v1913
        %v1925 = vpack.c.b16 %v1916, %v1915
        %v1926 = vpack.c.b16 %v1918, %v1917
        %1935 = vmatprep.subr.bf16.mxu0 0
        %1936 = vmatpush1.bf16.msra.mxu0 %v1926
        %1937 = vmatprep.subr.bf16.mxu0 0
        %1938 = vmatpush1.bf16.msra.mxu0 %v1925
        %1939 = vmatprep.subr.bf16.mxu0 0
        %1940 = vmatpush1.bf16.msra.mxu0 %v1924
        %1941 = vmatprep.subr.bf16.mxu0 0
        %1942 = vmatpush1.bf16.msra.mxu0 %v1923
        %1943 = vmatprep.subr.bf16.mxu0 0
        %1944 = vmatpush1.bf16.msra.mxu0 %v1922
        %1945 = vmatprep.subr.bf16.mxu0 0
        %1946 = vmatpush1.bf16.msra.mxu0 %v1921
        %1947 = vmatprep.subr.bf16.mxu0 0
        %1948 = vmatpush1.bf16.msra.mxu0 %v1920
        %1949 = vmatprep.subr.bf16.mxu0 0
        %1950 = vmatpush1.bf16.msra.mxu0 %v1919
        %1951 = vmatprep.subr.bf16.mxu0 0
        %1952 = vmatpush2.bf16.msra.mxu0 0
        %1953 = vmatprep.subr.bf16.mxu0 0
        %1954 = vmatpush2.bf16.msra.mxu0 0
        %1955 = vmatprep.subr.bf16.mxu0 0
        %1956 = vmatpush2.bf16.msra.mxu0 0
        %1957 = vmatprep.subr.bf16.mxu0 0
        %1958 = vmatpush2.bf16.msra.mxu0 0
        %1959 = vmatprep.subr.bf16.mxu0 0
        %1960 = vmatpush2.bf16.msra.mxu0 0
        %1961 = vmatprep.subr.bf16.mxu0 0
        %1962 = vmatpush2.bf16.msra.mxu0 0
        %1963 = vmatprep.subr.bf16.mxu0 0
        %1964 = vmatpush2.bf16.msra.mxu0 0
        %1965 = vmatprep.subr.bf16.mxu0 0
        %1966 = vmatpush2.bf16.msra.mxu0 0
        %1967 = vmatprep.mubr.bf16.mxu0 0
        %1968 = vmatmul.mubr.bf16.gmra.mxu0 %v1863
        %v1969 = vpop.f32.mrf.mxu0
        %v1970 = vadd.f32 %v1885, %v1969
        %v1971 = vpop.f32.mrf.mxu0
        %v1972 = vpop.f32.mrf.mxu0
        %v1973 = vadd.f32 %v1885, %v1972
        %v1974 = vpop.f32.mrf.mxu0
        %1975 = vdwg.mxu0
        %v1976 = vxor.u32 %v1970, 2147483648
        %v1977 = vxor.u32 %v1973, 2147483648
        %v1978 = vmul.f32 %v1976, 1.442695
        %v1979 = vpow.pop %v1978
        %v1980 = vmul.f32 %v1977, 1.442695
        %v1981 = vpow.pop %v1980
        %v1982 = vadd.f32 %v1979, 1.0
        %v1983 = vadd.f32 %v1981, 1.0
        %v1984 = vrcp.pop %v1982
        %v1985 = vmul.f32 1.0, %v1984
        %v1986 = vrcp.pop %v1983
        %v1987 = vmul.f32 1.0, %v1986
        %v1988 = vmul.f32 %v1970, %v1985
        %v1989 = vmul.f32 %v1973, %v1987
        %v1990 = vpack.c.bf16 %v1989, %v1988
        %v1991 = vld [vmem:[%s8] sm:$0xf]
        %v1992 = vld [vmem:[%s8 + $0x4] sm:$0xf]
        %v1993 = vld [vmem:[%s8 + $0x8] sm:$0xf]
        %v1994 = vld [vmem:[%s8 + $0xc] sm:$0xf]
        %v1995 = vld [vmem:[%s8 + $0x10] sm:$0xf]
        %v1996 = vld [vmem:[%s8 + $0x14] sm:$0xf]
        %v1997 = vld [vmem:[%s8 + $0x18] sm:$0xf]
        %v1998 = vld [vmem:[%s8 + $0x1c] sm:$0xf]
        %v1999 = vld [vmem:[%s8 + $0x20] sm:$0xf]
        %v2000 = vld [vmem:[%s8 + $0x24] sm:$0xf]
        %v2001 = vld [vmem:[%s8 + $0x28] sm:$0xf]
        %v2002 = vld [vmem:[%s8 + $0x2c] sm:$0xf]
        %v2003 = vld [vmem:[%s8 + $0x30] sm:$0xf]
        %v2004 = vld [vmem:[%s8 + $0x34] sm:$0xf]
        %v2005 = vld [vmem:[%s8 + $0x38] sm:$0xf]
        %v2006 = vld [vmem:[%s8 + $0x3c] sm:$0xf]
        %v2007 = vld [vmem:[%s8 + $0x40] sm:$0xf]
        %v2008 = vld [vmem:[%s8 + $0x44] sm:$0xf]
        %v2027 = vunpack.c.l.b16 %v1991
        %v2028 = vunpack.c.l.b16 %v1992
        %v2029 = vunpack.c.l.b16 %v1993
        %v2030 = vunpack.c.l.b16 %v1994
        %v2031 = vunpack.c.l.b16 %v1995
        %v2032 = vunpack.c.l.b16 %v1996
        %v2033 = vunpack.c.l.b16 %v1997
        %v2034 = vunpack.c.l.b16 %v1998
        %v2035 = vunpack.c.l.b16 %v1999
        %v2036 = vunpack.c.l.b16 %v2000
        %v2037 = vunpack.c.l.b16 %v2001
        %v2038 = vunpack.c.l.b16 %v2002
        %v2039 = vunpack.c.l.b16 %v2003
        %v2040 = vunpack.c.l.b16 %v2004
        %v2041 = vunpack.c.l.b16 %v2005
        %v2042 = vunpack.c.l.b16 %v2006
        %v2043 = vunpack.c.l.b16 %v2007
        %v2044 = vunpack.c.l.b16 %v2008
        %v2045 = vpack.c.b16 %v2028, %v2027
        %v2046 = vpack.c.b16 %v2030, %v2029
        %v2047 = vpack.c.b16 %v2032, %v2031
        %v2048 = vpack.c.b16 %v2034, %v2033
        %v2049 = vpack.c.b16 %v2036, %v2035
        %v2050 = vpack.c.b16 %v2038, %v2037
        %v2051 = vpack.c.b16 %v2040, %v2039
        %v2052 = vpack.c.b16 %v2042, %v2041
        %v2053 = vpack.c.b16 %v2044, %v2043
        %vm2054 = vcmask 130048
        %v2056 = vsel %vm2054, %v2045, 0
        %v2059 = vsel %vm2054, %v2046, 0
        %v2062 = vsel %vm2054, %v2047, 0
        %v2065 = vsel %vm2054, %v2048, 0
        %v2068 = vsel %vm2054, %v2049, 0
        %v2071 = vsel %vm2054, %v2050, 0
        %v2074 = vsel %vm2054, %v2051, 0
        %v2077 = vsel %vm2054, %v2052, 0
        %v2080 = vsel %vm2054, %v2053, 0
        %2082 = vmatprep.subr.bf16.mxu0 0
        %2083 = vmatpush1.bf16.msra.mxu0 0
        %2084 = vmatprep.subr.bf16.mxu0 0
        %2085 = vmatpush1.bf16.msra.mxu0 0
        %2086 = vmatprep.subr.bf16.mxu0 0
        %2087 = vmatpush1.bf16.msra.mxu0 0
        %2088 = vmatprep.subr.bf16.mxu0 0
        %2089 = vmatpush1.bf16.msra.mxu0 0
        %2090 = vmatprep.subr.bf16.mxu0 0
        %2091 = vmatpush1.bf16.msra.mxu0 0
        %2092 = vmatprep.subr.bf16.mxu0 0
        %2093 = vmatpush1.bf16.msra.mxu0 0
        %2094 = vmatprep.subr.bf16.mxu0 0
        %2095 = vmatpush1.bf16.msra.mxu0 0
        %2096 = vmatprep.subr.bf16.mxu0 0
        %2097 = vmatpush1.bf16.msra.mxu0 %v1990
        %2098 = vmatprep.subr.bf16.mxu0 0
        %2099 = vmatpush2.bf16.msra.mxu0 0
        %2100 = vmatprep.subr.bf16.mxu0 0
        %2101 = vmatpush2.bf16.msra.mxu0 0
        %2102 = vmatprep.subr.bf16.mxu0 0
        %2103 = vmatpush2.bf16.msra.mxu0 0
        %2104 = vmatprep.subr.bf16.mxu0 0
        %2105 = vmatpush2.bf16.msra.mxu0 0
        %2106 = vmatprep.subr.bf16.mxu0 0
        %2107 = vmatpush2.bf16.msra.mxu0 0
        %2108 = vmatprep.subr.bf16.mxu0 0
        %2109 = vmatpush2.bf16.msra.mxu0 0
        %2110 = vmatprep.subr.bf16.mxu0 0
        %2111 = vmatpush2.bf16.msra.mxu0 0
        %2112 = vmatprep.subr.bf16.mxu0 0
        %2113 = vmatpush2.bf16.msra.mxu0 0
        %2114 = vmatprep.mubr.bf16.mxu0 0
        %2115 = vmatmul.mubr.bf16.gmra.mxu0 %v2056
        %v2116 = vpop.f32.mrf.mxu0
        %v2117 = vadd.f32 0.0, %v2116
        %v2118 = vpop.f32.mrf.mxu0
        %v2119 = vpop.f32.mrf.mxu0
        %v2120 = vadd.f32 0.0, %v2119
        %v2121 = vpop.f32.mrf.mxu0
        %2122 = vmatprep.mubr.bf16.mxu0 0
        %2123 = vmatmul.mubr.bf16.gmra.mxu0 %v2059
        %v2124 = vpop.f32.mrf.mxu0
        %v2125 = vadd.f32 0.0, %v2124
        %v2126 = vpop.f32.mrf.mxu0
        %v2127 = vpop.f32.mrf.mxu0
        %v2128 = vadd.f32 0.0, %v2127
        %v2129 = vpop.f32.mrf.mxu0
        %2130 = vmatprep.mubr.bf16.mxu0 0
        %2131 = vmatmul.mubr.bf16.gmra.mxu0 %v2062
        %v2132 = vpop.f32.mrf.mxu0
        %v2133 = vadd.f32 0.0, %v2132
        %v2134 = vpop.f32.mrf.mxu0
        %v2135 = vpop.f32.mrf.mxu0
        %v2136 = vadd.f32 0.0, %v2135
        %v2137 = vpop.f32.mrf.mxu0
        %2138 = vmatprep.mubr.bf16.mxu0 0
        %2139 = vmatmul.mubr.bf16.gmra.mxu0 %v2065
        %v2140 = vpop.f32.mrf.mxu0
        %v2141 = vadd.f32 0.0, %v2140
        %v2142 = vpop.f32.mrf.mxu0
        %v2143 = vpop.f32.mrf.mxu0
        %v2144 = vadd.f32 0.0, %v2143
        %v2145 = vpop.f32.mrf.mxu0
        %2146 = vmatprep.mubr.bf16.mxu0 0
        %2147 = vmatmul.mubr.bf16.gmra.mxu0 %v2068
        %v2148 = vpop.f32.mrf.mxu0
        %v2149 = vadd.f32 0.0, %v2148
        %v2150 = vpop.f32.mrf.mxu0
        %v2151 = vpop.f32.mrf.mxu0
        %v2152 = vadd.f32 0.0, %v2151
        %v2153 = vpop.f32.mrf.mxu0
        %2154 = vmatprep.mubr.bf16.mxu0 0
        %2155 = vmatmul.mubr.bf16.gmra.mxu0 %v2071
        %v2156 = vpop.f32.mrf.mxu0
        %v2157 = vadd.f32 0.0, %v2156
        %v2158 = vpop.f32.mrf.mxu0
        %v2159 = vpop.f32.mrf.mxu0
        %v2160 = vadd.f32 0.0, %v2159
        %v2161 = vpop.f32.mrf.mxu0
        %2162 = vmatprep.mubr.bf16.mxu0 0
        %2163 = vmatmul.mubr.bf16.gmra.mxu0 %v2074
        %v2164 = vpop.f32.mrf.mxu0
        %v2165 = vadd.f32 0.0, %v2164
        %v2166 = vpop.f32.mrf.mxu0
        %v2167 = vpop.f32.mrf.mxu0
        %v2168 = vadd.f32 0.0, %v2167
        %v2169 = vpop.f32.mrf.mxu0
        %2170 = vmatprep.mubr.bf16.mxu0 0
        %2171 = vmatmul.mubr.bf16.gmra.mxu0 %v2077
        %v2172 = vpop.f32.mrf.mxu0
        %v2173 = vadd.f32 0.0, %v2172
        %v2174 = vpop.f32.mrf.mxu0
        %v2175 = vpop.f32.mrf.mxu0
        %v2176 = vadd.f32 0.0, %v2175
        %v2177 = vpop.f32.mrf.mxu0
        %2178 = vmatprep.mubr.bf16.mxu0 0
        %2179 = vmatmul.mubr.bf16.gmra.mxu0 %v2080
        %v2180 = vpop.f32.mrf.mxu0
        %v2181 = vadd.f32 0.0, %v2180
        %v2182 = vpop.f32.mrf.mxu0
        %v2183 = vpop.f32.mrf.mxu0
        %v2184 = vadd.f32 0.0, %v2183
        %v2185 = vpop.f32.mrf.mxu0
        %2186 = vdwg.mxu0
        %v2187 = vpack.c.bf16 %v2120, %v2117
        %v2188 = vpack.c.bf16 %v2128, %v2125
        %v2189 = vpack.c.bf16 %v2136, %v2133
        %v2190 = vpack.c.bf16 %v2144, %v2141
        %v2191 = vpack.c.bf16 %v2152, %v2149
        %v2192 = vpack.c.bf16 %v2160, %v2157
        %v2193 = vpack.c.bf16 %v2168, %v2165
        %v2194 = vpack.c.bf16 %v2176, %v2173
        %v2195 = vpack.c.bf16 %v2184, %v2181
        %v2196 = vld [vmem:[%s9] sm:$0xf]
        %v2197 = vld [vmem:[%s9 + $0x4] sm:$0xf]
        %v2198 = vld [vmem:[%s9 + $0x8] sm:$0xf]
        %v2199 = vld [vmem:[%s9 + $0xc] sm:$0xf]
        %v2200 = vld [vmem:[%s9 + $0x10] sm:$0xf]
        %v2201 = vld [vmem:[%s9 + $0x14] sm:$0xf]
        %v2202 = vld [vmem:[%s9 + $0x18] sm:$0xf]
        %v2203 = vld [vmem:[%s9 + $0x1c] sm:$0xf]
        %v2204 = vld [vmem:[%s9 + $0x20] sm:$0xf]
        %v2205 = vld [vmem:[%s9 + $0x24] sm:$0xf]
        %v2206 = vld [vmem:[%s9 + $0x28] sm:$0xf]
        %v2207 = vld [vmem:[%s9 + $0x2c] sm:$0xf]
        %v2208 = vld [vmem:[%s9 + $0x30] sm:$0xf]
        %v2209 = vld [vmem:[%s9 + $0x34] sm:$0xf]
        %v2210 = vld [vmem:[%s9 + $0x38] sm:$0xf]
        %v2211 = vld [vmem:[%s9 + $0x3c] sm:$0xf]
        %s2212 = scalar_lea.vmem %s9, 64
        %v2213 = vld [vmem:[%s2212] sm:$0xf]
        %v2214 = vld [vmem:[%s2212 + $0x4] sm:$0xf]
        %v2215 = vld [vmem:[%s2212 + $0x8] sm:$0xf]
        %v2216 = vld [vmem:[%s2212 + $0xc] sm:$0xf]
        %v2217 = vld [vmem:[%s2212 + $0x10] sm:$0xf]
        %v2218 = vld [vmem:[%s2212 + $0x14] sm:$0xf]
        %v2219 = vld [vmem:[%s2212 + $0x18] sm:$0xf]
        %v2220 = vld [vmem:[%s2212 + $0x1c] sm:$0xf]
        %v2221 = vld [vmem:[%s2212 + $0x20] sm:$0xf]
        %v2222 = vld [vmem:[%s2212 + $0x24] sm:$0xf]
        %v2223 = vld [vmem:[%s2212 + $0x28] sm:$0xf]
        %v2224 = vld [vmem:[%s2212 + $0x2c] sm:$0xf]
        %v2225 = vld [vmem:[%s2212 + $0x30] sm:$0xf]
        %v2226 = vld [vmem:[%s2212 + $0x34] sm:$0xf]
        %v2227 = vld [vmem:[%s2212 + $0x38] sm:$0xf]
        %v2228 = vld [vmem:[%s2212 + $0x3c] sm:$0xf]
        %v2245 = vunpack.c.l.b16 %v2213
        %v2246 = vunpack.c.l.b16 %v2214
        %v2247 = vunpack.c.l.b16 %v2215
        %v2248 = vunpack.c.l.b16 %v2216
        %v2249 = vunpack.c.l.b16 %v2217
        %v2250 = vunpack.c.l.b16 %v2218
        %v2251 = vunpack.c.l.b16 %v2219
        %v2252 = vunpack.c.l.b16 %v2220
        %v2253 = vunpack.c.l.b16 %v2221
        %v2254 = vunpack.c.l.b16 %v2222
        %v2255 = vunpack.c.l.b16 %v2223
        %v2256 = vunpack.c.l.b16 %v2224
        %v2257 = vunpack.c.l.b16 %v2225
        %v2258 = vunpack.c.l.b16 %v2226
        %v2259 = vunpack.c.l.b16 %v2227
        %v2260 = vunpack.c.l.b16 %v2228
        %v2261 = vpack.c.b16 %v2246, %v2245
        %v2262 = vpack.c.b16 %v2248, %v2247
        %v2263 = vpack.c.b16 %v2250, %v2249
        %v2264 = vpack.c.b16 %v2252, %v2251
        %v2265 = vpack.c.b16 %v2254, %v2253
        %v2266 = vpack.c.b16 %v2256, %v2255
        %v2267 = vpack.c.b16 %v2258, %v2257
        %v2268 = vpack.c.b16 %v2260, %v2259
        %2277 = vmatprep.subr.bf16.mxu0 0
        %2278 = vmatpush1.bf16.msra.mxu0 %v2268
        %2279 = vmatprep.subr.bf16.mxu0 0
        %2280 = vmatpush1.bf16.msra.mxu0 %v2267
        %2281 = vmatprep.subr.bf16.mxu0 0
        %2282 = vmatpush1.bf16.msra.mxu0 %v2266
        %2283 = vmatprep.subr.bf16.mxu0 0
        %2284 = vmatpush1.bf16.msra.mxu0 %v2265
        %2285 = vmatprep.subr.bf16.mxu0 0
        %2286 = vmatpush1.bf16.msra.mxu0 %v2264
        %2287 = vmatprep.subr.bf16.mxu0 0
        %2288 = vmatpush1.bf16.msra.mxu0 %v2263
        %2289 = vmatprep.subr.bf16.mxu0 0
        %2290 = vmatpush1.bf16.msra.mxu0 %v2262
        %2291 = vmatprep.subr.bf16.mxu0 0
        %2292 = vmatpush1.bf16.msra.mxu0 %v2261
        %2293 = vmatprep.subr.bf16.mxu0 0
        %2294 = vmatpush2.bf16.msra.mxu0 0
        %2295 = vmatprep.subr.bf16.mxu0 0
        %2296 = vmatpush2.bf16.msra.mxu0 0
        %2297 = vmatprep.subr.bf16.mxu0 0
        %2298 = vmatpush2.bf16.msra.mxu0 0
        %2299 = vmatprep.subr.bf16.mxu0 0
        %2300 = vmatpush2.bf16.msra.mxu0 0
        %2301 = vmatprep.subr.bf16.mxu0 0
        %2302 = vmatpush2.bf16.msra.mxu0 0
        %2303 = vmatprep.subr.bf16.mxu0 0
        %2304 = vmatpush2.bf16.msra.mxu0 0
        %2305 = vmatprep.subr.bf16.mxu0 0
        %2306 = vmatpush2.bf16.msra.mxu0 0
        %2307 = vmatprep.subr.bf16.mxu0 0
        %2308 = vmatpush2.bf16.msra.mxu0 0
        %2309 = vmatprep.mubr.bf16.mxu0 0
        %2310 = vmatmul.mubr.bf16.gmra.mxu0 %v2188
        %v2311 = vpop.f32.mrf.mxu0
        %v2312 = vadd.f32 0.0, %v2311
        %v2313 = vpop.f32.mrf.mxu0
        %v2314 = vpop.f32.mrf.mxu0
        %v2315 = vadd.f32 0.0, %v2314
        %v2316 = vpop.f32.mrf.mxu0
        %2317 = vdwg.mxu0
        %v2334 = vunpack.c.l.b16 %v2196
        %v2335 = vunpack.c.l.b16 %v2197
        %v2336 = vunpack.c.l.b16 %v2198
        %v2337 = vunpack.c.l.b16 %v2199
        %v2338 = vunpack.c.l.b16 %v2200
        %v2339 = vunpack.c.l.b16 %v2201
        %v2340 = vunpack.c.l.b16 %v2202
        %v2341 = vunpack.c.l.b16 %v2203
        %v2342 = vunpack.c.l.b16 %v2204
        %v2343 = vunpack.c.l.b16 %v2205
        %v2344 = vunpack.c.l.b16 %v2206
        %v2345 = vunpack.c.l.b16 %v2207
        %v2346 = vunpack.c.l.b16 %v2208
        %v2347 = vunpack.c.l.b16 %v2209
        %v2348 = vunpack.c.l.b16 %v2210
        %v2349 = vunpack.c.l.b16 %v2211
        %v2350 = vpack.c.b16 %v2335, %v2334
        %v2351 = vpack.c.b16 %v2337, %v2336
        %v2352 = vpack.c.b16 %v2339, %v2338
        %v2353 = vpack.c.b16 %v2341, %v2340
        %v2354 = vpack.c.b16 %v2343, %v2342
        %v2355 = vpack.c.b16 %v2345, %v2344
        %v2356 = vpack.c.b16 %v2347, %v2346
        %v2357 = vpack.c.b16 %v2349, %v2348
        %2366 = vmatprep.subr.bf16.mxu0 0
        %2367 = vmatpush1.bf16.msra.mxu0 %v2357
        %2368 = vmatprep.subr.bf16.mxu0 0
        %2369 = vmatpush1.bf16.msra.mxu0 %v2356
        %2370 = vmatprep.subr.bf16.mxu0 0
        %2371 = vmatpush1.bf16.msra.mxu0 %v2355
        %2372 = vmatprep.subr.bf16.mxu0 0
        %2373 = vmatpush1.bf16.msra.mxu0 %v2354
        %2374 = vmatprep.subr.bf16.mxu0 0
        %2375 = vmatpush1.bf16.msra.mxu0 %v2353
        %2376 = vmatprep.subr.bf16.mxu0 0
        %2377 = vmatpush1.bf16.msra.mxu0 %v2352
        %2378 = vmatprep.subr.bf16.mxu0 0
        %2379 = vmatpush1.bf16.msra.mxu0 %v2351
        %2380 = vmatprep.subr.bf16.mxu0 0
        %2381 = vmatpush1.bf16.msra.mxu0 %v2350
        %2382 = vmatprep.subr.bf16.mxu0 0
        %2383 = vmatpush2.bf16.msra.mxu0 0
        %2384 = vmatprep.subr.bf16.mxu0 0
        %2385 = vmatpush2.bf16.msra.mxu0 0
        %2386 = vmatprep.subr.bf16.mxu0 0
        %2387 = vmatpush2.bf16.msra.mxu0 0
        %2388 = vmatprep.subr.bf16.mxu0 0
        %2389 = vmatpush2.bf16.msra.mxu0 0
        %2390 = vmatprep.subr.bf16.mxu0 0
        %2391 = vmatpush2.bf16.msra.mxu0 0
        %2392 = vmatprep.subr.bf16.mxu0 0
        %2393 = vmatpush2.bf16.msra.mxu0 0
        %2394 = vmatprep.subr.bf16.mxu0 0
        %2395 = vmatpush2.bf16.msra.mxu0 0
        %2396 = vmatprep.subr.bf16.mxu0 0
        %2397 = vmatpush2.bf16.msra.mxu0 0
        %2398 = vmatprep.mubr.bf16.mxu0 0
        %2399 = vmatmul.mubr.bf16.gmra.mxu0 %v2187
        %v2400 = vpop.f32.mrf.mxu0
        %v2401 = vadd.f32 %v2312, %v2400
        %v2402 = vpop.f32.mrf.mxu0
        %v2403 = vpop.f32.mrf.mxu0
        %v2404 = vadd.f32 %v2315, %v2403
        %v2405 = vpop.f32.mrf.mxu0
        %2406 = vdwg.mxu0
        %s2407 = scalar_lea.vmem %s9, 128
        %v2408 = vld [vmem:[%s2407] sm:$0xf]
        %v2409 = vld [vmem:[%s2407 + $0x4] sm:$0xf]
        %v2410 = vld [vmem:[%s2407 + $0x8] sm:$0xf]
        %v2411 = vld [vmem:[%s2407 + $0xc] sm:$0xf]
        %v2412 = vld [vmem:[%s2407 + $0x10] sm:$0xf]
        %v2413 = vld [vmem:[%s2407 + $0x14] sm:$0xf]
        %v2414 = vld [vmem:[%s2407 + $0x18] sm:$0xf]
        %v2415 = vld [vmem:[%s2407 + $0x1c] sm:$0xf]
        %v2416 = vld [vmem:[%s2407 + $0x20] sm:$0xf]
        %v2417 = vld [vmem:[%s2407 + $0x24] sm:$0xf]
        %v2418 = vld [vmem:[%s2407 + $0x28] sm:$0xf]
        %v2419 = vld [vmem:[%s2407 + $0x2c] sm:$0xf]
        %v2420 = vld [vmem:[%s2407 + $0x30] sm:$0xf]
        %v2421 = vld [vmem:[%s2407 + $0x34] sm:$0xf]
        %v2422 = vld [vmem:[%s2407 + $0x38] sm:$0xf]
        %v2423 = vld [vmem:[%s2407 + $0x3c] sm:$0xf]
        %v2440 = vunpack.c.l.b16 %v2408
        %v2441 = vunpack.c.l.b16 %v2409
        %v2442 = vunpack.c.l.b16 %v2410
        %v2443 = vunpack.c.l.b16 %v2411
        %v2444 = vunpack.c.l.b16 %v2412
        %v2445 = vunpack.c.l.b16 %v2413
        %v2446 = vunpack.c.l.b16 %v2414
        %v2447 = vunpack.c.l.b16 %v2415
        %v2448 = vunpack.c.l.b16 %v2416
        %v2449 = vunpack.c.l.b16 %v2417
        %v2450 = vunpack.c.l.b16 %v2418
        %v2451 = vunpack.c.l.b16 %v2419
        %v2452 = vunpack.c.l.b16 %v2420
        %v2453 = vunpack.c.l.b16 %v2421
        %v2454 = vunpack.c.l.b16 %v2422
        %v2455 = vunpack.c.l.b16 %v2423
        %v2456 = vpack.c.b16 %v2441, %v2440
        %v2457 = vpack.c.b16 %v2443, %v2442
        %v2458 = vpack.c.b16 %v2445, %v2444
        %v2459 = vpack.c.b16 %v2447, %v2446
        %v2460 = vpack.c.b16 %v2449, %v2448
        %v2461 = vpack.c.b16 %v2451, %v2450
        %v2462 = vpack.c.b16 %v2453, %v2452
        %v2463 = vpack.c.b16 %v2455, %v2454
        %2472 = vmatprep.subr.bf16.mxu0 0
        %2473 = vmatpush1.bf16.msra.mxu0 %v2463
        %2474 = vmatprep.subr.bf16.mxu0 0
        %2475 = vmatpush1.bf16.msra.mxu0 %v2462
        %2476 = vmatprep.subr.bf16.mxu0 0
        %2477 = vmatpush1.bf16.msra.mxu0 %v2461
        %2478 = vmatprep.subr.bf16.mxu0 0
        %2479 = vmatpush1.bf16.msra.mxu0 %v2460
        %2480 = vmatprep.subr.bf16.mxu0 0
        %2481 = vmatpush1.bf16.msra.mxu0 %v2459
        %2482 = vmatprep.subr.bf16.mxu0 0
        %2483 = vmatpush1.bf16.msra.mxu0 %v2458
        %2484 = vmatprep.subr.bf16.mxu0 0
        %2485 = vmatpush1.bf16.msra.mxu0 %v2457
        %2486 = vmatprep.subr.bf16.mxu0 0
        %2487 = vmatpush1.bf16.msra.mxu0 %v2456
        %2488 = vmatprep.subr.bf16.mxu0 0
        %2489 = vmatpush2.bf16.msra.mxu0 0
        %2490 = vmatprep.subr.bf16.mxu0 0
        %2491 = vmatpush2.bf16.msra.mxu0 0
        %2492 = vmatprep.subr.bf16.mxu0 0
        %2493 = vmatpush2.bf16.msra.mxu0 0
        %2494 = vmatprep.subr.bf16.mxu0 0
        %2495 = vmatpush2.bf16.msra.mxu0 0
        %2496 = vmatprep.subr.bf16.mxu0 0
        %2497 = vmatpush2.bf16.msra.mxu0 0
        %2498 = vmatprep.subr.bf16.mxu0 0
        %2499 = vmatpush2.bf16.msra.mxu0 0
        %2500 = vmatprep.subr.bf16.mxu0 0
        %2501 = vmatpush2.bf16.msra.mxu0 0
        %2502 = vmatprep.subr.bf16.mxu0 0
        %2503 = vmatpush2.bf16.msra.mxu0 0
        %2504 = vmatprep.mubr.bf16.mxu0 0
        %2505 = vmatmul.mubr.bf16.gmra.mxu0 %v2189
        %v2506 = vpop.f32.mrf.mxu0
        %v2507 = vadd.f32 0.0, %v2506
        %v2508 = vpop.f32.mrf.mxu0
        %v2509 = vpop.f32.mrf.mxu0
        %v2510 = vadd.f32 0.0, %v2509
        %v2511 = vpop.f32.mrf.mxu0
        %2512 = vdwg.mxu0
        %v2513 = vadd.f32 %v2401, %v2507
        %v2514 = vadd.f32 %v2404, %v2510
        %s2515 = scalar_lea.vmem %s9, 192
        %v2516 = vld [vmem:[%s2515] sm:$0xf]
        %v2517 = vld [vmem:[%s2515 + $0x4] sm:$0xf]
        %v2518 = vld [vmem:[%s2515 + $0x8] sm:$0xf]
        %v2519 = vld [vmem:[%s2515 + $0xc] sm:$0xf]
        %v2520 = vld [vmem:[%s2515 + $0x10] sm:$0xf]
        %v2521 = vld [vmem:[%s2515 + $0x14] sm:$0xf]
        %v2522 = vld [vmem:[%s2515 + $0x18] sm:$0xf]
        %v2523 = vld [vmem:[%s2515 + $0x1c] sm:$0xf]
        %v2524 = vld [vmem:[%s2515 + $0x20] sm:$0xf]
        %v2525 = vld [vmem:[%s2515 + $0x24] sm:$0xf]
        %v2526 = vld [vmem:[%s2515 + $0x28] sm:$0xf]
        %v2527 = vld [vmem:[%s2515 + $0x2c] sm:$0xf]
        %v2528 = vld [vmem:[%s2515 + $0x30] sm:$0xf]
        %v2529 = vld [vmem:[%s2515 + $0x34] sm:$0xf]
        %v2530 = vld [vmem:[%s2515 + $0x38] sm:$0xf]
        %v2531 = vld [vmem:[%s2515 + $0x3c] sm:$0xf]
        %v2548 = vunpack.c.l.b16 %v2516
        %v2549 = vunpack.c.l.b16 %v2517
        %v2550 = vunpack.c.l.b16 %v2518
        %v2551 = vunpack.c.l.b16 %v2519
        %v2552 = vunpack.c.l.b16 %v2520
        %v2553 = vunpack.c.l.b16 %v2521
        %v2554 = vunpack.c.l.b16 %v2522
        %v2555 = vunpack.c.l.b16 %v2523
        %v2556 = vunpack.c.l.b16 %v2524
        %v2557 = vunpack.c.l.b16 %v2525
        %v2558 = vunpack.c.l.b16 %v2526
        %v2559 = vunpack.c.l.b16 %v2527
        %v2560 = vunpack.c.l.b16 %v2528
        %v2561 = vunpack.c.l.b16 %v2529
        %v2562 = vunpack.c.l.b16 %v2530
        %v2563 = vunpack.c.l.b16 %v2531
        %v2564 = vpack.c.b16 %v2549, %v2548
        %v2565 = vpack.c.b16 %v2551, %v2550
        %v2566 = vpack.c.b16 %v2553, %v2552
        %v2567 = vpack.c.b16 %v2555, %v2554
        %v2568 = vpack.c.b16 %v2557, %v2556
        %v2569 = vpack.c.b16 %v2559, %v2558
        %v2570 = vpack.c.b16 %v2561, %v2560
        %v2571 = vpack.c.b16 %v2563, %v2562
        %2580 = vmatprep.subr.bf16.mxu0 0
        %2581 = vmatpush1.bf16.msra.mxu0 %v2571
        %2582 = vmatprep.subr.bf16.mxu0 0
        %2583 = vmatpush1.bf16.msra.mxu0 %v2570
        %2584 = vmatprep.subr.bf16.mxu0 0
        %2585 = vmatpush1.bf16.msra.mxu0 %v2569
        %2586 = vmatprep.subr.bf16.mxu0 0
        %2587 = vmatpush1.bf16.msra.mxu0 %v2568
        %2588 = vmatprep.subr.bf16.mxu0 0
        %2589 = vmatpush1.bf16.msra.mxu0 %v2567
        %2590 = vmatprep.subr.bf16.mxu0 0
        %2591 = vmatpush1.bf16.msra.mxu0 %v2566
        %2592 = vmatprep.subr.bf16.mxu0 0
        %2593 = vmatpush1.bf16.msra.mxu0 %v2565
        %2594 = vmatprep.subr.bf16.mxu0 0
        %2595 = vmatpush1.bf16.msra.mxu0 %v2564
        %2596 = vmatprep.subr.bf16.mxu0 0
        %2597 = vmatpush2.bf16.msra.mxu0 0
        %2598 = vmatprep.subr.bf16.mxu0 0
        %2599 = vmatpush2.bf16.msra.mxu0 0
        %2600 = vmatprep.subr.bf16.mxu0 0
        %2601 = vmatpush2.bf16.msra.mxu0 0
        %2602 = vmatprep.subr.bf16.mxu0 0
        %2603 = vmatpush2.bf16.msra.mxu0 0
        %2604 = vmatprep.subr.bf16.mxu0 0
        %2605 = vmatpush2.bf16.msra.mxu0 0
        %2606 = vmatprep.subr.bf16.mxu0 0
        %2607 = vmatpush2.bf16.msra.mxu0 0
        %2608 = vmatprep.subr.bf16.mxu0 0
        %2609 = vmatpush2.bf16.msra.mxu0 0
        %2610 = vmatprep.subr.bf16.mxu0 0
        %2611 = vmatpush2.bf16.msra.mxu0 0
        %2612 = vmatprep.mubr.bf16.mxu0 0
        %2613 = vmatmul.mubr.bf16.gmra.mxu0 %v2190
        %v2614 = vpop.f32.mrf.mxu0
        %v2615 = vadd.f32 0.0, %v2614
        %v2616 = vpop.f32.mrf.mxu0
        %v2617 = vpop.f32.mrf.mxu0
        %v2618 = vadd.f32 0.0, %v2617
        %v2619 = vpop.f32.mrf.mxu0
        %2620 = vdwg.mxu0
        %v2621 = vadd.f32 %v2513, %v2615
        %v2622 = vadd.f32 %v2514, %v2618
        %s2623 = scalar_lea.vmem %s9, 256
        %v2624 = vld [vmem:[%s2623] sm:$0xf]
        %v2625 = vld [vmem:[%s2623 + $0x4] sm:$0xf]
        %v2626 = vld [vmem:[%s2623 + $0x8] sm:$0xf]
        %v2627 = vld [vmem:[%s2623 + $0xc] sm:$0xf]
        %v2628 = vld [vmem:[%s2623 + $0x10] sm:$0xf]
        %v2629 = vld [vmem:[%s2623 + $0x14] sm:$0xf]
        %v2630 = vld [vmem:[%s2623 + $0x18] sm:$0xf]
        %v2631 = vld [vmem:[%s2623 + $0x1c] sm:$0xf]
        %v2632 = vld [vmem:[%s2623 + $0x20] sm:$0xf]
        %v2633 = vld [vmem:[%s2623 + $0x24] sm:$0xf]
        %v2634 = vld [vmem:[%s2623 + $0x28] sm:$0xf]
        %v2635 = vld [vmem:[%s2623 + $0x2c] sm:$0xf]
        %v2636 = vld [vmem:[%s2623 + $0x30] sm:$0xf]
        %v2637 = vld [vmem:[%s2623 + $0x34] sm:$0xf]
        %v2638 = vld [vmem:[%s2623 + $0x38] sm:$0xf]
        %v2639 = vld [vmem:[%s2623 + $0x3c] sm:$0xf]
        %v2656 = vunpack.c.l.b16 %v2624
        %v2657 = vunpack.c.l.b16 %v2625
        %v2658 = vunpack.c.l.b16 %v2626
        %v2659 = vunpack.c.l.b16 %v2627
        %v2660 = vunpack.c.l.b16 %v2628
        %v2661 = vunpack.c.l.b16 %v2629
        %v2662 = vunpack.c.l.b16 %v2630
        %v2663 = vunpack.c.l.b16 %v2631
        %v2664 = vunpack.c.l.b16 %v2632
        %v2665 = vunpack.c.l.b16 %v2633
        %v2666 = vunpack.c.l.b16 %v2634
        %v2667 = vunpack.c.l.b16 %v2635
        %v2668 = vunpack.c.l.b16 %v2636
        %v2669 = vunpack.c.l.b16 %v2637
        %v2670 = vunpack.c.l.b16 %v2638
        %v2671 = vunpack.c.l.b16 %v2639
        %v2672 = vpack.c.b16 %v2657, %v2656
        %v2673 = vpack.c.b16 %v2659, %v2658
        %v2674 = vpack.c.b16 %v2661, %v2660
        %v2675 = vpack.c.b16 %v2663, %v2662
        %v2676 = vpack.c.b16 %v2665, %v2664
        %v2677 = vpack.c.b16 %v2667, %v2666
        %v2678 = vpack.c.b16 %v2669, %v2668
        %v2679 = vpack.c.b16 %v2671, %v2670
        %2688 = vmatprep.subr.bf16.mxu0 0
        %2689 = vmatpush1.bf16.msra.mxu0 %v2679
        %2690 = vmatprep.subr.bf16.mxu0 0
        %2691 = vmatpush1.bf16.msra.mxu0 %v2678
        %2692 = vmatprep.subr.bf16.mxu0 0
        %2693 = vmatpush1.bf16.msra.mxu0 %v2677
        %2694 = vmatprep.subr.bf16.mxu0 0
        %2695 = vmatpush1.bf16.msra.mxu0 %v2676
        %2696 = vmatprep.subr.bf16.mxu0 0
        %2697 = vmatpush1.bf16.msra.mxu0 %v2675
        %2698 = vmatprep.subr.bf16.mxu0 0
        %2699 = vmatpush1.bf16.msra.mxu0 %v2674
        %2700 = vmatprep.subr.bf16.mxu0 0
        %2701 = vmatpush1.bf16.msra.mxu0 %v2673
        %2702 = vmatprep.subr.bf16.mxu0 0
        %2703 = vmatpush1.bf16.msra.mxu0 %v2672
        %2704 = vmatprep.subr.bf16.mxu0 0
        %2705 = vmatpush2.bf16.msra.mxu0 0
        %2706 = vmatprep.subr.bf16.mxu0 0
        %2707 = vmatpush2.bf16.msra.mxu0 0
        %2708 = vmatprep.subr.bf16.mxu0 0
        %2709 = vmatpush2.bf16.msra.mxu0 0
        %2710 = vmatprep.subr.bf16.mxu0 0
        %2711 = vmatpush2.bf16.msra.mxu0 0
        %2712 = vmatprep.subr.bf16.mxu0 0
        %2713 = vmatpush2.bf16.msra.mxu0 0
        %2714 = vmatprep.subr.bf16.mxu0 0
        %2715 = vmatpush2.bf16.msra.mxu0 0
        %2716 = vmatprep.subr.bf16.mxu0 0
        %2717 = vmatpush2.bf16.msra.mxu0 0
        %2718 = vmatprep.subr.bf16.mxu0 0
        %2719 = vmatpush2.bf16.msra.mxu0 0
        %2720 = vmatprep.mubr.bf16.mxu0 0
        %2721 = vmatmul.mubr.bf16.gmra.mxu0 %v2191
        %v2722 = vpop.f32.mrf.mxu0
        %v2723 = vadd.f32 0.0, %v2722
        %v2724 = vpop.f32.mrf.mxu0
        %v2725 = vpop.f32.mrf.mxu0
        %v2726 = vadd.f32 0.0, %v2725
        %v2727 = vpop.f32.mrf.mxu0
        %2728 = vdwg.mxu0
        %v2729 = vadd.f32 %v2621, %v2723
        %v2730 = vadd.f32 %v2622, %v2726
        %s2731 = scalar_lea.vmem %s9, 320
        %v2732 = vld [vmem:[%s2731] sm:$0xf]
        %v2733 = vld [vmem:[%s2731 + $0x4] sm:$0xf]
        %v2734 = vld [vmem:[%s2731 + $0x8] sm:$0xf]
        %v2735 = vld [vmem:[%s2731 + $0xc] sm:$0xf]
        %v2736 = vld [vmem:[%s2731 + $0x10] sm:$0xf]
        %v2737 = vld [vmem:[%s2731 + $0x14] sm:$0xf]
        %v2738 = vld [vmem:[%s2731 + $0x18] sm:$0xf]
        %v2739 = vld [vmem:[%s2731 + $0x1c] sm:$0xf]
        %v2740 = vld [vmem:[%s2731 + $0x20] sm:$0xf]
        %v2741 = vld [vmem:[%s2731 + $0x24] sm:$0xf]
        %v2742 = vld [vmem:[%s2731 + $0x28] sm:$0xf]
        %v2743 = vld [vmem:[%s2731 + $0x2c] sm:$0xf]
        %v2744 = vld [vmem:[%s2731 + $0x30] sm:$0xf]
        %v2745 = vld [vmem:[%s2731 + $0x34] sm:$0xf]
        %v2746 = vld [vmem:[%s2731 + $0x38] sm:$0xf]
        %v2747 = vld [vmem:[%s2731 + $0x3c] sm:$0xf]
        %v2764 = vunpack.c.l.b16 %v2732
        %v2765 = vunpack.c.l.b16 %v2733
        %v2766 = vunpack.c.l.b16 %v2734
        %v2767 = vunpack.c.l.b16 %v2735
        %v2768 = vunpack.c.l.b16 %v2736
        %v2769 = vunpack.c.l.b16 %v2737
        %v2770 = vunpack.c.l.b16 %v2738
        %v2771 = vunpack.c.l.b16 %v2739
        %v2772 = vunpack.c.l.b16 %v2740
        %v2773 = vunpack.c.l.b16 %v2741
        %v2774 = vunpack.c.l.b16 %v2742
        %v2775 = vunpack.c.l.b16 %v2743
        %v2776 = vunpack.c.l.b16 %v2744
        %v2777 = vunpack.c.l.b16 %v2745
        %v2778 = vunpack.c.l.b16 %v2746
        %v2779 = vunpack.c.l.b16 %v2747
        %v2780 = vpack.c.b16 %v2765, %v2764
        %v2781 = vpack.c.b16 %v2767, %v2766
        %v2782 = vpack.c.b16 %v2769, %v2768
        %v2783 = vpack.c.b16 %v2771, %v2770
        %v2784 = vpack.c.b16 %v2773, %v2772
        %v2785 = vpack.c.b16 %v2775, %v2774
        %v2786 = vpack.c.b16 %v2777, %v2776
        %v2787 = vpack.c.b16 %v2779, %v2778
        %2796 = vmatprep.subr.bf16.mxu0 0
        %2797 = vmatpush1.bf16.msra.mxu0 %v2787
        %2798 = vmatprep.subr.bf16.mxu0 0
        %2799 = vmatpush1.bf16.msra.mxu0 %v2786
        %2800 = vmatprep.subr.bf16.mxu0 0
        %2801 = vmatpush1.bf16.msra.mxu0 %v2785
        %2802 = vmatprep.subr.bf16.mxu0 0
        %2803 = vmatpush1.bf16.msra.mxu0 %v2784
        %2804 = vmatprep.subr.bf16.mxu0 0
        %2805 = vmatpush1.bf16.msra.mxu0 %v2783
        %2806 = vmatprep.subr.bf16.mxu0 0
        %2807 = vmatpush1.bf16.msra.mxu0 %v2782
        %2808 = vmatprep.subr.bf16.mxu0 0
        %2809 = vmatpush1.bf16.msra.mxu0 %v2781
        %2810 = vmatprep.subr.bf16.mxu0 0
        %2811 = vmatpush1.bf16.msra.mxu0 %v2780
        %2812 = vmatprep.subr.bf16.mxu0 0
        %2813 = vmatpush2.bf16.msra.mxu0 0
        %2814 = vmatprep.subr.bf16.mxu0 0
        %2815 = vmatpush2.bf16.msra.mxu0 0
        %2816 = vmatprep.subr.bf16.mxu0 0
        %2817 = vmatpush2.bf16.msra.mxu0 0
        %2818 = vmatprep.subr.bf16.mxu0 0
        %2819 = vmatpush2.bf16.msra.mxu0 0
        %2820 = vmatprep.subr.bf16.mxu0 0
        %2821 = vmatpush2.bf16.msra.mxu0 0
        %2822 = vmatprep.subr.bf16.mxu0 0
        %2823 = vmatpush2.bf16.msra.mxu0 0
        %2824 = vmatprep.subr.bf16.mxu0 0
        %2825 = vmatpush2.bf16.msra.mxu0 0
        %2826 = vmatprep.subr.bf16.mxu0 0
        %2827 = vmatpush2.bf16.msra.mxu0 0
        %2828 = vmatprep.mubr.bf16.mxu0 0
        %2829 = vmatmul.mubr.bf16.gmra.mxu0 %v2192
        %v2830 = vpop.f32.mrf.mxu0
        %v2831 = vadd.f32 0.0, %v2830
        %v2832 = vpop.f32.mrf.mxu0
        %v2833 = vpop.f32.mrf.mxu0
        %v2834 = vadd.f32 0.0, %v2833
        %v2835 = vpop.f32.mrf.mxu0
        %2836 = vdwg.mxu0
        %v2837 = vadd.f32 %v2729, %v2831
        %v2838 = vadd.f32 %v2730, %v2834
        %s2839 = scalar_lea.vmem %s9, 384
        %v2840 = vld [vmem:[%s2839] sm:$0xf]
        %v2841 = vld [vmem:[%s2839 + $0x4] sm:$0xf]
        %v2842 = vld [vmem:[%s2839 + $0x8] sm:$0xf]
        %v2843 = vld [vmem:[%s2839 + $0xc] sm:$0xf]
        %v2844 = vld [vmem:[%s2839 + $0x10] sm:$0xf]
        %v2845 = vld [vmem:[%s2839 + $0x14] sm:$0xf]
        %v2846 = vld [vmem:[%s2839 + $0x18] sm:$0xf]
        %v2847 = vld [vmem:[%s2839 + $0x1c] sm:$0xf]
        %v2848 = vld [vmem:[%s2839 + $0x20] sm:$0xf]
        %v2849 = vld [vmem:[%s2839 + $0x24] sm:$0xf]
        %v2850 = vld [vmem:[%s2839 + $0x28] sm:$0xf]
        %v2851 = vld [vmem:[%s2839 + $0x2c] sm:$0xf]
        %v2852 = vld [vmem:[%s2839 + $0x30] sm:$0xf]
        %v2853 = vld [vmem:[%s2839 + $0x34] sm:$0xf]
        %v2854 = vld [vmem:[%s2839 + $0x38] sm:$0xf]
        %v2855 = vld [vmem:[%s2839 + $0x3c] sm:$0xf]
        %v2872 = vunpack.c.l.b16 %v2840
        %v2873 = vunpack.c.l.b16 %v2841
        %v2874 = vunpack.c.l.b16 %v2842
        %v2875 = vunpack.c.l.b16 %v2843
        %v2876 = vunpack.c.l.b16 %v2844
        %v2877 = vunpack.c.l.b16 %v2845
        %v2878 = vunpack.c.l.b16 %v2846
        %v2879 = vunpack.c.l.b16 %v2847
        %v2880 = vunpack.c.l.b16 %v2848
        %v2881 = vunpack.c.l.b16 %v2849
        %v2882 = vunpack.c.l.b16 %v2850
        %v2883 = vunpack.c.l.b16 %v2851
        %v2884 = vunpack.c.l.b16 %v2852
        %v2885 = vunpack.c.l.b16 %v2853
        %v2886 = vunpack.c.l.b16 %v2854
        %v2887 = vunpack.c.l.b16 %v2855
        %v2888 = vpack.c.b16 %v2873, %v2872
        %v2889 = vpack.c.b16 %v2875, %v2874
        %v2890 = vpack.c.b16 %v2877, %v2876
        %v2891 = vpack.c.b16 %v2879, %v2878
        %v2892 = vpack.c.b16 %v2881, %v2880
        %v2893 = vpack.c.b16 %v2883, %v2882
        %v2894 = vpack.c.b16 %v2885, %v2884
        %v2895 = vpack.c.b16 %v2887, %v2886
        %2904 = vmatprep.subr.bf16.mxu0 0
        %2905 = vmatpush1.bf16.msra.mxu0 %v2895
        %2906 = vmatprep.subr.bf16.mxu0 0
        %2907 = vmatpush1.bf16.msra.mxu0 %v2894
        %2908 = vmatprep.subr.bf16.mxu0 0
        %2909 = vmatpush1.bf16.msra.mxu0 %v2893
        %2910 = vmatprep.subr.bf16.mxu0 0
        %2911 = vmatpush1.bf16.msra.mxu0 %v2892
        %2912 = vmatprep.subr.bf16.mxu0 0
        %2913 = vmatpush1.bf16.msra.mxu0 %v2891
        %2914 = vmatprep.subr.bf16.mxu0 0
        %2915 = vmatpush1.bf16.msra.mxu0 %v2890
        %2916 = vmatprep.subr.bf16.mxu0 0
        %2917 = vmatpush1.bf16.msra.mxu0 %v2889
        %2918 = vmatprep.subr.bf16.mxu0 0
        %2919 = vmatpush1.bf16.msra.mxu0 %v2888
        %2920 = vmatprep.subr.bf16.mxu0 0
        %2921 = vmatpush2.bf16.msra.mxu0 0
        %2922 = vmatprep.subr.bf16.mxu0 0
        %2923 = vmatpush2.bf16.msra.mxu0 0
        %2924 = vmatprep.subr.bf16.mxu0 0
        %2925 = vmatpush2.bf16.msra.mxu0 0
        %2926 = vmatprep.subr.bf16.mxu0 0
        %2927 = vmatpush2.bf16.msra.mxu0 0
        %2928 = vmatprep.subr.bf16.mxu0 0
        %2929 = vmatpush2.bf16.msra.mxu0 0
        %2930 = vmatprep.subr.bf16.mxu0 0
        %2931 = vmatpush2.bf16.msra.mxu0 0
        %2932 = vmatprep.subr.bf16.mxu0 0
        %2933 = vmatpush2.bf16.msra.mxu0 0
        %2934 = vmatprep.subr.bf16.mxu0 0
        %2935 = vmatpush2.bf16.msra.mxu0 0
        %2936 = vmatprep.mubr.bf16.mxu0 0
        %2937 = vmatmul.mubr.bf16.gmra.mxu0 %v2193
        %v2938 = vpop.f32.mrf.mxu0
        %v2939 = vadd.f32 0.0, %v2938
        %v2940 = vpop.f32.mrf.mxu0
        %v2941 = vpop.f32.mrf.mxu0
        %v2942 = vadd.f32 0.0, %v2941
        %v2943 = vpop.f32.mrf.mxu0
        %2944 = vdwg.mxu0
        %v2945 = vadd.f32 %v2837, %v2939
        %v2946 = vadd.f32 %v2838, %v2942
        %s2947 = scalar_lea.vmem %s9, 448
        %v2948 = vld [vmem:[%s2947] sm:$0xf]
        %v2949 = vld [vmem:[%s2947 + $0x4] sm:$0xf]
        %v2950 = vld [vmem:[%s2947 + $0x8] sm:$0xf]
        %v2951 = vld [vmem:[%s2947 + $0xc] sm:$0xf]
        %v2952 = vld [vmem:[%s2947 + $0x10] sm:$0xf]
        %v2953 = vld [vmem:[%s2947 + $0x14] sm:$0xf]
        %v2954 = vld [vmem:[%s2947 + $0x18] sm:$0xf]
        %v2955 = vld [vmem:[%s2947 + $0x1c] sm:$0xf]
        %v2956 = vld [vmem:[%s2947 + $0x20] sm:$0xf]
        %v2957 = vld [vmem:[%s2947 + $0x24] sm:$0xf]
        %v2958 = vld [vmem:[%s2947 + $0x28] sm:$0xf]
        %v2959 = vld [vmem:[%s2947 + $0x2c] sm:$0xf]
        %v2960 = vld [vmem:[%s2947 + $0x30] sm:$0xf]
        %v2961 = vld [vmem:[%s2947 + $0x34] sm:$0xf]
        %v2962 = vld [vmem:[%s2947 + $0x38] sm:$0xf]
        %v2963 = vld [vmem:[%s2947 + $0x3c] sm:$0xf]
        %v2980 = vunpack.c.l.b16 %v2948
        %v2981 = vunpack.c.l.b16 %v2949
        %v2982 = vunpack.c.l.b16 %v2950
        %v2983 = vunpack.c.l.b16 %v2951
        %v2984 = vunpack.c.l.b16 %v2952
        %v2985 = vunpack.c.l.b16 %v2953
        %v2986 = vunpack.c.l.b16 %v2954
        %v2987 = vunpack.c.l.b16 %v2955
        %v2988 = vunpack.c.l.b16 %v2956
        %v2989 = vunpack.c.l.b16 %v2957
        %v2990 = vunpack.c.l.b16 %v2958
        %v2991 = vunpack.c.l.b16 %v2959
        %v2992 = vunpack.c.l.b16 %v2960
        %v2993 = vunpack.c.l.b16 %v2961
        %v2994 = vunpack.c.l.b16 %v2962
        %v2995 = vunpack.c.l.b16 %v2963
        %v2996 = vpack.c.b16 %v2981, %v2980
        %v2997 = vpack.c.b16 %v2983, %v2982
        %v2998 = vpack.c.b16 %v2985, %v2984
        %v2999 = vpack.c.b16 %v2987, %v2986
        %v3000 = vpack.c.b16 %v2989, %v2988
        %v3001 = vpack.c.b16 %v2991, %v2990
        %v3002 = vpack.c.b16 %v2993, %v2992
        %v3003 = vpack.c.b16 %v2995, %v2994
        %3012 = vmatprep.subr.bf16.mxu0 0
        %3013 = vmatpush1.bf16.msra.mxu0 %v3003
        %3014 = vmatprep.subr.bf16.mxu0 0
        %3015 = vmatpush1.bf16.msra.mxu0 %v3002
        %3016 = vmatprep.subr.bf16.mxu0 0
        %3017 = vmatpush1.bf16.msra.mxu0 %v3001
        %3018 = vmatprep.subr.bf16.mxu0 0
        %3019 = vmatpush1.bf16.msra.mxu0 %v3000
        %3020 = vmatprep.subr.bf16.mxu0 0
        %3021 = vmatpush1.bf16.msra.mxu0 %v2999
        %3022 = vmatprep.subr.bf16.mxu0 0
        %3023 = vmatpush1.bf16.msra.mxu0 %v2998
        %3024 = vmatprep.subr.bf16.mxu0 0
        %3025 = vmatpush1.bf16.msra.mxu0 %v2997
        %3026 = vmatprep.subr.bf16.mxu0 0
        %3027 = vmatpush1.bf16.msra.mxu0 %v2996
        %3028 = vmatprep.subr.bf16.mxu0 0
        %3029 = vmatpush2.bf16.msra.mxu0 0
        %3030 = vmatprep.subr.bf16.mxu0 0
        %3031 = vmatpush2.bf16.msra.mxu0 0
        %3032 = vmatprep.subr.bf16.mxu0 0
        %3033 = vmatpush2.bf16.msra.mxu0 0
        %3034 = vmatprep.subr.bf16.mxu0 0
        %3035 = vmatpush2.bf16.msra.mxu0 0
        %3036 = vmatprep.subr.bf16.mxu0 0
        %3037 = vmatpush2.bf16.msra.mxu0 0
        %3038 = vmatprep.subr.bf16.mxu0 0
        %3039 = vmatpush2.bf16.msra.mxu0 0
        %3040 = vmatprep.subr.bf16.mxu0 0
        %3041 = vmatpush2.bf16.msra.mxu0 0
        %3042 = vmatprep.subr.bf16.mxu0 0
        %3043 = vmatpush2.bf16.msra.mxu0 0
        %3044 = vmatprep.mubr.bf16.mxu0 0
        %3045 = vmatmul.mubr.bf16.gmra.mxu0 %v2194
        %v3046 = vpop.f32.mrf.mxu0
        %v3047 = vadd.f32 0.0, %v3046
        %v3048 = vpop.f32.mrf.mxu0
        %v3049 = vpop.f32.mrf.mxu0
        %v3050 = vadd.f32 0.0, %v3049
        %v3051 = vpop.f32.mrf.mxu0
        %3052 = vdwg.mxu0
        %v3053 = vadd.f32 %v2945, %v3047
        %v3054 = vadd.f32 %v2946, %v3050
        %s3055 = scalar_lea.vmem %s9, 512
        %v3056 = vld [vmem:[%s3055] sm:$0xf]
        %v3057 = vld [vmem:[%s3055 + $0x4] sm:$0xf]
        %v3058 = vld [vmem:[%s3055 + $0x8] sm:$0xf]
        %v3059 = vld [vmem:[%s3055 + $0xc] sm:$0xf]
        %v3060 = vld [vmem:[%s3055 + $0x10] sm:$0xf]
        %v3061 = vld [vmem:[%s3055 + $0x14] sm:$0xf]
        %v3062 = vld [vmem:[%s3055 + $0x18] sm:$0xf]
        %v3063 = vld [vmem:[%s3055 + $0x1c] sm:$0xf]
        %v3064 = vld [vmem:[%s3055 + $0x20] sm:$0xf]
        %v3065 = vld [vmem:[%s3055 + $0x24] sm:$0xf]
        %v3066 = vld [vmem:[%s3055 + $0x28] sm:$0xf]
        %v3067 = vld [vmem:[%s3055 + $0x2c] sm:$0xf]
        %v3068 = vld [vmem:[%s3055 + $0x30] sm:$0xf]
        %v3069 = vld [vmem:[%s3055 + $0x34] sm:$0xf]
        %v3070 = vld [vmem:[%s3055 + $0x38] sm:$0xf]
        %v3071 = vld [vmem:[%s3055 + $0x3c] sm:$0xf]
        %v3088 = vunpack.c.l.b16 %v3056
        %v3089 = vunpack.c.l.b16 %v3057
        %v3090 = vunpack.c.l.b16 %v3058
        %v3091 = vunpack.c.l.b16 %v3059
        %v3092 = vunpack.c.l.b16 %v3060
        %v3093 = vunpack.c.l.b16 %v3061
        %v3094 = vunpack.c.l.b16 %v3062
        %v3095 = vunpack.c.l.b16 %v3063
        %v3096 = vunpack.c.l.b16 %v3064
        %v3097 = vunpack.c.l.b16 %v3065
        %v3098 = vunpack.c.l.b16 %v3066
        %v3099 = vunpack.c.l.b16 %v3067
        %v3100 = vunpack.c.l.b16 %v3068
        %v3101 = vunpack.c.l.b16 %v3069
        %v3102 = vunpack.c.l.b16 %v3070
        %v3103 = vunpack.c.l.b16 %v3071
        %v3104 = vpack.c.b16 %v3089, %v3088
        %v3105 = vpack.c.b16 %v3091, %v3090
        %v3106 = vpack.c.b16 %v3093, %v3092
        %v3107 = vpack.c.b16 %v3095, %v3094
        %v3108 = vpack.c.b16 %v3097, %v3096
        %v3109 = vpack.c.b16 %v3099, %v3098
        %v3110 = vpack.c.b16 %v3101, %v3100
        %v3111 = vpack.c.b16 %v3103, %v3102
        %3120 = vmatprep.subr.bf16.mxu0 0
        %3121 = vmatpush1.bf16.msra.mxu0 %v3111
        %3122 = vmatprep.subr.bf16.mxu0 0
        %3123 = vmatpush1.bf16.msra.mxu0 %v3110
        %3124 = vmatprep.subr.bf16.mxu0 0
        %3125 = vmatpush1.bf16.msra.mxu0 %v3109
        %3126 = vmatprep.subr.bf16.mxu0 0
        %3127 = vmatpush1.bf16.msra.mxu0 %v3108
        %3128 = vmatprep.subr.bf16.mxu0 0
        %3129 = vmatpush1.bf16.msra.mxu0 %v3107
        %3130 = vmatprep.subr.bf16.mxu0 0
        %3131 = vmatpush1.bf16.msra.mxu0 %v3106
        %3132 = vmatprep.subr.bf16.mxu0 0
        %3133 = vmatpush1.bf16.msra.mxu0 %v3105
        %3134 = vmatprep.subr.bf16.mxu0 0
        %3135 = vmatpush1.bf16.msra.mxu0 %v3104
        %3136 = vmatprep.subr.bf16.mxu0 0
        %3137 = vmatpush2.bf16.msra.mxu0 0
        %3138 = vmatprep.subr.bf16.mxu0 0
        %3139 = vmatpush2.bf16.msra.mxu0 0
        %3140 = vmatprep.subr.bf16.mxu0 0
        %3141 = vmatpush2.bf16.msra.mxu0 0
        %3142 = vmatprep.subr.bf16.mxu0 0
        %3143 = vmatpush2.bf16.msra.mxu0 0
        %3144 = vmatprep.subr.bf16.mxu0 0
        %3145 = vmatpush2.bf16.msra.mxu0 0
        %3146 = vmatprep.subr.bf16.mxu0 0
        %3147 = vmatpush2.bf16.msra.mxu0 0
        %3148 = vmatprep.subr.bf16.mxu0 0
        %3149 = vmatpush2.bf16.msra.mxu0 0
        %3150 = vmatprep.subr.bf16.mxu0 0
        %3151 = vmatpush2.bf16.msra.mxu0 0
        %3152 = vmatprep.mubr.bf16.mxu0 0
        %3153 = vmatmul.mubr.bf16.gmra.mxu0 %v2195
        %v3154 = vpop.f32.mrf.mxu0
        %v3155 = vadd.f32 0.0, %v3154
        %v3156 = vpop.f32.mrf.mxu0
        %v3157 = vpop.f32.mrf.mxu0
        %v3158 = vadd.f32 0.0, %v3157
        %v3159 = vpop.f32.mrf.mxu0
        %3160 = vdwg.mxu0
        %v3161 = vadd.f32 %v3053, %v3155
        %v3162 = vadd.f32 %v3054, %v3158
        %v3163 = vld [vmem:[%s10] sm:$0x1]
        %v3165 = vlaneseq
        %v3166 = vshrl.u32 %v3165, 7
        %v3167 = vsub.s32 0, %v3166
        %v3168 = vrot.slane %v3163, %v3167
        %v3170 = vadd.f32 %v3161, %v3168
        %v3171 = vadd.f32 %v3162, %v3168
        %v3172 = vxor.u32 %v3170, 2147483648
        %v3173 = vxor.u32 %v3171, 2147483648
        %v3174 = vmul.f32 %v3172, 1.442695
        %v3175 = vpow.pop %v3174
        %v3176 = vmul.f32 %v3173, 1.442695
        %v3177 = vpow.pop %v3176
        %v3178 = vadd.f32 %v3175, 1.0
        %v3179 = vadd.f32 %v3177, 1.0
        %v3180 = vrcp.pop %v3178
        %v3181 = vmul.f32 1.0, %v3180
        %v3182 = vrcp.pop %v3179
        %v3183 = vmul.f32 1.0, %v3182
        %v3184 = vmul.f32 %v3170, %v3181
        %v3185 = vmul.f32 %v3171, %v3183
        %v3186 = vadd.f32 %v3184, %v1861
        %v3187 = vadd.f32 %v3185, %v1862
        %v3188 = vld [vmem:[%s11] sm:$0xff]
        %v3189 = vld [vmem:[%s11 + $0x8] sm:$0xff]
        %v3190 = vld [vmem:[%s11 + $0x10] sm:$0xff]
        %v3191 = vld [vmem:[%s11 + $0x18] sm:$0xff]
        %v3192 = vld [vmem:[%s11 + $0x20] sm:$0xff]
        %v3193 = vld [vmem:[%s11 + $0x28] sm:$0xff]
        %v3194 = vld [vmem:[%s11 + $0x30] sm:$0xff]
        %v3195 = vld [vmem:[%s11 + $0x38] sm:$0xff]
        %v3196 = vld [vmem:[%s11 + $0x40] sm:$0xff]
        %v3197 = vld [vmem:[%s11 + $0x48] sm:$0xff]
        %v3198 = vld [vmem:[%s11 + $0x50] sm:$0xff]
        %v3199 = vld [vmem:[%s11 + $0x58] sm:$0xff]
        %v3200 = vld [vmem:[%s11 + $0x60] sm:$0xff]
        %v3201 = vld [vmem:[%s11 + $0x68] sm:$0xff]
        %v3202 = vld [vmem:[%s11 + $0x70] sm:$0xff]
        %v3203 = vld [vmem:[%s11 + $0x78] sm:$0xff]
        %v3204 = vld [vmem:[%s12] sm:$0x1]
        %v3206 = vlaneseq
        %v3207 = vshrl.u32 %v3206, 7
        %v3208 = vsub.s32 0, %v3207
        %v3209 = vrot.slane %v3204, %v3208
        %3211 = vmatprep.subr.mxu0 0.0
        %3212 = vmatpush1.msra.mxu0 %v3203
        %3213 = vmatprep.subr.mxu0 0.0
        %3214 = vmatpush1.msra.mxu0 %v3202
        %3215 = vmatprep.subr.mxu0 0.0
        %3216 = vmatpush1.msra.mxu0 %v3201
        %3217 = vmatprep.subr.mxu0 0.0
        %3218 = vmatpush1.msra.mxu0 %v3200
        %3219 = vmatprep.subr.mxu0 0.0
        %3220 = vmatpush1.msra.mxu0 %v3199
        %3221 = vmatprep.subr.mxu0 0.0
        %3222 = vmatpush1.msra.mxu0 %v3198
        %3223 = vmatprep.subr.mxu0 0.0
        %3224 = vmatpush1.msra.mxu0 %v3197
        %3225 = vmatprep.subr.mxu0 0.0
        %3226 = vmatpush1.msra.mxu0 %v3196
        %3227 = vmatprep.subr.mxu0 0.0
        %3228 = vmatpush1.msra.mxu0 %v3195
        %3229 = vmatprep.subr.mxu0 0.0
        %3230 = vmatpush1.msra.mxu0 %v3194
        %3231 = vmatprep.subr.mxu0 0.0
        %3232 = vmatpush1.msra.mxu0 %v3193
        %3233 = vmatprep.subr.mxu0 0.0
        %3234 = vmatpush1.msra.mxu0 %v3192
        %3235 = vmatprep.subr.mxu0 0.0
        %3236 = vmatpush1.msra.mxu0 %v3191
        %3237 = vmatprep.subr.mxu0 0.0
        %3238 = vmatpush1.msra.mxu0 %v3190
        %3239 = vmatprep.subr.mxu0 0.0
        %3240 = vmatpush1.msra.mxu0 %v3189
        %3241 = vmatprep.subr.mxu0 0.0
        %3242 = vmatpush1.msra.mxu0 %v3188
        %3243 = vmatprep.subr.mxu0 0.0
        %3244 = vmatpush2.msra.mxu0 0.0
        %3245 = vmatprep.subr.mxu0 0.0
        %3246 = vmatpush2.msra.mxu0 0.0
        %3247 = vmatprep.subr.mxu0 0.0
        %3248 = vmatpush2.msra.mxu0 0.0
        %3249 = vmatprep.subr.mxu0 0.0
        %3250 = vmatpush2.msra.mxu0 0.0
        %3251 = vmatprep.subr.mxu0 0.0
        %3252 = vmatpush2.msra.mxu0 0.0
        %3253 = vmatprep.subr.mxu0 0.0
        %3254 = vmatpush2.msra.mxu0 0.0
        %3255 = vmatprep.subr.mxu0 0.0
        %3256 = vmatpush2.msra.mxu0 0.0
        %3257 = vmatprep.subr.mxu0 0.0
        %3258 = vmatpush2.msra.mxu0 0.0
        %3259 = vmatprep.subr.mxu0 0.0
        %3260 = vmatpush2.msra.mxu0 0.0
        %3261 = vmatprep.subr.mxu0 0.0
        %3262 = vmatpush2.msra.mxu0 0.0
        %3263 = vmatprep.subr.mxu0 0.0
        %3264 = vmatpush2.msra.mxu0 0.0
        %3265 = vmatprep.subr.mxu0 0.0
        %3266 = vmatpush2.msra.mxu0 0.0
        %3267 = vmatprep.subr.mxu0 0.0
        %3268 = vmatpush2.msra.mxu0 0.0
        %3269 = vmatprep.subr.mxu0 0.0
        %3270 = vmatpush2.msra.mxu0 0.0
        %3271 = vmatprep.subr.mxu0 0.0
        %3272 = vmatpush2.msra.mxu0 0.0
        %3273 = vmatprep.subr.mxu0 0.0
        %3274 = vmatpush2.msra.mxu0 0.0
        %3275 = vmatprep.mubr.f32.mxu0 0.0
        %3276 = vmatmul.mubr.f32.gmra.mxu0 %v3186
        %v3277 = vpop.f32.mrf.mxu0
        %v3278 = vadd.f32 %v3209, %v3277
        %v3279 = vpop.f32.mrf.mxu0
        %3280 = vmatprep.mubr.f32.mxu0 0.0
        %3281 = vmatmul.mubr.f32.gmra.mxu0 %v3187
        %v3282 = vpop.f32.mrf.mxu0
        %v3283 = vadd.f32 %v3209, %v3282
        %v3284 = vpop.f32.mrf.mxu0
        %3285 = vdwg.mxu0
        %3286 = vst [vmem:[%s433] sm:$0xff] %v3278
        %3287 = vst [vmem:[%s433 + $0x8] sm:$0xff] %v3283
        %s3288 = sand.u32 %s313, 1
        %s3289 = scalar_lea.sflag [#allocation3], %s3288
        %s3290 = sand.u32 %s313, 1
        %s3291 = smul.addr %s3290, 16
        %s3292 = scalar_lea.vmem [#allocation2], %s3291
        // Predicated region
        $region73: #{yolo_forward.1} parent=71 // pred_check
          %p3293 = pneg %p323
        $region74: #{yolo_forward.1} parent=71 // pred_check_branch
          %3295 = sbr.rel (%p3293) target = $region76
        $region75: #{yolo_forward.1} parent=71 // pred_region
          %s3297 = ssub.s32 256, 256
          %3298 = vsyncadd %s3289, %s3297
          %s3299 = smul.addr %s27, 2
          %s3300 = smul.addr %s3299, 128
          %s3301 = scalar_lea.hbm %s13, %s3300
          %s3302 = sshll.u32 %s3292, 4
          %s3303 = int_to_ptr.vmem [resolvable:$true] %s3302
          %3308 = dma.vmem_to_hbm [thread:$0]  %s3303, 256, %s3301, %s3289, 128, 128, 8
        $region76: #{yolo_forward.1} parent=71 // pred_fallthru
          _
      $region72: #{yolo_forward.1} parent=5 // pred_fallthru
        _
      %p3309 = scmp.le.s32.totalorder 2, %s22
      // Predicated region
      $region77: #{yolo_forward.1} parent=5 // pred_check
        %p3310 = pneg %p3309
      $region78: #{yolo_forward.1} parent=5 // pred_check_branch
        %3312 = sbr.rel (%p3310) target = $region80
      $region79: #{yolo_forward.1} parent=5 // pred_region
        %s3313 = ssub.s32 %s22, 2
        // Predicated region
        $region81: #{yolo_forward.1} parent=79 // pred_check
          %p3314 = pneg %p329
        $region82: #{yolo_forward.1} parent=79 // pred_check_branch
          %3316 = sbr.rel (%p3314) target = $region84
        $region83: #{yolo_forward.1} parent=79 // pred_region
          %s3317 = sand.u32 %s314, 1
          %s3318 = scalar_lea.sflag [#allocation3], %s3317
          %s3319 = sand.u32 %s314, 1
          %s3320 = smul.addr %s3319, 16
          %s3321 = scalar_lea.vmem [#allocation2], %s3320
          %3322 = dma.done %s3318, 256
        $region84: #{yolo_forward.1} parent=79 // pred_fallthru
          _
      $region80: #{yolo_forward.1} parent=5 // pred_fallthru
        _
    $region6: #{yolo_forward.1} parent=1 // loop_footer
      %s26 = sadd.s32 1, %s22
    $region7: #{yolo_forward.1} parent=1 // loop_footer_branch
      %21 = sbr.rel target = $region3
    $region8: #{yolo_forward.1} parent=1 // loop_exit
      _
    %3323 = vsyncpa [#allocation3], 1
    %s3324 = scalar_lea.sflag [#allocation3], 1
    %3325 = vsyncpa %s3324, 1

</llo_original>
